<compile_context>
chip_gen: v7x
topology: tpu7x:2x2x1
jax: 0.10.0
libtpu: 0.0.40
codegen_flags: <defaults>
</compile_context>

<pallas_src>
import functools

import jax
import jax.numpy as jnp
from jax.experimental import pallas as pl
from jax.experimental.pallas import tpu as pltpu

EXTRA_PAD = 1
EXT_PAD = 1
NUM_FLAG = 9
NEG_INF = -1e30
LN_EPS = 1e-5

# bf16 MXU path on all generations; f32 accumulation via preferred_element_type.
MATMUL_DTYPE = jnp.bfloat16
WEIGHT_DTYPE = jnp.bfloat16

VMEM_LIMIT_BYTES = 48 * 1024 * 1024   # >= default on v5e/v6e/v7x, < v7x physical


# ----------------------------------------------------------------------------
# In-kernel helpers (traced inside the Pallas kernel only)
# ----------------------------------------------------------------------------
def _mm(a, b):
    return jnp.dot(a.astype(MATMUL_DTYPE), b.astype(MATMUL_DTYPE),
                   preferred_element_type=jnp.float32)


def _ln(x, g, b):
    mu = jnp.mean(x, axis=-1, keepdims=True)
    var = jnp.mean((x - mu) ** 2, axis=-1, keepdims=True)
    return (x - mu) * jax.lax.rsqrt(var + LN_EPS) * g + b


def _attend(q, k, v, wo, bo, mask, num_heads):
    """q: (Tq,D); k,v: (Tk,D) f32; wo: (D,D); bo: (1,D); mask: (Tq,Tk) or None.

    1/sqrt(Dh) is pre-folded into the Q projection weights.  Heads are merged
    concat-free by accumulating head_h @ Wo[h*Dh:(h+1)*Dh, :].
    """
    tq, d = q.shape
    dh = d // num_heads
    out = jnp.zeros((tq, d), jnp.float32) + bo
    for hh in range(num_heads):                       # small unrolled head loop
        sl = slice(hh * dh, (hh + 1) * dh)
        s = _mm(q[:, sl], k[:, sl].T)                 # (Tq, Tk), f32 acc
        if mask is not None:
            s = s + mask
        s = s - jnp.max(s, axis=-1, keepdims=True)
        p = jnp.exp(s)
        p = p * pl.reciprocal(jnp.sum(p, axis=-1, keepdims=True), approx=True)
        out = out + _mm(_mm(p, v[:, sl]), wo[sl, :])  # fold head into Wo rows
    return out


# ----------------------------------------------------------------------------
# Fused whole-stack decoder kernel: grid = (batch, layer)
# ----------------------------------------------------------------------------
def _fused_decoder_kernel(
        x_ref, mem_ref, pad_ref,
        ln1_g, ln1_b, wqkv_s, bqkv_s, wo_s, bo_s,
        ln2_g, ln2_b, wq_c, bq_c, wkv_c, bkv_c, wo_c, bo_c,
        ln3_g, ln3_b, w1, b1, w2, b2,
        norm_g, norm_b, logit_w, logit_b,
        o_ref, x_sc, *, num_heads):
    layer = pl.program_id(1)

    # Load the embedded tokens into the VMEM-resident activation at layer 0.
    @pl.when(layer == 0)
    def _():
        x_sc[...] = x_ref[...]

    x = x_sc[0]                          # (T, D) f32, resident across layers
    mem = mem_ref[0]                     # (M, D) f32
    pad = pad_ref[0]                     # (1, T) additive key-padding, f32
    t, d = x.shape

    # Causal (no-peek) + key-padding mask, built in-kernel (no (B,T,T) in HBM).
    row = jax.lax.broadcasted_iota(jnp.int32, (t, t), 0)
    col = jax.lax.broadcasted_iota(jnp.int32, (t, t), 1)
    self_mask = jnp.where(col > row, NEG_INF, 0.0) + pad

    # --- pre-norm self-attention + residual (one wide fused-QKV matmul) ---
    h = _ln(x, ln1_g[0], ln1_b[0])
    qkv = _mm(h, wqkv_s[0]) + bqkv_s[0]                   # (T, 3D)
    x = x + _attend(qkv[:, :d], qkv[:, d:2 * d], qkv[:, 2 * d:],
                    wo_s[0], bo_s[0], self_mask, num_heads)

    # --- pre-norm cross-attention + residual (all-zero memory mask dropped) ---
    h = _ln(x, ln2_g[0], ln2_b[0])
    q = _mm(h, wq_c[0]) + bq_c[0]                         # (T, D)
    kv = _mm(mem, wkv_c[0]) + bkv_c[0]                    # (M, 2D)
    x = x + _attend(q, kv[:, :d], kv[:, d:],
                    wo_c[0], bo_c[0], None, num_heads)

    # --- pre-norm FFN (ReLU) + residual ---
    h = _ln(x, ln3_g[0], ln3_b[0])
    ff = jnp.maximum(_mm(h, w1[0]) + b1[0], 0.0)
    x = x + _mm(ff, w2[0]) + b2[0]

    x_sc[0] = x

    # Final LayerNorm + lane-dense logit projection fused into the last step;
    # output block index depends only on batch, so HBM writeback happens once.
    @pl.when(layer == pl.num_programs(1) - 1)
    def _():
        hf = _ln(x, norm_g[...], norm_b[...])
        o_ref[0] = _mm(hf, logit_w[...]) + logit_b[...]


_STACKED_KEYS = (
    "ln1_g", "ln1_b", "wqkv_s", "bqkv_s", "wo_s", "bo_s",
    "ln2_g", "ln2_b", "wq_c", "bq_c", "wkv_c", "bkv_c", "wo_c", "bo_c",
    "ln3_g", "ln3_b", "w1", "b1", "w2", "b2",
)
_CONST_KEYS = ("norm_g", "norm_b", "logit_w_pad", "logit_b_pad")
_BF16_KEYS = frozenset({"wqkv_s", "wo_s", "wq_c", "wkv_c", "wo_c", "w1", "w2"})


def _stacked_spec(arr):
    """(L, ...) weight: one layer-slab per grid step, streamed along axis 1."""
    nd = arr.ndim
    return pl.BlockSpec((1,) + arr.shape[1:],
                        lambda bi, li, _nd=nd: (li,) + (0,) * (_nd - 1))


def _const_spec(arr):
    """Full array, constant index map -> stays VMEM-resident across the grid."""
    nd = arr.ndim
    return pl.BlockSpec(arr.shape, lambda bi, li, _nd=nd: (0,) * _nd)


def fused_decoder(x_emb, memory, pad_add, params, num_heads):
    """x_emb: (B,T,D) f32; memory: (B,M,D) f32; pad_add: (B,1,T) additive f32."""
    b, t, d = x_emb.shape
    m = memory.shape[1]
    st = params["stacked"]
    nl = st["w1"].shape[0]
    vpad = params["logit_w_pad"].shape[1]

    in_specs = [
        pl.BlockSpec((1, t, d), lambda bi, li: (bi, 0, 0)),
        pl.BlockSpec((1, m, d), lambda bi, li: (bi, 0, 0)),
        pl.BlockSpec((1, 1, t), lambda bi, li: (bi, 0, 0)),
    ]
    in_specs += [_stacked_spec(st[k]) for k in _STACKED_KEYS]
    in_specs += [_const_spec(params[k]) for k in _CONST_KEYS]

    return pl.pallas_call(
        functools.partial(_fused_decoder_kernel, num_heads=num_heads),
        out_shape=jax.ShapeDtypeStruct((b, t, vpad), jnp.float32),
        grid=(b, nl),
        in_specs=in_specs,
        out_specs=pl.BlockSpec((1, t, vpad), lambda bi, li: (bi, 0, 0)),
        scratch_shapes=[pltpu.VMEM((1, t, d), jnp.float32)],
        compiler_params=pltpu.CompilerParams(
            dimension_semantics=("parallel", "arbitrary"),
            vmem_limit_bytes=VMEM_LIMIT_BYTES),
    )(x_emb, memory, pad_add,
      *[st[k] for k in _STACKED_KEYS],
      *[params[k] for k in _CONST_KEYS])


# ----------------------------------------------------------------------------
# Forward (glue: embedding gathers + mask vector; all heavy work in the kernel)
# ----------------------------------------------------------------------------
def ext_decoder_forward(params, config, ext_v, flags, ext_mask, code):
    """Mirrors EXTDecoder.forward (eval mode, c_seqlen > 0 path)."""
    b, s = ext_v.shape
    d = config["embed_dim"]
    nh = config["num_heads"]
    t = s + 1

    ext_e = jnp.take(params["ext_embed"], ext_v, axis=0)        # (B,S,D)
    flag_e = jnp.take(params["flag_embed"], flags, axis=0)      # (B,S,D)
    ctx = jnp.zeros((b, 1, d), jnp.float32)                     # context embedding
    x = jnp.concatenate([ctx, ext_e + flag_e], axis=1)          # (B,T,D)
    x = x + params["pos_embed"][:t][None, :, :]                 # positional embed
    # dropout: identity (eval mode)

    # key padding -> small additive (B,1,T) vector; causal mask built in-kernel
    pad = jnp.concatenate([jnp.zeros((b, 1), bool), ext_mask], axis=1)   # (B,T)
    pad_add = jnp.where(pad, NEG_INF, 0.0).astype(jnp.float32).reshape(b, 1, t)

    logits_pad = fused_decoder(x, code, pad_add, params, nh)    # (B,T,Vpad)
    return logits_pad[..., :params["vocab_size"]]               # (B,T,V)


# ----------------------------------------------------------------------------
# Deterministic parameter construction
# (per-layer weights stacked along L; QKV fused; 1/sqrt(Dh) folded into Q
#  projection weight AND bias; matmul weights pre-cast to bf16)
# ----------------------------------------------------------------------------
def init_params(key, config, vocab, max_len):
    d = config["embed_dim"]
    ff = config["hidden_dim"]
    nl = config["num_layers"]
    nh = config["num_heads"]
    dh = d // nh
    scale = 1.0 / float(dh) ** 0.5
    vpad = ((vocab + 127) // 128) * 128

    keys = iter(jax.random.split(key, 8 + 12 * nl))

    def nrm(shape, sc=0.02):
        return sc * jax.random.normal(next(keys), shape, jnp.float32)

    logit_w = nrm((d, vocab))
    params = {
        "vocab_size": vocab,
        "ext_embed": nrm((vocab, d)),
        "flag_embed": nrm((NUM_FLAG, d)),
        "pos_embed": nrm((max_len, d)),
        "norm_g": jnp.ones((1, d), jnp.float32),
        "norm_b": jnp.zeros((1, d), jnp.float32),
        "logit_w_pad": jnp.zeros((d, vpad), jnp.float32)
                          .at[:, :vocab].set(logit_w).astype(WEIGHT_DTYPE),
        "logit_b_pad": jnp.zeros((1, vpad), jnp.float32),
    }

    layers = {k: [] for k in _STACKED_KEYS}
    for _ in range(nl):
        # self-attention: fused (D,3D) QKV; scale folded into Q weight (+bias)
        wq = nrm((d, d)) * scale
        wk = nrm((d, d))
        wv = nrm((d, d))
        layers["wqkv_s"].append(jnp.concatenate([wq, wk, wv], axis=1))
        layers["bqkv_s"].append(jnp.zeros((1, 3 * d), jnp.float32))  # Q part already scaled (zero)
        layers["wo_s"].append(nrm((d, d)))
        layers["bo_s"].append(jnp.zeros((1, d), jnp.float32))
        # cross-attention: separate Wq, fused (D,2D) Wkv applied to memory
        layers["wq_c"].append(nrm((d, d)) * scale)
        layers["bq_c"].append(jnp.zeros((1, d), jnp.float32))
        layers["wkv_c"].append(jnp.concatenate([nrm((d, d)), nrm((d, d))], axis=1))
        layers["bkv_c"].append(jnp.zeros((1, 2 * d), jnp.float32))
        layers["wo_c"].append(nrm((d, d)))
        layers["bo_c"].append(jnp.zeros((1, d), jnp.float32))
        # FFN
        layers["w1"].append(nrm((d, ff)))
        layers["b1"].append(jnp.zeros((1, ff), jnp.float32))
        layers["w2"].append(nrm((ff, d)))
        layers["b2"].append(jnp.zeros((1, d), jnp.float32))
        # LayerNorms
        for nm in ("ln1", "ln2", "ln3"):
            layers[nm + "_g"].append(jnp.ones((1, d), jnp.float32))
            layers[nm + "_b"].append(jnp.zeros((1, d), jnp.float32))

    stacked = {}
    for k in _STACKED_KEYS:
        arr = jnp.stack(layers[k], axis=0)
        if k in _BF16_KEYS:
            arr = arr.astype(WEIGHT_DTYPE)
        stacked[k] = arr
    params["stacked"] = stacked
    return params


# ----------------------------------------------------------------------------
# Demo
# ----------------------------------------------------------------------------
if __name__ == "__main__":
    config = {"embed_dim": 32, "hidden_dim": 64, "num_heads": 4,
              "num_layers": 2, "dropout_rate": 0.1}
    quantization_bits = 6
    vocab = 2 ** quantization_bits + EXT_PAD + EXTRA_PAD   # 66
    max_len = 64
    B, S, M = 2, 8, 4
    D = config["embed_dim"]

    root = jax.random.PRNGKey(0)
    kp, k1, k2, k3 = jax.random.split(root, 4)
    params = init_params(kp, config, vocab, max_len)

    ext_v = jax.random.randint(k1, (B, S), 0, vocab, jnp.int32)
    flags = jax.random.randint(k2, (B, S), 0, NUM_FLAG, jnp.int32)
    # padding mask: True = padded; pad out the last two tokens of batch element 1
    ext_mask = jnp.zeros((B, S), bool).at[1, -2:].set(True)
    code = jax.random.normal(k3, (B, M, D), jnp.float32)

    fwd = jax.jit(lambda ev, fl, em, cd: ext_decoder_forward(params, config, ev, fl, em, cd))
    logits = jax.block_until_ready(fwd(ext_v, flags, ext_mask, code))
    assert logits.shape == (B, S + 1, vocab), logits.shape
    assert bool(jnp.all(jnp.isfinite(logits)))
    print("KERNEL_OK")
</pallas_src>

<mosaic_0001>
module attributes {stable_mosaic.version = 11 : i64} {
  func.func @_fused_decoder_kernel(%arg0: i32, %arg1: i32, %arg2: memref<1x9x32xf32, #tpu.memory_space<vmem>>, %arg3: memref<1x4x32xf32, #tpu.memory_space<vmem>>, %arg4: memref<1x1x9xf32, #tpu.memory_space<vmem>>, %arg5: memref<1x1x32xf32, #tpu.memory_space<vmem>>, %arg6: memref<1x1x32xf32, #tpu.memory_space<vmem>>, %arg7: memref<1x32x96xbf16, #tpu.memory_space<vmem>>, %arg8: memref<1x1x96xf32, #tpu.memory_space<vmem>>, %arg9: memref<1x32x32xbf16, #tpu.memory_space<vmem>>, %arg10: memref<1x1x32xf32, #tpu.memory_space<vmem>>, %arg11: memref<1x1x32xf32, #tpu.memory_space<vmem>>, %arg12: memref<1x1x32xf32, #tpu.memory_space<vmem>>, %arg13: memref<1x32x32xbf16, #tpu.memory_space<vmem>>, %arg14: memref<1x1x32xf32, #tpu.memory_space<vmem>>, %arg15: memref<1x32x64xbf16, #tpu.memory_space<vmem>>, %arg16: memref<1x1x64xf32, #tpu.memory_space<vmem>>, %arg17: memref<1x32x32xbf16, #tpu.memory_space<vmem>>, %arg18: memref<1x1x32xf32, #tpu.memory_space<vmem>>, %arg19: memref<1x1x32xf32, #tpu.memory_space<vmem>>, %arg20: memref<1x1x32xf32, #tpu.memory_space<vmem>>, %arg21: memref<1x32x64xbf16, #tpu.memory_space<vmem>>, %arg22: memref<1x1x64xf32, #tpu.memory_space<vmem>>, %arg23: memref<1x64x32xbf16, #tpu.memory_space<vmem>>, %arg24: memref<1x1x32xf32, #tpu.memory_space<vmem>>, %arg25: memref<1x32xf32, #tpu.memory_space<vmem>>, %arg26: memref<1x32xf32, #tpu.memory_space<vmem>>, %arg27: memref<32x128xbf16, #tpu.memory_space<vmem>>, %arg28: memref<1x128xf32, #tpu.memory_space<vmem>>, %arg29: memref<1x9x128xf32, #tpu.memory_space<vmem>>, %arg30: memref<1x9x32xf32, #tpu.memory_space<vmem>>) attributes {dimension_semantics = [#tpu.dimension_semantics<parallel>, #tpu.dimension_semantics<arbitrary>], iteration_bounds = array<i64: 2, 2>, scalar_prefetch = 0 : i64, scratch_operands = 1 : i64, tpu.core_type = #tpu.core_type<tc>, window_params = [{transform_indices = @transform_0, window_bounds = array<i64: 1, 9, 32>}, {transform_indices = @transform_1, window_bounds = array<i64: 1, 4, 32>}, {transform_indices = @transform_2, window_bounds = array<i64: 1, 1, 9>}, {transform_indices = @transform_3, window_bounds = array<i64: 1, 1, 32>}, {transform_indices = @transform_4, window_bounds = array<i64: 1, 1, 32>}, {transform_indices = @transform_5, window_bounds = array<i64: 1, 32, 96>}, {transform_indices = @transform_6, window_bounds = array<i64: 1, 1, 96>}, {transform_indices = @transform_7, window_bounds = array<i64: 1, 32, 32>}, {transform_indices = @transform_8, window_bounds = array<i64: 1, 1, 32>}, {transform_indices = @transform_9, window_bounds = array<i64: 1, 1, 32>}, {transform_indices = @transform_10, window_bounds = array<i64: 1, 1, 32>}, {transform_indices = @transform_11, window_bounds = array<i64: 1, 32, 32>}, {transform_indices = @transform_12, window_bounds = array<i64: 1, 1, 32>}, {transform_indices = @transform_13, window_bounds = array<i64: 1, 32, 64>}, {transform_indices = @transform_14, window_bounds = array<i64: 1, 1, 64>}, {transform_indices = @transform_15, window_bounds = array<i64: 1, 32, 32>}, {transform_indices = @transform_16, window_bounds = array<i64: 1, 1, 32>}, {transform_indices = @transform_17, window_bounds = array<i64: 1, 1, 32>}, {transform_indices = @transform_18, window_bounds = array<i64: 1, 1, 32>}, {transform_indices = @transform_19, window_bounds = array<i64: 1, 32, 64>}, {transform_indices = @transform_20, window_bounds = array<i64: 1, 1, 64>}, {transform_indices = @transform_21, window_bounds = array<i64: 1, 64, 32>}, {transform_indices = @transform_22, window_bounds = array<i64: 1, 1, 32>}, {pipeline_mode = #tpu.pipeline_mode<synchronous>, transform_indices = @transform_23, window_bounds = array<i64: 1, 32>}, {pipeline_mode = #tpu.pipeline_mode<synchronous>, transform_indices = @transform_24, window_bounds = array<i64: 1, 32>}, {pipeline_mode = #tpu.pipeline_mode<synchronous>, transform_indices = @transform_25, window_bounds = array<i64: 32, 128>}, {pipeline_mode = #tpu.pipeline_mode<synchronous>, transform_indices = @transform_26, window_bounds = array<i64: 1, 128>}, {transform_indices = @transform_27, window_bounds = array<i64: 1, 9, 128>}]} {
    %c0_i32 = arith.constant 0 : i32
    %0 = arith.cmpi eq, %arg1, %c0_i32 : i32
    %1 = arith.extui %0 : i1 to i32
    %c0_i32_0 = arith.constant 0 : i32
    %2 = arith.cmpi ne, %1, %c0_i32_0 : i32
    scf.if %2 {
      %c0_137 = arith.constant 0 : index
      %c0_138 = arith.constant 0 : index
      %c0_139 = arith.constant 0 : index
      %361 = vector.load %arg2[%c0_137, %c0_138, %c0_139] : memref<1x9x32xf32, #tpu.memory_space<vmem>>, vector<1x9x32xf32>
      %c0_140 = arith.constant 0 : index
      %c0_141 = arith.constant 0 : index
      %c0_142 = arith.constant 0 : index
      %362 = vector.load %arg30[%c0_140, %c0_141, %c0_142] : memref<1x9x32xf32, #tpu.memory_space<vmem>>, vector<1x9x32xf32>
      tpu.vector_store %arg30[%c0_140, %c0_141, %c0_142], %361 {strides = array<i32>} : memref<1x9x32xf32, #tpu.memory_space<vmem>>, vector<1x9x32xf32>,
    } else {
    }
    %c0 = arith.constant 0 : index
    %c0_1 = arith.constant 0 : index
    %c0_2 = arith.constant 0 : index
    %3 = vector.load %arg30[%c0, %c0_1, %c0_2] : memref<1x9x32xf32, #tpu.memory_space<vmem>>, vector<1x9x32xf32>
    %4 = vector.shape_cast %3 : vector<1x9x32xf32> to vector<9x32xf32>
    %c0_3 = arith.constant 0 : index
    %c0_4 = arith.constant 0 : index
    %c0_5 = arith.constant 0 : index
    %5 = vector.load %arg3[%c0_3, %c0_4, %c0_5] : memref<1x4x32xf32, #tpu.memory_space<vmem>>, vector<1x4x32xf32>
    %6 = vector.shape_cast %5 : vector<1x4x32xf32> to vector<4x32xf32>
    %c0_6 = arith.constant 0 : index
    %c0_7 = arith.constant 0 : index
    %c0_8 = arith.constant 0 : index
    %7 = vector.load %arg4[%c0_6, %c0_7, %c0_8] : memref<1x1x9xf32, #tpu.memory_space<vmem>>, vector<1x1x9xf32>
    %8 = vector.shape_cast %7 : vector<1x1x9xf32> to vector<1x9xf32>
    %9 = tpu.iota {dimensions = array<i32: 0>} : vector<9x9xi32>
    %10 = tpu.iota {dimensions = array<i32: 1>} : vector<9x9xi32>
    %11 = arith.cmpi sgt, %10, %9 : vector<9x9xi32>
    %cst = arith.constant -1.000000e+30 : f32
    %cst_9 = arith.constant 0.000000e+00 : f32
    %12 = vector.broadcast %cst : f32 to vector<9x9xf32>
    %13 = vector.broadcast %cst_9 : f32 to vector<9x9xf32>
    %14 = arith.select %11, %12, %13 : vector<9x9xi1>, vector<9x9xf32>
    %15 = vector.broadcast %8 : vector<1x9xf32> to vector<9x9xf32>
    %16 = arith.addf %14, %15 : vector<9x9xf32>
    %c0_10 = arith.constant 0 : index
    %c0_11 = arith.constant 0 : index
    %c0_12 = arith.constant 0 : index
    %17 = vector.load %arg5[%c0_10, %c0_11, %c0_12] : memref<1x1x32xf32, #tpu.memory_space<vmem>>, vector<1x1x32xf32>
    %18 = vector.shape_cast %17 : vector<1x1x32xf32> to vector<1x32xf32>
    %c0_13 = arith.constant 0 : index
    %c0_14 = arith.constant 0 : index
    %c0_15 = arith.constant 0 : index
    %19 = vector.load %arg6[%c0_13, %c0_14, %c0_15] : memref<1x1x32xf32, #tpu.memory_space<vmem>>, vector<1x1x32xf32>
    %20 = vector.shape_cast %19 : vector<1x1x32xf32> to vector<1x32xf32>
    %cst_16 = arith.constant dense<0.000000e+00> : vector<9xf32>
    %21 = vector.multi_reduction <add>, %4, %cst_16 [1] : vector<9x32xf32> to vector<9xf32>
    %22 = vector.shape_cast %21 : vector<9xf32> to vector<9x1xf32>
    %cst_17 = arith.constant 3.200000e+01 : f32
    %23 = vector.broadcast %cst_17 : f32 to vector<9x1xf32>
    %24 = arith.divf %22, %23 : vector<9x1xf32>
    %25 = vector.broadcast %24 : vector<9x1xf32> to vector<9x32xf32>
    %26 = arith.subf %4, %25 : vector<9x32xf32>
    %27 = arith.mulf %26, %26 : vector<9x32xf32>
    %cst_18 = arith.constant dense<0.000000e+00> : vector<9xf32>
    %28 = vector.multi_reduction <add>, %27, %cst_18 [1] : vector<9x32xf32> to vector<9xf32>
    %29 = vector.shape_cast %28 : vector<9xf32> to vector<9x1xf32>
    %cst_19 = arith.constant 3.200000e+01 : f32
    %30 = vector.broadcast %cst_19 : f32 to vector<9x1xf32>
    %31 = arith.divf %29, %30 : vector<9x1xf32>
    %32 = vector.broadcast %24 : vector<9x1xf32> to vector<9x32xf32>
    %33 = arith.subf %4, %32 : vector<9x32xf32>
    %cst_20 = arith.constant 9.99999974E-6 : f32
    %34 = vector.broadcast %cst_20 : f32 to vector<9x1xf32>
    %35 = arith.addf %31, %34 : vector<9x1xf32>
    %36 = math.rsqrt %35 : vector<9x1xf32>
    %37 = vector.broadcast %36 : vector<9x1xf32> to vector<9x32xf32>
    %38 = arith.mulf %33, %37 : vector<9x32xf32>
    %39 = vector.broadcast %18 : vector<1x32xf32> to vector<9x32xf32>
    %40 = arith.mulf %38, %39 : vector<9x32xf32>
    %41 = vector.broadcast %20 : vector<1x32xf32> to vector<9x32xf32>
    %42 = arith.addf %40, %41 : vector<9x32xf32>
    %c0_21 = arith.constant 0 : index
    %c0_22 = arith.constant 0 : index
    %c0_23 = arith.constant 0 : index
    %43 = vector.load %arg7[%c0_21, %c0_22, %c0_23] : memref<1x32x96xbf16, #tpu.memory_space<vmem>>, vector<1x32x96xbf16>
    %44 = vector.shape_cast %43 : vector<1x32x96xbf16> to vector<32x96xbf16>
    %45 = arith.truncf %42 : vector<9x32xf32> to vector<9x32xbf16>
    %cst_24 = arith.constant dense<0.000000e+00> : vector<9x96xf32>
    %46 = tpu.matmul %45, %44, %cst_24 {dimension_numbers = #tpu.dot_dimension_numbers<[1], [0], [0], [1], [0, 0, 1, 1], [], []>} : vector<9x32xbf16>, vector<32x96xbf16>, vector<9x96xf32> -> vector<9x96xf32>
    %c0_25 = arith.constant 0 : index
    %c0_26 = arith.constant 0 : index
    %c0_27 = arith.constant 0 : index
    %47 = vector.load %arg8[%c0_25, %c0_26, %c0_27] : memref<1x1x96xf32, #tpu.memory_space<vmem>>, vector<1x1x96xf32>
    %48 = vector.shape_cast %47 : vector<1x1x96xf32> to vector<1x96xf32>
    %49 = vector.broadcast %48 : vector<1x96xf32> to vector<9x96xf32>
    %50 = arith.addf %46, %49 : vector<9x96xf32>
    %51 = vector.extract_strided_slice %50 {offsets = [0, 0], sizes = [9, 32], strides = [1, 1]} : vector<9x96xf32> to vector<9x32xf32>
    %52 = vector.extract_strided_slice %50 {offsets = [0, 32], sizes = [9, 32], strides = [1, 1]} : vector<9x96xf32> to vector<9x32xf32>
    %53 = vector.extract_strided_slice %50 {offsets = [0, 64], sizes = [9, 32], strides = [1, 1]} : vector<9x96xf32> to vector<9x32xf32>
    %c0_28 = arith.constant 0 : index
    %c0_29 = arith.constant 0 : index
    %c0_30 = arith.constant 0 : index
    %54 = vector.load %arg9[%c0_28, %c0_29, %c0_30] : memref<1x32x32xbf16, #tpu.memory_space<vmem>>, vector<1x32x32xbf16>
    %55 = vector.shape_cast %54 : vector<1x32x32xbf16> to vector<32x32xbf16>
    %c0_31 = arith.constant 0 : index
    %c0_32 = arith.constant 0 : index
    %c0_33 = arith.constant 0 : index
    %56 = vector.load %arg10[%c0_31, %c0_32, %c0_33] : memref<1x1x32xf32, #tpu.memory_space<vmem>>, vector<1x1x32xf32>
    %57 = vector.shape_cast %56 : vector<1x1x32xf32> to vector<1x32xf32>
    %cst_34 = arith.constant 0.000000e+00 : f32
    %58 = vector.broadcast %cst_34 : f32 to vector<9x32xf32>
    %59 = vector.broadcast %57 : vector<1x32xf32> to vector<9x32xf32>
    %60 = arith.addf %58, %59 : vector<9x32xf32>
    %61 = vector.extract_strided_slice %51 {offsets = [0, 0], sizes = [9, 8], strides = [1, 1]} : vector<9x32xf32> to vector<9x8xf32>
    %62 = vector.extract_strided_slice %52 {offsets = [0, 0], sizes = [9, 8], strides = [1, 1]} : vector<9x32xf32> to vector<9x8xf32>
    %63 = tpu.transpose %62, [1, 0] : vector<9x8xf32> -> vector<8x9xf32>
    %64 = arith.truncf %61 : vector<9x8xf32> to vector<9x8xbf16>
    %65 = arith.truncf %63 : vector<8x9xf32> to vector<8x9xbf16>
    %cst_35 = arith.constant dense<0.000000e+00> : vector<9x9xf32>
    %66 = tpu.matmul %64, %65, %cst_35 {dimension_numbers = #tpu.dot_dimension_numbers<[1], [0], [0], [1], [0, 0, 1, 1], [], []>} : vector<9x8xbf16>, vector<8x9xbf16>, vector<9x9xf32> -> vector<9x9xf32>
    %67 = arith.addf %66, %16 : vector<9x9xf32>
    %cst_36 = arith.constant dense<0xFF800000> : vector<9xf32>
    %68 = vector.multi_reduction <maximumf>, %67, %cst_36 [1] : vector<9x9xf32> to vector<9xf32>
    %69 = vector.shape_cast %68 : vector<9xf32> to vector<9x1xf32>
    %70 = vector.broadcast %69 : vector<9x1xf32> to vector<9x9xf32>
    %71 = arith.subf %67, %70 : vector<9x9xf32>
    %72 = math.exp %71 : vector<9x9xf32>
    %cst_37 = arith.constant dense<0.000000e+00> : vector<9xf32>
    %73 = vector.multi_reduction <add>, %72, %cst_37 [1] : vector<9x9xf32> to vector<9xf32>
    %74 = vector.shape_cast %73 : vector<9xf32> to vector<9x1xf32>
    %75 = tpu.reciprocal %74 {approx = true} : vector<9x1xf32> -> vector<9x1xf32>
    %76 = vector.broadcast %75 : vector<9x1xf32> to vector<9x9xf32>
    %77 = arith.mulf %72, %76 : vector<9x9xf32>
    %78 = vector.extract_strided_slice %53 {offsets = [0, 0], sizes = [9, 8], strides = [1, 1]} : vector<9x32xf32> to vector<9x8xf32>
    %79 = arith.truncf %77 : vector<9x9xf32> to vector<9x9xbf16>
    %80 = arith.truncf %78 : vector<9x8xf32> to vector<9x8xbf16>
    %cst_38 = arith.constant dense<0.000000e+00> : vector<9x8xf32>
    %81 = tpu.matmul %79, %80, %cst_38 {dimension_numbers = #tpu.dot_dimension_numbers<[1], [0], [0], [1], [0, 0, 1, 1], [], []>} : vector<9x9xbf16>, vector<9x8xbf16>, vector<9x8xf32> -> vector<9x8xf32>
    %82 = vector.extract_strided_slice %55 {offsets = [0, 0], sizes = [8, 32], strides = [1, 1]} : vector<32x32xbf16> to vector<8x32xbf16>
    %83 = arith.truncf %81 : vector<9x8xf32> to vector<9x8xbf16>
    %cst_39 = arith.constant dense<0.000000e+00> : vector<9x32xf32>
    %84 = tpu.matmul %83, %82, %cst_39 {dimension_numbers = #tpu.dot_dimension_numbers<[1], [0], [0], [1], [0, 0, 1, 1], [], []>} : vector<9x8xbf16>, vector<8x32xbf16>, vector<9x32xf32> -> vector<9x32xf32>
    %85 = arith.addf %60, %84 : vector<9x32xf32>
    %86 = vector.extract_strided_slice %51 {offsets = [0, 8], sizes = [9, 8], strides = [1, 1]} : vector<9x32xf32> to vector<9x8xf32>
    %87 = vector.extract_strided_slice %52 {offsets = [0, 8], sizes = [9, 8], strides = [1, 1]} : vector<9x32xf32> to vector<9x8xf32>
    %88 = tpu.transpose %87, [1, 0] : vector<9x8xf32> -> vector<8x9xf32>
    %89 = arith.truncf %86 : vector<9x8xf32> to vector<9x8xbf16>
    %90 = arith.truncf %88 : vector<8x9xf32> to vector<8x9xbf16>
    %cst_40 = arith.constant dense<0.000000e+00> : vector<9x9xf32>
    %91 = tpu.matmul %89, %90, %cst_40 {dimension_numbers = #tpu.dot_dimension_numbers<[1], [0], [0], [1], [0, 0, 1, 1], [], []>} : vector<9x8xbf16>, vector<8x9xbf16>, vector<9x9xf32> -> vector<9x9xf32>
    %92 = arith.addf %91, %16 : vector<9x9xf32>
    %cst_41 = arith.constant dense<0xFF800000> : vector<9xf32>
    %93 = vector.multi_reduction <maximumf>, %92, %cst_41 [1] : vector<9x9xf32> to vector<9xf32>
    %94 = vector.shape_cast %93 : vector<9xf32> to vector<9x1xf32>
    %95 = vector.broadcast %94 : vector<9x1xf32> to vector<9x9xf32>
    %96 = arith.subf %92, %95 : vector<9x9xf32>
    %97 = math.exp %96 : vector<9x9xf32>
    %cst_42 = arith.constant dense<0.000000e+00> : vector<9xf32>
    %98 = vector.multi_reduction <add>, %97, %cst_42 [1] : vector<9x9xf32> to vector<9xf32>
    %99 = vector.shape_cast %98 : vector<9xf32> to vector<9x1xf32>
    %100 = tpu.reciprocal %99 {approx = true} : vector<9x1xf32> -> vector<9x1xf32>
    %101 = vector.broadcast %100 : vector<9x1xf32> to vector<9x9xf32>
    %102 = arith.mulf %97, %101 : vector<9x9xf32>
    %103 = vector.extract_strided_slice %53 {offsets = [0, 8], sizes = [9, 8], strides = [1, 1]} : vector<9x32xf32> to vector<9x8xf32>
    %104 = arith.truncf %102 : vector<9x9xf32> to vector<9x9xbf16>
    %105 = arith.truncf %103 : vector<9x8xf32> to vector<9x8xbf16>
    %cst_43 = arith.constant dense<0.000000e+00> : vector<9x8xf32>
    %106 = tpu.matmul %104, %105, %cst_43 {dimension_numbers = #tpu.dot_dimension_numbers<[1], [0], [0], [1], [0, 0, 1, 1], [], []>} : vector<9x9xbf16>, vector<9x8xbf16>, vector<9x8xf32> -> vector<9x8xf32>
    %107 = vector.extract_strided_slice %55 {offsets = [8, 0], sizes = [8, 32], strides = [1, 1]} : vector<32x32xbf16> to vector<8x32xbf16>
    %108 = arith.truncf %106 : vector<9x8xf32> to vector<9x8xbf16>
    %cst_44 = arith.constant dense<0.000000e+00> : vector<9x32xf32>
    %109 = tpu.matmul %108, %107, %cst_44 {dimension_numbers = #tpu.dot_dimension_numbers<[1], [0], [0], [1], [0, 0, 1, 1], [], []>} : vector<9x8xbf16>, vector<8x32xbf16>, vector<9x32xf32> -> vector<9x32xf32>
    %110 = arith.addf %85, %109 : vector<9x32xf32>
    %111 = vector.extract_strided_slice %51 {offsets = [0, 16], sizes = [9, 8], strides = [1, 1]} : vector<9x32xf32> to vector<9x8xf32>
    %112 = vector.extract_strided_slice %52 {offsets = [0, 16], sizes = [9, 8], strides = [1, 1]} : vector<9x32xf32> to vector<9x8xf32>
    %113 = tpu.transpose %112, [1, 0] : vector<9x8xf32> -> vector<8x9xf32>
    %114 = arith.truncf %111 : vector<9x8xf32> to vector<9x8xbf16>
    %115 = arith.truncf %113 : vector<8x9xf32> to vector<8x9xbf16>
    %cst_45 = arith.constant dense<0.000000e+00> : vector<9x9xf32>
    %116 = tpu.matmul %114, %115, %cst_45 {dimension_numbers = #tpu.dot_dimension_numbers<[1], [0], [0], [1], [0, 0, 1, 1], [], []>} : vector<9x8xbf16>, vector<8x9xbf16>, vector<9x9xf32> -> vector<9x9xf32>
    %117 = arith.addf %116, %16 : vector<9x9xf32>
    %cst_46 = arith.constant dense<0xFF800000> : vector<9xf32>
    %118 = vector.multi_reduction <maximumf>, %117, %cst_46 [1] : vector<9x9xf32> to vector<9xf32>
    %119 = vector.shape_cast %118 : vector<9xf32> to vector<9x1xf32>
    %120 = vector.broadcast %119 : vector<9x1xf32> to vector<9x9xf32>
    %121 = arith.subf %117, %120 : vector<9x9xf32>
    %122 = math.exp %121 : vector<9x9xf32>
    %cst_47 = arith.constant dense<0.000000e+00> : vector<9xf32>
    %123 = vector.multi_reduction <add>, %122, %cst_47 [1] : vector<9x9xf32> to vector<9xf32>
    %124 = vector.shape_cast %123 : vector<9xf32> to vector<9x1xf32>
    %125 = tpu.reciprocal %124 {approx = true} : vector<9x1xf32> -> vector<9x1xf32>
    %126 = vector.broadcast %125 : vector<9x1xf32> to vector<9x9xf32>
    %127 = arith.mulf %122, %126 : vector<9x9xf32>
    %128 = vector.extract_strided_slice %53 {offsets = [0, 16], sizes = [9, 8], strides = [1, 1]} : vector<9x32xf32> to vector<9x8xf32>
    %129 = arith.truncf %127 : vector<9x9xf32> to vector<9x9xbf16>
    %130 = arith.truncf %128 : vector<9x8xf32> to vector<9x8xbf16>
    %cst_48 = arith.constant dense<0.000000e+00> : vector<9x8xf32>
    %131 = tpu.matmul %129, %130, %cst_48 {dimension_numbers = #tpu.dot_dimension_numbers<[1], [0], [0], [1], [0, 0, 1, 1], [], []>} : vector<9x9xbf16>, vector<9x8xbf16>, vector<9x8xf32> -> vector<9x8xf32>
    %132 = vector.extract_strided_slice %55 {offsets = [16, 0], sizes = [8, 32], strides = [1, 1]} : vector<32x32xbf16> to vector<8x32xbf16>
    %133 = arith.truncf %131 : vector<9x8xf32> to vector<9x8xbf16>
    %cst_49 = arith.constant dense<0.000000e+00> : vector<9x32xf32>
    %134 = tpu.matmul %133, %132, %cst_49 {dimension_numbers = #tpu.dot_dimension_numbers<[1], [0], [0], [1], [0, 0, 1, 1], [], []>} : vector<9x8xbf16>, vector<8x32xbf16>, vector<9x32xf32> -> vector<9x32xf32>
    %135 = arith.addf %110, %134 : vector<9x32xf32>
    %136 = vector.extract_strided_slice %51 {offsets = [0, 24], sizes = [9, 8], strides = [1, 1]} : vector<9x32xf32> to vector<9x8xf32>
    %137 = vector.extract_strided_slice %52 {offsets = [0, 24], sizes = [9, 8], strides = [1, 1]} : vector<9x32xf32> to vector<9x8xf32>
    %138 = tpu.transpose %137, [1, 0] : vector<9x8xf32> -> vector<8x9xf32>
    %139 = arith.truncf %136 : vector<9x8xf32> to vector<9x8xbf16>
    %140 = arith.truncf %138 : vector<8x9xf32> to vector<8x9xbf16>
    %cst_50 = arith.constant dense<0.000000e+00> : vector<9x9xf32>
    %141 = tpu.matmul %139, %140, %cst_50 {dimension_numbers = #tpu.dot_dimension_numbers<[1], [0], [0], [1], [0, 0, 1, 1], [], []>} : vector<9x8xbf16>, vector<8x9xbf16>, vector<9x9xf32> -> vector<9x9xf32>
    %142 = arith.addf %141, %16 : vector<9x9xf32>
    %cst_51 = arith.constant dense<0xFF800000> : vector<9xf32>
    %143 = vector.multi_reduction <maximumf>, %142, %cst_51 [1] : vector<9x9xf32> to vector<9xf32>
    %144 = vector.shape_cast %143 : vector<9xf32> to vector<9x1xf32>
    %145 = vector.broadcast %144 : vector<9x1xf32> to vector<9x9xf32>
    %146 = arith.subf %142, %145 : vector<9x9xf32>
    %147 = math.exp %146 : vector<9x9xf32>
    %cst_52 = arith.constant dense<0.000000e+00> : vector<9xf32>
    %148 = vector.multi_reduction <add>, %147, %cst_52 [1] : vector<9x9xf32> to vector<9xf32>
    %149 = vector.shape_cast %148 : vector<9xf32> to vector<9x1xf32>
    %150 = tpu.reciprocal %149 {approx = true} : vector<9x1xf32> -> vector<9x1xf32>
    %151 = vector.broadcast %150 : vector<9x1xf32> to vector<9x9xf32>
    %152 = arith.mulf %147, %151 : vector<9x9xf32>
    %153 = vector.extract_strided_slice %53 {offsets = [0, 24], sizes = [9, 8], strides = [1, 1]} : vector<9x32xf32> to vector<9x8xf32>
    %154 = arith.truncf %152 : vector<9x9xf32> to vector<9x9xbf16>
    %155 = arith.truncf %153 : vector<9x8xf32> to vector<9x8xbf16>
    %cst_53 = arith.constant dense<0.000000e+00> : vector<9x8xf32>
    %156 = tpu.matmul %154, %155, %cst_53 {dimension_numbers = #tpu.dot_dimension_numbers<[1], [0], [0], [1], [0, 0, 1, 1], [], []>} : vector<9x9xbf16>, vector<9x8xbf16>, vector<9x8xf32> -> vector<9x8xf32>
    %157 = vector.extract_strided_slice %55 {offsets = [24, 0], sizes = [8, 32], strides = [1, 1]} : vector<32x32xbf16> to vector<8x32xbf16>
    %158 = arith.truncf %156 : vector<9x8xf32> to vector<9x8xbf16>
    %cst_54 = arith.constant dense<0.000000e+00> : vector<9x32xf32>
    %159 = tpu.matmul %158, %157, %cst_54 {dimension_numbers = #tpu.dot_dimension_numbers<[1], [0], [0], [1], [0, 0, 1, 1], [], []>} : vector<9x8xbf16>, vector<8x32xbf16>, vector<9x32xf32> -> vector<9x32xf32>
    %160 = arith.addf %135, %159 : vector<9x32xf32>
    %161 = arith.addf %4, %160 : vector<9x32xf32>
    %c0_55 = arith.constant 0 : index
    %c0_56 = arith.constant 0 : index
    %c0_57 = arith.constant 0 : index
    %162 = vector.load %arg11[%c0_55, %c0_56, %c0_57] : memref<1x1x32xf32, #tpu.memory_space<vmem>>, vector<1x1x32xf32>
    %163 = vector.shape_cast %162 : vector<1x1x32xf32> to vector<1x32xf32>
    %c0_58 = arith.constant 0 : index
    %c0_59 = arith.constant 0 : index
    %c0_60 = arith.constant 0 : index
    %164 = vector.load %arg12[%c0_58, %c0_59, %c0_60] : memref<1x1x32xf32, #tpu.memory_space<vmem>>, vector<1x1x32xf32>
    %165 = vector.shape_cast %164 : vector<1x1x32xf32> to vector<1x32xf32>
    %cst_61 = arith.constant dense<0.000000e+00> : vector<9xf32>
    %166 = vector.multi_reduction <add>, %161, %cst_61 [1] : vector<9x32xf32> to vector<9xf32>
    %167 = vector.shape_cast %166 : vector<9xf32> to vector<9x1xf32>
    %cst_62 = arith.constant 3.200000e+01 : f32
    %168 = vector.broadcast %cst_62 : f32 to vector<9x1xf32>
    %169 = arith.divf %167, %168 : vector<9x1xf32>
    %170 = vector.broadcast %169 : vector<9x1xf32> to vector<9x32xf32>
    %171 = arith.subf %161, %170 : vector<9x32xf32>
    %172 = arith.mulf %171, %171 : vector<9x32xf32>
    %cst_63 = arith.constant dense<0.000000e+00> : vector<9xf32>
    %173 = vector.multi_reduction <add>, %172, %cst_63 [1] : vector<9x32xf32> to vector<9xf32>
    %174 = vector.shape_cast %173 : vector<9xf32> to vector<9x1xf32>
    %cst_64 = arith.constant 3.200000e+01 : f32
    %175 = vector.broadcast %cst_64 : f32 to vector<9x1xf32>
    %176 = arith.divf %174, %175 : vector<9x1xf32>
    %177 = vector.broadcast %169 : vector<9x1xf32> to vector<9x32xf32>
    %178 = arith.subf %161, %177 : vector<9x32xf32>
    %cst_65 = arith.constant 9.99999974E-6 : f32
    %179 = vector.broadcast %cst_65 : f32 to vector<9x1xf32>
    %180 = arith.addf %176, %179 : vector<9x1xf32>
    %181 = math.rsqrt %180 : vector<9x1xf32>
    %182 = vector.broadcast %181 : vector<9x1xf32> to vector<9x32xf32>
    %183 = arith.mulf %178, %182 : vector<9x32xf32>
    %184 = vector.broadcast %163 : vector<1x32xf32> to vector<9x32xf32>
    %185 = arith.mulf %183, %184 : vector<9x32xf32>
    %186 = vector.broadcast %165 : vector<1x32xf32> to vector<9x32xf32>
    %187 = arith.addf %185, %186 : vector<9x32xf32>
    %c0_66 = arith.constant 0 : index
    %c0_67 = arith.constant 0 : index
    %c0_68 = arith.constant 0 : index
    %188 = vector.load %arg13[%c0_66, %c0_67, %c0_68] : memref<1x32x32xbf16, #tpu.memory_space<vmem>>, vector<1x32x32xbf16>
    %189 = vector.shape_cast %188 : vector<1x32x32xbf16> to vector<32x32xbf16>
    %190 = arith.truncf %187 : vector<9x32xf32> to vector<9x32xbf16>
    %cst_69 = arith.constant dense<0.000000e+00> : vector<9x32xf32>
    %191 = tpu.matmul %190, %189, %cst_69 {dimension_numbers = #tpu.dot_dimension_numbers<[1], [0], [0], [1], [0, 0, 1, 1], [], []>} : vector<9x32xbf16>, vector<32x32xbf16>, vector<9x32xf32> -> vector<9x32xf32>
    %c0_70 = arith.constant 0 : index
    %c0_71 = arith.constant 0 : index
    %c0_72 = arith.constant 0 : index
    %192 = vector.load %arg14[%c0_70, %c0_71, %c0_72] : memref<1x1x32xf32, #tpu.memory_space<vmem>>, vector<1x1x32xf32>
    %193 = vector.shape_cast %192 : vector<1x1x32xf32> to vector<1x32xf32>
    %194 = vector.broadcast %193 : vector<1x32xf32> to vector<9x32xf32>
    %195 = arith.addf %191, %194 : vector<9x32xf32>
    %c0_73 = arith.constant 0 : index
    %c0_74 = arith.constant 0 : index
    %c0_75 = arith.constant 0 : index
    %196 = vector.load %arg15[%c0_73, %c0_74, %c0_75] : memref<1x32x64xbf16, #tpu.memory_space<vmem>>, vector<1x32x64xbf16>
    %197 = vector.shape_cast %196 : vector<1x32x64xbf16> to vector<32x64xbf16>
    %198 = arith.truncf %6 : vector<4x32xf32> to vector<4x32xbf16>
    %cst_76 = arith.constant dense<0.000000e+00> : vector<4x64xf32>
    %199 = tpu.matmul %198, %197, %cst_76 {dimension_numbers = #tpu.dot_dimension_numbers<[1], [0], [0], [1], [0, 0, 1, 1], [], []>} : vector<4x32xbf16>, vector<32x64xbf16>, vector<4x64xf32> -> vector<4x64xf32>
    %c0_77 = arith.constant 0 : index
    %c0_78 = arith.constant 0 : index
    %c0_79 = arith.constant 0 : index
    %200 = vector.load %arg16[%c0_77, %c0_78, %c0_79] : memref<1x1x64xf32, #tpu.memory_space<vmem>>, vector<1x1x64xf32>
    %201 = vector.shape_cast %200 : vector<1x1x64xf32> to vector<1x64xf32>
    %202 = vector.broadcast %201 : vector<1x64xf32> to vector<4x64xf32>
    %203 = arith.addf %199, %202 : vector<4x64xf32>
    %204 = vector.extract_strided_slice %203 {offsets = [0, 0], sizes = [4, 32], strides = [1, 1]} : vector<4x64xf32> to vector<4x32xf32>
    %205 = vector.extract_strided_slice %203 {offsets = [0, 32], sizes = [4, 32], strides = [1, 1]} : vector<4x64xf32> to vector<4x32xf32>
    %c0_80 = arith.constant 0 : index
    %c0_81 = arith.constant 0 : index
    %c0_82 = arith.constant 0 : index
    %206 = vector.load %arg17[%c0_80, %c0_81, %c0_82] : memref<1x32x32xbf16, #tpu.memory_space<vmem>>, vector<1x32x32xbf16>
    %207 = vector.shape_cast %206 : vector<1x32x32xbf16> to vector<32x32xbf16>
    %c0_83 = arith.constant 0 : index
    %c0_84 = arith.constant 0 : index
    %c0_85 = arith.constant 0 : index
    %208 = vector.load %arg18[%c0_83, %c0_84, %c0_85] : memref<1x1x32xf32, #tpu.memory_space<vmem>>, vector<1x1x32xf32>
    %209 = vector.shape_cast %208 : vector<1x1x32xf32> to vector<1x32xf32>
    %cst_86 = arith.constant 0.000000e+00 : f32
    %210 = vector.broadcast %cst_86 : f32 to vector<9x32xf32>
    %211 = vector.broadcast %209 : vector<1x32xf32> to vector<9x32xf32>
    %212 = arith.addf %210, %211 : vector<9x32xf32>
    %213 = vector.extract_strided_slice %195 {offsets = [0, 0], sizes = [9, 8], strides = [1, 1]} : vector<9x32xf32> to vector<9x8xf32>
    %214 = vector.extract_strided_slice %204 {offsets = [0, 0], sizes = [4, 8], strides = [1, 1]} : vector<4x32xf32> to vector<4x8xf32>
    %215 = tpu.transpose %214, [1, 0] : vector<4x8xf32> -> vector<8x4xf32>
    %216 = arith.truncf %213 : vector<9x8xf32> to vector<9x8xbf16>
    %217 = arith.truncf %215 : vector<8x4xf32> to vector<8x4xbf16>
    %cst_87 = arith.constant dense<0.000000e+00> : vector<9x4xf32>
    %218 = tpu.matmul %216, %217, %cst_87 {dimension_numbers = #tpu.dot_dimension_numbers<[1], [0], [0], [1], [0, 0, 1, 1], [], []>} : vector<9x8xbf16>, vector<8x4xbf16>, vector<9x4xf32> -> vector<9x4xf32>
    %cst_88 = arith.constant dense<0xFF800000> : vector<9xf32>
    %219 = vector.multi_reduction <maximumf>, %218, %cst_88 [1] : vector<9x4xf32> to vector<9xf32>
    %220 = vector.shape_cast %219 : vector<9xf32> to vector<9x1xf32>
    %221 = vector.broadcast %220 : vector<9x1xf32> to vector<9x4xf32>
    %222 = arith.subf %218, %221 : vector<9x4xf32>
    %223 = math.exp %222 : vector<9x4xf32>
    %cst_89 = arith.constant dense<0.000000e+00> : vector<9xf32>
    %224 = vector.multi_reduction <add>, %223, %cst_89 [1] : vector<9x4xf32> to vector<9xf32>
    %225 = vector.shape_cast %224 : vector<9xf32> to vector<9x1xf32>
    %226 = tpu.reciprocal %225 {approx = true} : vector<9x1xf32> -> vector<9x1xf32>
    %227 = vector.broadcast %226 : vector<9x1xf32> to vector<9x4xf32>
    %228 = arith.mulf %223, %227 : vector<9x4xf32>
    %229 = vector.extract_strided_slice %205 {offsets = [0, 0], sizes = [4, 8], strides = [1, 1]} : vector<4x32xf32> to vector<4x8xf32>
    %230 = arith.truncf %228 : vector<9x4xf32> to vector<9x4xbf16>
    %231 = arith.truncf %229 : vector<4x8xf32> to vector<4x8xbf16>
    %cst_90 = arith.constant dense<0.000000e+00> : vector<9x8xf32>
    %232 = tpu.matmul %230, %231, %cst_90 {dimension_numbers = #tpu.dot_dimension_numbers<[1], [0], [0], [1], [0, 0, 1, 1], [], []>} : vector<9x4xbf16>, vector<4x8xbf16>, vector<9x8xf32> -> vector<9x8xf32>
    %233 = vector.extract_strided_slice %207 {offsets = [0, 0], sizes = [8, 32], strides = [1, 1]} : vector<32x32xbf16> to vector<8x32xbf16>
    %234 = arith.truncf %232 : vector<9x8xf32> to vector<9x8xbf16>
    %cst_91 = arith.constant dense<0.000000e+00> : vector<9x32xf32>
    %235 = tpu.matmul %234, %233, %cst_91 {dimension_numbers = #tpu.dot_dimension_numbers<[1], [0], [0], [1], [0, 0, 1, 1], [], []>} : vector<9x8xbf16>, vector<8x32xbf16>, vector<9x32xf32> -> vector<9x32xf32>
    %236 = arith.addf %212, %235 : vector<9x32xf32>
    %237 = vector.extract_strided_slice %195 {offsets = [0, 8], sizes = [9, 8], strides = [1, 1]} : vector<9x32xf32> to vector<9x8xf32>
    %238 = vector.extract_strided_slice %204 {offsets = [0, 8], sizes = [4, 8], strides = [1, 1]} : vector<4x32xf32> to vector<4x8xf32>
    %239 = tpu.transpose %238, [1, 0] : vector<4x8xf32> -> vector<8x4xf32>
    %240 = arith.truncf %237 : vector<9x8xf32> to vector<9x8xbf16>
    %241 = arith.truncf %239 : vector<8x4xf32> to vector<8x4xbf16>
    %cst_92 = arith.constant dense<0.000000e+00> : vector<9x4xf32>
    %242 = tpu.matmul %240, %241, %cst_92 {dimension_numbers = #tpu.dot_dimension_numbers<[1], [0], [0], [1], [0, 0, 1, 1], [], []>} : vector<9x8xbf16>, vector<8x4xbf16>, vector<9x4xf32> -> vector<9x4xf32>
    %cst_93 = arith.constant dense<0xFF800000> : vector<9xf32>
    %243 = vector.multi_reduction <maximumf>, %242, %cst_93 [1] : vector<9x4xf32> to vector<9xf32>
    %244 = vector.shape_cast %243 : vector<9xf32> to vector<9x1xf32>
    %245 = vector.broadcast %244 : vector<9x1xf32> to vector<9x4xf32>
    %246 = arith.subf %242, %245 : vector<9x4xf32>
    %247 = math.exp %246 : vector<9x4xf32>
    %cst_94 = arith.constant dense<0.000000e+00> : vector<9xf32>
    %248 = vector.multi_reduction <add>, %247, %cst_94 [1] : vector<9x4xf32> to vector<9xf32>
    %249 = vector.shape_cast %248 : vector<9xf32> to vector<9x1xf32>
    %250 = tpu.reciprocal %249 {approx = true} : vector<9x1xf32> -> vector<9x1xf32>
    %251 = vector.broadcast %250 : vector<9x1xf32> to vector<9x4xf32>
    %252 = arith.mulf %247, %251 : vector<9x4xf32>
    %253 = vector.extract_strided_slice %205 {offsets = [0, 8], sizes = [4, 8], strides = [1, 1]} : vector<4x32xf32> to vector<4x8xf32>
    %254 = arith.truncf %252 : vector<9x4xf32> to vector<9x4xbf16>
    %255 = arith.truncf %253 : vector<4x8xf32> to vector<4x8xbf16>
    %cst_95 = arith.constant dense<0.000000e+00> : vector<9x8xf32>
    %256 = tpu.matmul %254, %255, %cst_95 {dimension_numbers = #tpu.dot_dimension_numbers<[1], [0], [0], [1], [0, 0, 1, 1], [], []>} : vector<9x4xbf16>, vector<4x8xbf16>, vector<9x8xf32> -> vector<9x8xf32>
    %257 = vector.extract_strided_slice %207 {offsets = [8, 0], sizes = [8, 32], strides = [1, 1]} : vector<32x32xbf16> to vector<8x32xbf16>
    %258 = arith.truncf %256 : vector<9x8xf32> to vector<9x8xbf16>
    %cst_96 = arith.constant dense<0.000000e+00> : vector<9x32xf32>
    %259 = tpu.matmul %258, %257, %cst_96 {dimension_numbers = #tpu.dot_dimension_numbers<[1], [0], [0], [1], [0, 0, 1, 1], [], []>} : vector<9x8xbf16>, vector<8x32xbf16>, vector<9x32xf32> -> vector<9x32xf32>
    %260 = arith.addf %236, %259 : vector<9x32xf32>
    %261 = vector.extract_strided_slice %195 {offsets = [0, 16], sizes = [9, 8], strides = [1, 1]} : vector<9x32xf32> to vector<9x8xf32>
    %262 = vector.extract_strided_slice %204 {offsets = [0, 16], sizes = [4, 8], strides = [1, 1]} : vector<4x32xf32> to vector<4x8xf32>
    %263 = tpu.transpose %262, [1, 0] : vector<4x8xf32> -> vector<8x4xf32>
    %264 = arith.truncf %261 : vector<9x8xf32> to vector<9x8xbf16>
    %265 = arith.truncf %263 : vector<8x4xf32> to vector<8x4xbf16>
    %cst_97 = arith.constant dense<0.000000e+00> : vector<9x4xf32>
    %266 = tpu.matmul %264, %265, %cst_97 {dimension_numbers = #tpu.dot_dimension_numbers<[1], [0], [0], [1], [0, 0, 1, 1], [], []>} : vector<9x8xbf16>, vector<8x4xbf16>, vector<9x4xf32> -> vector<9x4xf32>
    %cst_98 = arith.constant dense<0xFF800000> : vector<9xf32>
    %267 = vector.multi_reduction <maximumf>, %266, %cst_98 [1] : vector<9x4xf32> to vector<9xf32>
    %268 = vector.shape_cast %267 : vector<9xf32> to vector<9x1xf32>
    %269 = vector.broadcast %268 : vector<9x1xf32> to vector<9x4xf32>
    %270 = arith.subf %266, %269 : vector<9x4xf32>
    %271 = math.exp %270 : vector<9x4xf32>
    %cst_99 = arith.constant dense<0.000000e+00> : vector<9xf32>
    %272 = vector.multi_reduction <add>, %271, %cst_99 [1] : vector<9x4xf32> to vector<9xf32>
    %273 = vector.shape_cast %272 : vector<9xf32> to vector<9x1xf32>
    %274 = tpu.reciprocal %273 {approx = true} : vector<9x1xf32> -> vector<9x1xf32>
    %275 = vector.broadcast %274 : vector<9x1xf32> to vector<9x4xf32>
    %276 = arith.mulf %271, %275 : vector<9x4xf32>
    %277 = vector.extract_strided_slice %205 {offsets = [0, 16], sizes = [4, 8], strides = [1, 1]} : vector<4x32xf32> to vector<4x8xf32>
    %278 = arith.truncf %276 : vector<9x4xf32> to vector<9x4xbf16>
    %279 = arith.truncf %277 : vector<4x8xf32> to vector<4x8xbf16>
    %cst_100 = arith.constant dense<0.000000e+00> : vector<9x8xf32>
    %280 = tpu.matmul %278, %279, %cst_100 {dimension_numbers = #tpu.dot_dimension_numbers<[1], [0], [0], [1], [0, 0, 1, 1], [], []>} : vector<9x4xbf16>, vector<4x8xbf16>, vector<9x8xf32> -> vector<9x8xf32>
    %281 = vector.extract_strided_slice %207 {offsets = [16, 0], sizes = [8, 32], strides = [1, 1]} : vector<32x32xbf16> to vector<8x32xbf16>
    %282 = arith.truncf %280 : vector<9x8xf32> to vector<9x8xbf16>
    %cst_101 = arith.constant dense<0.000000e+00> : vector<9x32xf32>
    %283 = tpu.matmul %282, %281, %cst_101 {dimension_numbers = #tpu.dot_dimension_numbers<[1], [0], [0], [1], [0, 0, 1, 1], [], []>} : vector<9x8xbf16>, vector<8x32xbf16>, vector<9x32xf32> -> vector<9x32xf32>
    %284 = arith.addf %260, %283 : vector<9x32xf32>
    %285 = vector.extract_strided_slice %195 {offsets = [0, 24], sizes = [9, 8], strides = [1, 1]} : vector<9x32xf32> to vector<9x8xf32>
    %286 = vector.extract_strided_slice %204 {offsets = [0, 24], sizes = [4, 8], strides = [1, 1]} : vector<4x32xf32> to vector<4x8xf32>
    %287 = tpu.transpose %286, [1, 0] : vector<4x8xf32> -> vector<8x4xf32>
    %288 = arith.truncf %285 : vector<9x8xf32> to vector<9x8xbf16>
    %289 = arith.truncf %287 : vector<8x4xf32> to vector<8x4xbf16>
    %cst_102 = arith.constant dense<0.000000e+00> : vector<9x4xf32>
    %290 = tpu.matmul %288, %289, %cst_102 {dimension_numbers = #tpu.dot_dimension_numbers<[1], [0], [0], [1], [0, 0, 1, 1], [], []>} : vector<9x8xbf16>, vector<8x4xbf16>, vector<9x4xf32> -> vector<9x4xf32>
    %cst_103 = arith.constant dense<0xFF800000> : vector<9xf32>
    %291 = vector.multi_reduction <maximumf>, %290, %cst_103 [1] : vector<9x4xf32> to vector<9xf32>
    %292 = vector.shape_cast %291 : vector<9xf32> to vector<9x1xf32>
    %293 = vector.broadcast %292 : vector<9x1xf32> to vector<9x4xf32>
    %294 = arith.subf %290, %293 : vector<9x4xf32>
    %295 = math.exp %294 : vector<9x4xf32>
    %cst_104 = arith.constant dense<0.000000e+00> : vector<9xf32>
    %296 = vector.multi_reduction <add>, %295, %cst_104 [1] : vector<9x4xf32> to vector<9xf32>
    %297 = vector.shape_cast %296 : vector<9xf32> to vector<9x1xf32>
    %298 = tpu.reciprocal %297 {approx = true} : vector<9x1xf32> -> vector<9x1xf32>
    %299 = vector.broadcast %298 : vector<9x1xf32> to vector<9x4xf32>
    %300 = arith.mulf %295, %299 : vector<9x4xf32>
    %301 = vector.extract_strided_slice %205 {offsets = [0, 24], sizes = [4, 8], strides = [1, 1]} : vector<4x32xf32> to vector<4x8xf32>
    %302 = arith.truncf %300 : vector<9x4xf32> to vector<9x4xbf16>
    %303 = arith.truncf %301 : vector<4x8xf32> to vector<4x8xbf16>
    %cst_105 = arith.constant dense<0.000000e+00> : vector<9x8xf32>
    %304 = tpu.matmul %302, %303, %cst_105 {dimension_numbers = #tpu.dot_dimension_numbers<[1], [0], [0], [1], [0, 0, 1, 1], [], []>} : vector<9x4xbf16>, vector<4x8xbf16>, vector<9x8xf32> -> vector<9x8xf32>
    %305 = vector.extract_strided_slice %207 {offsets = [24, 0], sizes = [8, 32], strides = [1, 1]} : vector<32x32xbf16> to vector<8x32xbf16>
    %306 = arith.truncf %304 : vector<9x8xf32> to vector<9x8xbf16>
    %cst_106 = arith.constant dense<0.000000e+00> : vector<9x32xf32>
    %307 = tpu.matmul %306, %305, %cst_106 {dimension_numbers = #tpu.dot_dimension_numbers<[1], [0], [0], [1], [0, 0, 1, 1], [], []>} : vector<9x8xbf16>, vector<8x32xbf16>, vector<9x32xf32> -> vector<9x32xf32>
    %308 = arith.addf %284, %307 : vector<9x32xf32>
    %309 = arith.addf %161, %308 : vector<9x32xf32>
    %c0_107 = arith.constant 0 : index
    %c0_108 = arith.constant 0 : index
    %c0_109 = arith.constant 0 : index
    %310 = vector.load %arg19[%c0_107, %c0_108, %c0_109] : memref<1x1x32xf32, #tpu.memory_space<vmem>>, vector<1x1x32xf32>
    %311 = vector.shape_cast %310 : vector<1x1x32xf32> to vector<1x32xf32>
    %c0_110 = arith.constant 0 : index
    %c0_111 = arith.constant 0 : index
    %c0_112 = arith.constant 0 : index
    %312 = vector.load %arg20[%c0_110, %c0_111, %c0_112] : memref<1x1x32xf32, #tpu.memory_space<vmem>>, vector<1x1x32xf32>
    %313 = vector.shape_cast %312 : vector<1x1x32xf32> to vector<1x32xf32>
    %cst_113 = arith.constant dense<0.000000e+00> : vector<9xf32>
    %314 = vector.multi_reduction <add>, %309, %cst_113 [1] : vector<9x32xf32> to vector<9xf32>
    %315 = vector.shape_cast %314 : vector<9xf32> to vector<9x1xf32>
    %cst_114 = arith.constant 3.200000e+01 : f32
    %316 = vector.broadcast %cst_114 : f32 to vector<9x1xf32>
    %317 = arith.divf %315, %316 : vector<9x1xf32>
    %318 = vector.broadcast %317 : vector<9x1xf32> to vector<9x32xf32>
    %319 = arith.subf %309, %318 : vector<9x32xf32>
    %320 = arith.mulf %319, %319 : vector<9x32xf32>
    %cst_115 = arith.constant dense<0.000000e+00> : vector<9xf32>
    %321 = vector.multi_reduction <add>, %320, %cst_115 [1] : vector<9x32xf32> to vector<9xf32>
    %322 = vector.shape_cast %321 : vector<9xf32> to vector<9x1xf32>
    %cst_116 = arith.constant 3.200000e+01 : f32
    %323 = vector.broadcast %cst_116 : f32 to vector<9x1xf32>
    %324 = arith.divf %322, %323 : vector<9x1xf32>
    %325 = vector.broadcast %317 : vector<9x1xf32> to vector<9x32xf32>
    %326 = arith.subf %309, %325 : vector<9x32xf32>
    %cst_117 = arith.constant 9.99999974E-6 : f32
    %327 = vector.broadcast %cst_117 : f32 to vector<9x1xf32>
    %328 = arith.addf %324, %327 : vector<9x1xf32>
    %329 = math.rsqrt %328 : vector<9x1xf32>
    %330 = vector.broadcast %329 : vector<9x1xf32> to vector<9x32xf32>
    %331 = arith.mulf %326, %330 : vector<9x32xf32>
    %332 = vector.broadcast %311 : vector<1x32xf32> to vector<9x32xf32>
    %333 = arith.mulf %331, %332 : vector<9x32xf32>
    %334 = vector.broadcast %313 : vector<1x32xf32> to vector<9x32xf32>
    %335 = arith.addf %333, %334 : vector<9x32xf32>
    %c0_118 = arith.constant 0 : index
    %c0_119 = arith.constant 0 : index
    %c0_120 = arith.constant 0 : index
    %336 = vector.load %arg21[%c0_118, %c0_119, %c0_120] : memref<1x32x64xbf16, #tpu.memory_space<vmem>>, vector<1x32x64xbf16>
    %337 = vector.shape_cast %336 : vector<1x32x64xbf16> to vector<32x64xbf16>
    %338 = arith.truncf %335 : vector<9x32xf32> to vector<9x32xbf16>
    %cst_121 = arith.constant dense<0.000000e+00> : vector<9x64xf32>
    %339 = tpu.matmul %338, %337, %cst_121 {dimension_numbers = #tpu.dot_dimension_numbers<[1], [0], [0], [1], [0, 0, 1, 1], [], []>} : vector<9x32xbf16>, vector<32x64xbf16>, vector<9x64xf32> -> vector<9x64xf32>
    %c0_122 = arith.constant 0 : index
    %c0_123 = arith.constant 0 : index
    %c0_124 = arith.constant 0 : index
    %340 = vector.load %arg22[%c0_122, %c0_123, %c0_124] : memref<1x1x64xf32, #tpu.memory_space<vmem>>, vector<1x1x64xf32>
    %341 = vector.shape_cast %340 : vector<1x1x64xf32> to vector<1x64xf32>
    %342 = vector.broadcast %341 : vector<1x64xf32> to vector<9x64xf32>
    %343 = arith.addf %339, %342 : vector<9x64xf32>
    %cst_125 = arith.constant 0.000000e+00 : f32
    %344 = vector.broadcast %cst_125 : f32 to vector<9x64xf32>
    %345 = arith.maximumf %343, %344 : vector<9x64xf32>
    %c0_126 = arith.constant 0 : index
    %c0_127 = arith.constant 0 : index
    %c0_128 = arith.constant 0 : index
    %346 = vector.load %arg23[%c0_126, %c0_127, %c0_128] : memref<1x64x32xbf16, #tpu.memory_space<vmem>>, vector<1x64x32xbf16>
    %347 = vector.shape_cast %346 : vector<1x64x32xbf16> to vector<64x32xbf16>
    %348 = arith.truncf %345 : vector<9x64xf32> to vector<9x64xbf16>
    %cst_129 = arith.constant dense<0.000000e+00> : vector<9x32xf32>
    %349 = tpu.matmul %348, %347, %cst_129 {dimension_numbers = #tpu.dot_dimension_numbers<[1], [0], [0], [1], [0, 0, 1, 1], [], []>} : vector<9x64xbf16>, vector<64x32xbf16>, vector<9x32xf32> -> vector<9x32xf32>
    %350 = arith.addf %309, %349 : vector<9x32xf32>
    %c0_130 = arith.constant 0 : index
    %c0_131 = arith.constant 0 : index
    %c0_132 = arith.constant 0 : index
    %351 = vector.load %arg24[%c0_130, %c0_131, %c0_132] : memref<1x1x32xf32, #tpu.memory_space<vmem>>, vector<1x1x32xf32>
    %352 = vector.shape_cast %351 : vector<1x1x32xf32> to vector<1x32xf32>
    %353 = vector.broadcast %352 : vector<1x32xf32> to vector<9x32xf32>
    %354 = arith.addf %350, %353 : vector<9x32xf32>
    %c0_133 = arith.constant 0 : index
    %c0_134 = arith.constant 0 : index
    %c0_135 = arith.constant 0 : index
    %355 = vector.load %arg30[%c0_133, %c0_134, %c0_135] : memref<1x9x32xf32, #tpu.memory_space<vmem>>, vector<1x9x32xf32>
    %356 = vector.shape_cast %355 : vector<1x9x32xf32> to vector<9x32xf32>
    %357 = vector.shape_cast %354 : vector<9x32xf32> to vector<1x9x32xf32>
    tpu.vector_store %arg30[%c0_133, %c0_134, %c0_135], %357 {strides = array<i32>} : memref<1x9x32xf32, #tpu.memory_space<vmem>>, vector<1x9x32xf32>,
    %c1_i32 = arith.constant 1 : i32
    %358 = arith.cmpi eq, %arg1, %c1_i32 : i32
    %359 = arith.extui %358 : i1 to i32
    %c0_i32_136 = arith.constant 0 : i32
    %360 = arith.cmpi ne, %359, %c0_i32_136 : i32
    scf.if %360 {
      %c0_137 = arith.constant 0 : index
      %c0_138 = arith.constant 0 : index
      %361 = vector.load %arg25[%c0_137, %c0_138] : memref<1x32xf32, #tpu.memory_space<vmem>>, vector<1x32xf32>
      %c0_139 = arith.constant 0 : index
      %c0_140 = arith.constant 0 : index
      %362 = vector.load %arg26[%c0_139, %c0_140] : memref<1x32xf32, #tpu.memory_space<vmem>>, vector<1x32xf32>
      %cst_141 = arith.constant dense<0.000000e+00> : vector<9xf32>
      %363 = vector.multi_reduction <add>, %354, %cst_141 [1] : vector<9x32xf32> to vector<9xf32>
      %364 = vector.shape_cast %363 : vector<9xf32> to vector<9x1xf32>
      %cst_142 = arith.constant 3.200000e+01 : f32
      %365 = vector.broadcast %cst_142 : f32 to vector<9x1xf32>
      %366 = arith.divf %364, %365 : vector<9x1xf32>
      %367 = vector.broadcast %366 : vector<9x1xf32> to vector<9x32xf32>
      %368 = arith.subf %354, %367 : vector<9x32xf32>
      %369 = arith.mulf %368, %368 : vector<9x32xf32>
      %cst_143 = arith.constant dense<0.000000e+00> : vector<9xf32>
      %370 = vector.multi_reduction <add>, %369, %cst_143 [1] : vector<9x32xf32> to vector<9xf32>
      %371 = vector.shape_cast %370 : vector<9xf32> to vector<9x1xf32>
      %cst_144 = arith.constant 3.200000e+01 : f32
      %372 = vector.broadcast %cst_144 : f32 to vector<9x1xf32>
      %373 = arith.divf %371, %372 : vector<9x1xf32>
      %374 = vector.broadcast %366 : vector<9x1xf32> to vector<9x32xf32>
      %375 = arith.subf %354, %374 : vector<9x32xf32>
      %cst_145 = arith.constant 9.99999974E-6 : f32
      %376 = vector.broadcast %cst_145 : f32 to vector<9x1xf32>
      %377 = arith.addf %373, %376 : vector<9x1xf32>
      %378 = math.rsqrt %377 : vector<9x1xf32>
      %379 = vector.broadcast %378 : vector<9x1xf32> to vector<9x32xf32>
      %380 = arith.mulf %375, %379 : vector<9x32xf32>
      %381 = vector.broadcast %361 : vector<1x32xf32> to vector<9x32xf32>
      %382 = arith.mulf %380, %381 : vector<9x32xf32>
      %383 = vector.broadcast %362 : vector<1x32xf32> to vector<9x32xf32>
      %384 = arith.addf %382, %383 : vector<9x32xf32>
      %c0_146 = arith.constant 0 : index
      %c0_147 = arith.constant 0 : index
      %385 = vector.load %arg27[%c0_146, %c0_147] : memref<32x128xbf16, #tpu.memory_space<vmem>>, vector<32x128xbf16>
      %386 = arith.truncf %384 : vector<9x32xf32> to vector<9x32xbf16>
      %cst_148 = arith.constant dense<0.000000e+00> : vector<9x128xf32>
      %387 = tpu.matmul %386, %385, %cst_148 {dimension_numbers = #tpu.dot_dimension_numbers<[1], [0], [0], [1], [0, 0, 1, 1], [], []>} : vector<9x32xbf16>, vector<32x128xbf16>, vector<9x128xf32> -> vector<9x128xf32>
      %c0_149 = arith.constant 0 : index
      %c0_150 = arith.constant 0 : index
      %388 = vector.load %arg28[%c0_149, %c0_150] : memref<1x128xf32, #tpu.memory_space<vmem>>, vector<1x128xf32>
      %389 = vector.broadcast %388 : vector<1x128xf32> to vector<9x128xf32>
      %390 = arith.addf %387, %389 : vector<9x128xf32>
      %c0_151 = arith.constant 0 : index
      %c0_152 = arith.constant 0 : index
      %c0_153 = arith.constant 0 : index
      %391 = vector.load %arg29[%c0_151, %c0_152, %c0_153] : memref<1x9x128xf32, #tpu.memory_space<vmem>>, vector<1x9x128xf32>
      %392 = vector.shape_cast %391 : vector<1x9x128xf32> to vector<9x128xf32>
      %393 = vector.shape_cast %390 : vector<9x128xf32> to vector<1x9x128xf32>
      tpu.vector_store %arg29[%c0_151, %c0_152, %c0_153], %393 {strides = array<i32>} : memref<1x9x128xf32, #tpu.memory_space<vmem>>, vector<1x9x128xf32>,
    } else {
    }
    return
  }
  func.func @transform_0(%arg0: i32, %arg1: i32) -> (i32, i32, i32) {
    %c0_i32 = arith.constant 0 : i32
    %c0_i32_0 = arith.constant 0 : i32
    %c0_i32_1 = arith.constant 0 : i32
    return %arg0, %c0_i32, %c0_i32_0 : i32, i32, i32
  }
  func.func @transform_1(%arg0: i32, %arg1: i32) -> (i32, i32, i32) {
    %c0_i32 = arith.constant 0 : i32
    %c0_i32_0 = arith.constant 0 : i32
    %c0_i32_1 = arith.constant 0 : i32
    return %arg0, %c0_i32, %c0_i32_0 : i32, i32, i32
  }
  func.func @transform_2(%arg0: i32, %arg1: i32) -> (i32, i32, i32) {
    %c0_i32 = arith.constant 0 : i32
    %c0_i32_0 = arith.constant 0 : i32
    %c0_i32_1 = arith.constant 0 : i32
    return %arg0, %c0_i32, %c0_i32_0 : i32, i32, i32
  }
  func.func @transform_3(%arg0: i32, %arg1: i32) -> (i32, i32, i32) {
    %c0_i32 = arith.constant 0 : i32
    %c0_i32_0 = arith.constant 0 : i32
    %c0_i32_1 = arith.constant 0 : i32
    return %arg1, %c0_i32, %c0_i32_0 : i32, i32, i32
  }
  func.func @transform_4(%arg0: i32, %arg1: i32) -> (i32, i32, i32) {
    %c0_i32 = arith.constant 0 : i32
    %c0_i32_0 = arith.constant 0 : i32
    %c0_i32_1 = arith.constant 0 : i32
    return %arg1, %c0_i32, %c0_i32_0 : i32, i32, i32
  }
  func.func @transform_5(%arg0: i32, %arg1: i32) -> (i32, i32, i32) {
    %c0_i32 = arith.constant 0 : i32
    %c0_i32_0 = arith.constant 0 : i32
    %c0_i32_1 = arith.constant 0 : i32
    return %arg1, %c0_i32, %c0_i32_0 : i32, i32, i32
  }
  func.func @transform_6(%arg0: i32, %arg1: i32) -> (i32, i32, i32) {
    %c0_i32 = arith.constant 0 : i32
    %c0_i32_0 = arith.constant 0 : i32
    %c0_i32_1 = arith.constant 0 : i32
    return %arg1, %c0_i32, %c0_i32_0 : i32, i32, i32
  }
  func.func @transform_7(%arg0: i32, %arg1: i32) -> (i32, i32, i32) {
    %c0_i32 = arith.constant 0 : i32
    %c0_i32_0 = arith.constant 0 : i32
    %c0_i32_1 = arith.constant 0 : i32
    return %arg1, %c0_i32, %c0_i32_0 : i32, i32, i32
  }
  func.func @transform_8(%arg0: i32, %arg1: i32) -> (i32, i32, i32) {
    %c0_i32 = arith.constant 0 : i32
    %c0_i32_0 = arith.constant 0 : i32
    %c0_i32_1 = arith.constant 0 : i32
    return %arg1, %c0_i32, %c0_i32_0 : i32, i32, i32
  }
  func.func @transform_9(%arg0: i32, %arg1: i32) -> (i32, i32, i32) {
    %c0_i32 = arith.constant 0 : i32
    %c0_i32_0 = arith.constant 0 : i32
    %c0_i32_1 = arith.constant 0 : i32
    return %arg1, %c0_i32, %c0_i32_0 : i32, i32, i32
  }
  func.func @transform_10(%arg0: i32, %arg1: i32) -> (i32, i32, i32) {
    %c0_i32 = arith.constant 0 : i32
    %c0_i32_0 = arith.constant 0 : i32
    %c0_i32_1 = arith.constant 0 : i32
    return %arg1, %c0_i32, %c0_i32_0 : i32, i32, i32
  }
  func.func @transform_11(%arg0: i32, %arg1: i32) -> (i32, i32, i32) {
    %c0_i32 = arith.constant 0 : i32
    %c0_i32_0 = arith.constant 0 : i32
    %c0_i32_1 = arith.constant 0 : i32
    return %arg1, %c0_i32, %c0_i32_0 : i32, i32, i32
  }
  func.func @transform_12(%arg0: i32, %arg1: i32) -> (i32, i32, i32) {
    %c0_i32 = arith.constant 0 : i32
    %c0_i32_0 = arith.constant 0 : i32
    %c0_i32_1 = arith.constant 0 : i32
    return %arg1, %c0_i32, %c0_i32_0 : i32, i32, i32
  }
  func.func @transform_13(%arg0: i32, %arg1: i32) -> (i32, i32, i32) {
    %c0_i32 = arith.constant 0 : i32
    %c0_i32_0 = arith.constant 0 : i32
    %c0_i32_1 = arith.constant 0 : i32
    return %arg1, %c0_i32, %c0_i32_0 : i32, i32, i32
  }
  func.func @transform_14(%arg0: i32, %arg1: i32) -> (i32, i32, i32) {
    %c0_i32 = arith.constant 0 : i32
    %c0_i32_0 = arith.constant 0 : i32
    %c0_i32_1 = arith.constant 0 : i32
    return %arg1, %c0_i32, %c0_i32_0 : i32, i32, i32
  }
  func.func @transform_15(%arg0: i32, %arg1: i32) -> (i32, i32, i32) {
    %c0_i32 = arith.constant 0 : i32
    %c0_i32_0 = arith.constant 0 : i32
    %c0_i32_1 = arith.constant 0 : i32
    return %arg1, %c0_i32, %c0_i32_0 : i32, i32, i32
  }
  func.func @transform_16(%arg0: i32, %arg1: i32) -> (i32, i32, i32) {
    %c0_i32 = arith.constant 0 : i32
    %c0_i32_0 = arith.constant 0 : i32
    %c0_i32_1 = arith.constant 0 : i32
    return %arg1, %c0_i32, %c0_i32_0 : i32, i32, i32
  }
  func.func @transform_17(%arg0: i32, %arg1: i32) -> (i32, i32, i32) {
    %c0_i32 = arith.constant 0 : i32
    %c0_i32_0 = arith.constant 0 : i32
    %c0_i32_1 = arith.constant 0 : i32
    return %arg1, %c0_i32, %c0_i32_0 : i32, i32, i32
  }
  func.func @transform_18(%arg0: i32, %arg1: i32) -> (i32, i32, i32) {
    %c0_i32 = arith.constant 0 : i32
    %c0_i32_0 = arith.constant 0 : i32
    %c0_i32_1 = arith.constant 0 : i32
    return %arg1, %c0_i32, %c0_i32_0 : i32, i32, i32
  }
  func.func @transform_19(%arg0: i32, %arg1: i32) -> (i32, i32, i32) {
    %c0_i32 = arith.constant 0 : i32
    %c0_i32_0 = arith.constant 0 : i32
    %c0_i32_1 = arith.constant 0 : i32
    return %arg1, %c0_i32, %c0_i32_0 : i32, i32, i32
  }
  func.func @transform_20(%arg0: i32, %arg1: i32) -> (i32, i32, i32) {
    %c0_i32 = arith.constant 0 : i32
    %c0_i32_0 = arith.constant 0 : i32
    %c0_i32_1 = arith.constant 0 : i32
    return %arg1, %c0_i32, %c0_i32_0 : i32, i32, i32
  }
  func.func @transform_21(%arg0: i32, %arg1: i32) -> (i32, i32, i32) {
    %c0_i32 = arith.constant 0 : i32
    %c0_i32_0 = arith.constant 0 : i32
    %c0_i32_1 = arith.constant 0 : i32
    return %arg1, %c0_i32, %c0_i32_0 : i32, i32, i32
  }
  func.func @transform_22(%arg0: i32, %arg1: i32) -> (i32, i32, i32) {
    %c0_i32 = arith.constant 0 : i32
    %c0_i32_0 = arith.constant 0 : i32
    %c0_i32_1 = arith.constant 0 : i32
    return %arg1, %c0_i32, %c0_i32_0 : i32, i32, i32
  }
  func.func @transform_23(%arg0: i32, %arg1: i32) -> (i32, i32) {
    %c0_i32 = arith.constant 0 : i32
    %c0_i32_0 = arith.constant 0 : i32
    %c0_i32_1 = arith.constant 0 : i32
    return %c0_i32, %c0_i32_0 : i32, i32
  }
  func.func @transform_24(%arg0: i32, %arg1: i32) -> (i32, i32) {
    %c0_i32 = arith.constant 0 : i32
    %c0_i32_0 = arith.constant 0 : i32
    %c0_i32_1 = arith.constant 0 : i32
    return %c0_i32, %c0_i32_0 : i32, i32
  }
  func.func @transform_25(%arg0: i32, %arg1: i32) -> (i32, i32) {
    %c0_i32 = arith.constant 0 : i32
    %c0_i32_0 = arith.constant 0 : i32
    %c0_i32_1 = arith.constant 0 : i32
    return %c0_i32, %c0_i32_0 : i32, i32
  }
  func.func @transform_26(%arg0: i32, %arg1: i32) -> (i32, i32) {
    %c0_i32 = arith.constant 0 : i32
    %c0_i32_0 = arith.constant 0 : i32
    %c0_i32_1 = arith.constant 0 : i32
    return %c0_i32, %c0_i32_0 : i32, i32
  }
  func.func @transform_27(%arg0: i32, %arg1: i32) -> (i32, i32, i32) {
    %c0_i32 = arith.constant 0 : i32
    %c0_i32_0 = arith.constant 0 : i32
    %c0_i32_1 = arith.constant 0 : i32
    return %arg0, %c0_i32, %c0_i32_0 : i32, i32, i32
  }
}

</mosaic_0001>

<llo_original>
// kernel: _lambda_.1
$region0: #{_lambda_.1}
  #allocation0 [shape = 'u32[]', space=smem, size = 0x4, offset = 0x4, fixed_abs, tag = 'smem constant byte address 0x4 - core index']
  #allocation1 [shape = 'u32[144,128]{1,0:T(1,128)}', space=vmem, size = 0x12000, scoped, tag = 'internal scratch']
  #allocation2 [shape = 'f32[1,9,32]{2,1,0:T(8,128)}', space=vmem, size = 0x2000, scoped, tag = 'scratch operand']
  %s0 = inlined_call_operand.vmem [shape: f32[2,9,32], index: 0, kind: input, shape index: {}]
  %s1 = inlined_call_operand.vmem [shape: f32[2,4,32], index: 1, kind: input, shape index: {}]
  %s2 = inlined_call_operand.vmem [shape: f32[2,1,9], index: 2, kind: input, shape index: {}]
  %s3 = inlined_call_operand.vmem [shape: f32[2,1,32], index: 3, kind: input, shape index: {}, may-alias: {3,9,17}]
  %s4 = inlined_call_operand.vmem [shape: f32[2,1,32], index: 4, kind: input, shape index: {}, may-alias: {4,8,10,12,16,18,22}]
  %s5 = inlined_call_operand.vmem [shape: bf16[2,32,96], index: 5, kind: input, shape index: {}]
  %s6 = inlined_call_operand.vmem [shape: f32[2,1,96], index: 6, kind: input, shape index: {}]
  %s7 = inlined_call_operand.vmem [shape: bf16[2,32,32], index: 7, kind: input, shape index: {}]
  %s8 = inlined_call_operand.vmem [shape: f32[2,1,32], index: 8, kind: input, shape index: {}, may-alias: {4,8,10,12,16,18,22}]
  %s9 = inlined_call_operand.vmem [shape: f32[2,1,32], index: 9, kind: input, shape index: {}, may-alias: {3,9,17}]
  %s10 = inlined_call_operand.vmem [shape: f32[2,1,32], index: 10, kind: input, shape index: {}, may-alias: {4,8,10,12,16,18,22}]
  %s11 = inlined_call_operand.vmem [shape: bf16[2,32,32], index: 11, kind: input, shape index: {}]
  %s12 = inlined_call_operand.vmem [shape: f32[2,1,32], index: 12, kind: input, shape index: {}, may-alias: {4,8,10,12,16,18,22}]
  %s13 = inlined_call_operand.vmem [shape: bf16[2,32,64], index: 13, kind: input, shape index: {}]
  %s14 = inlined_call_operand.vmem [shape: f32[2,1,64], index: 14, kind: input, shape index: {}, may-alias: {14,20}]
  %s15 = inlined_call_operand.vmem [shape: bf16[2,32,32], index: 15, kind: input, shape index: {}]
  %s16 = inlined_call_operand.vmem [shape: f32[2,1,32], index: 16, kind: input, shape index: {}, may-alias: {4,8,10,12,16,18,22}]
  %s17 = inlined_call_operand.vmem [shape: f32[2,1,32], index: 17, kind: input, shape index: {}, may-alias: {3,9,17}]
  %s18 = inlined_call_operand.vmem [shape: f32[2,1,32], index: 18, kind: input, shape index: {}, may-alias: {4,8,10,12,16,18,22}]
  %s19 = inlined_call_operand.vmem [shape: bf16[2,32,64], index: 19, kind: input, shape index: {}]
  %s20 = inlined_call_operand.vmem [shape: f32[2,1,64], index: 20, kind: input, shape index: {}, may-alias: {14,20}]
  %s21 = inlined_call_operand.vmem [shape: bf16[2,64,32], index: 21, kind: input, shape index: {}]
  %s22 = inlined_call_operand.vmem [shape: f32[2,1,32], index: 22, kind: input, shape index: {}, may-alias: {4,8,10,12,16,18,22}]
  %s23 = inlined_call_operand.vmem [shape: f32[1,32], index: 23, kind: input, shape index: {}]
  %s24 = inlined_call_operand.vmem [shape: f32[1,32], index: 24, kind: input, shape index: {}]
  %s25 = inlined_call_operand.vmem [shape: bf16[32,128], index: 25, kind: input, shape index: {}]
  %s26 = inlined_call_operand.vmem [shape: f32[1,128], index: 26, kind: input, shape index: {}]
  %s27 = inlined_call_operand.vmem [shape: f32[2,9,128], index: 27, kind: output, shape index: {}]
  %s28 = sld [smem:[#allocation0]]
  $region149: #{_lambda_.1} parent=0
    _
  %s30 = ssub.s32 1, %s28
  %s31 = scalar_select 0, %s30, %s28
  loop: start=0, step=1, limit=6
  $region2: #{_lambda_.1} parent=0 // loop_pre_header
    _
  $region3: #{_lambda_.1} parent=0 // loop_header
    %s33 = sphi 0, %s37
    %p34 = scmp.ge.s32.totalorder %s33, 6
    %s40 = sphi 0, %s52
    %s41 = sphi 0, %s48
    %s42 = sphi 0, %s40
    %s43 = sphi 0, %s41
    %s44 = sphi 0, %s42
    %s45 = sphi 0, %s43
    %s55 = sphi 0, %s57
    %s58 = sphi 0, %s55
    %s59 = sphi 0, %s58
    %s75 = sphi 0, %s59
    %s81 = sphi 0, %s83
    %s84 = sphi 0, %s81
    %s85 = sphi 0, %s84
    %s101 = sphi 0, %s85
    %s107 = sphi 0, %s109
    %s110 = sphi 0, %s107
    %s111 = sphi 0, %s110
    %s127 = sphi 0, %s111
    %s133 = sphi 0, %s135
    %s136 = sphi 0, %s133
    %s137 = sphi 0, %s136
    %s153 = sphi 0, %s137
    %s159 = sphi 0, %s161
    %s162 = sphi 0, %s159
    %s163 = sphi 0, %s162
    %s179 = sphi 0, %s163
    %s185 = sphi 0, %s187
    %s188 = sphi 0, %s185
    %s189 = sphi 0, %s188
    %s205 = sphi 0, %s189
    %s211 = sphi 0, %s213
    %s214 = sphi 0, %s211
    %s215 = sphi 0, %s214
    %s231 = sphi 0, %s215
    %s237 = sphi 0, %s239
    %s240 = sphi 0, %s237
    %s241 = sphi 0, %s240
    %s257 = sphi 0, %s241
    %s263 = sphi 0, %s265
    %s266 = sphi 0, %s263
    %s267 = sphi 0, %s266
    %s283 = sphi 0, %s267
    %s289 = sphi 0, %s291
    %s292 = sphi 0, %s289
    %s293 = sphi 0, %s292
    %s309 = sphi 0, %s293
    %s315 = sphi 0, %s317
    %s318 = sphi 0, %s315
    %s319 = sphi 0, %s318
    %s335 = sphi 0, %s319
    %s341 = sphi 0, %s343
    %s344 = sphi 0, %s341
    %s345 = sphi 0, %s344
    %s361 = sphi 0, %s345
    %s367 = sphi 0, %s369
    %s370 = sphi 0, %s367
    %s371 = sphi 0, %s370
    %s387 = sphi 0, %s371
    %s393 = sphi 0, %s395
    %s396 = sphi 0, %s393
    %s397 = sphi 0, %s396
    %s413 = sphi 0, %s397
    %s419 = sphi 0, %s421
    %s422 = sphi 0, %s419
    %s423 = sphi 0, %s422
    %s439 = sphi 0, %s423
    %s445 = sphi 0, %s447
    %s448 = sphi 0, %s445
    %s449 = sphi 0, %s448
    %s465 = sphi 0, %s449
    %s471 = sphi 0, %s473
    %s474 = sphi 0, %s471
    %s475 = sphi 0, %s474
    %s491 = sphi 0, %s475
    %s497 = sphi 0, %s499
    %s500 = sphi 0, %s497
    %s501 = sphi 0, %s500
    %s517 = sphi 0, %s501
    %s523 = sphi 0, %s525
    %s526 = sphi 0, %s523
    %s527 = sphi 0, %s526
    %s543 = sphi 0, %s527
    %s549 = sphi 0, %s551
    %s552 = sphi 0, %s549
    %s553 = sphi 0, %s552
    %s569 = sphi 0, %s553
    %s575 = sphi 0, %s577
    %s578 = sphi 0, %s575
    %s579 = sphi 0, %s578
    %s595 = sphi 0, %s579
    %s601 = sphi 0, %s603
    %s604 = sphi 0, %s601
    %s605 = sphi 0, %s604
    %s621 = sphi 0, %s605
    %s627 = sphi 0, %s629
    %s630 = sphi 0, %s627
    %s631 = sphi 0, %s630
    %s647 = sphi 0, %s631
    %s651 = sphi 0, %s651
    %s653 = sphi 0, %s651
    %s654 = sphi 0, %s653
    %s668 = sphi 0, %s654
    %s672 = sphi 0, %s672
    %s674 = sphi 0, %s672
    %s675 = sphi 0, %s674
    %s689 = sphi 0, %s675
    %s693 = sphi 0, %s693
    %s695 = sphi 0, %s693
    %s696 = sphi 0, %s695
    %s710 = sphi 0, %s696
    %s714 = sphi 0, %s714
    %s716 = sphi 0, %s714
    %s717 = sphi 0, %s716
    %s731 = sphi 0, %s717
    %s737 = sphi 0, %s739
    %s740 = sphi 0, %s737
    %s741 = sphi 0, %s740
    %s757 = sphi 0, %s741
  $region4: #{_lambda_.1} parent=0 // loop_header_branch
    %36 = sbr.rel (%p34) target = $region8
  $region5: #{_lambda_.1} parent=0 // loop_body
    %s38 = ssub.s32 %s33, 1
    %s39 = ssub.s32 %s33, 2
    %s46 = sadd.s32 1, %s41
    %p47 = scmp.ge.s32.totalorder %s46, 2
    %s48 = scalar_select %p47, 0, %s46
    %s49 = sadd.s32 1, %s40
    %s50 = scalar_select %p47, %s49, %s40
    %p51 = scmp.ge.s32.totalorder %s50, 2
    %s52 = scalar_select %p51, 0, %s50
    %s53 = ssub.s32 %s40, %s52
    %p54 = scmp.eq.s32.totalorder %s53, 0
    %s56 = sadd.s32 %s55, 1
    %s57 = scalar_select %p54, %s55, %s56
    %p60 = pneg %p54
    %p61 = scmp.eq.s32.totalorder %s33, 3
    %p62 = por %p60, %p61
    %p63 = scmp.ne.s32.totalorder %s55, %s58
    %p64 = scmp.eq.s32.totalorder %s33, 0
    %p65 = por %p63, %p64
    %p66 = scmp.ne.s32.totalorder %s55, %s58
    %p67 = scmp.eq.s32.totalorder %s38, 3
    %p68 = por %p66, %p67
    %p69 = scmp.ne.s32.totalorder %s58, %s59
    %p70 = scmp.eq.s32.totalorder %s38, 0
    %p71 = por %p69, %p70
    %p72 = scmp.ne.s32.totalorder %s58, %s59
    %p73 = scmp.eq.s32.totalorder %s39, 3
    %p74 = por %p72, %p73
    %p76 = scmp.ne.s32.totalorder %s59, %s75
    %p77 = scmp.eq.s32.totalorder %s39, 0
    %p78 = por %p76, %p77
    %s79 = ssub.s32 %s40, %s52
    %p80 = scmp.eq.s32.totalorder %s79, 0
    %s82 = sadd.s32 %s81, 1
    %s83 = scalar_select %p80, %s81, %s82
    %p86 = pneg %p80
    %p87 = scmp.eq.s32.totalorder %s33, 3
    %p88 = por %p86, %p87
    %p89 = scmp.ne.s32.totalorder %s81, %s84
    %p90 = scmp.eq.s32.totalorder %s33, 0
    %p91 = por %p89, %p90
    %p92 = scmp.ne.s32.totalorder %s81, %s84
    %p93 = scmp.eq.s32.totalorder %s38, 3
    %p94 = por %p92, %p93
    %p95 = scmp.ne.s32.totalorder %s84, %s85
    %p96 = scmp.eq.s32.totalorder %s38, 0
    %p97 = por %p95, %p96
    %p98 = scmp.ne.s32.totalorder %s84, %s85
    %p99 = scmp.eq.s32.totalorder %s39, 3
    %p100 = por %p98, %p99
    %p102 = scmp.ne.s32.totalorder %s85, %s101
    %p103 = scmp.eq.s32.totalorder %s39, 0
    %p104 = por %p102, %p103
    %s105 = ssub.s32 %s40, %s52
    %p106 = scmp.eq.s32.totalorder %s105, 0
    %s108 = sadd.s32 %s107, 1
    %s109 = scalar_select %p106, %s107, %s108
    %p112 = pneg %p106
    %p113 = scmp.eq.s32.totalorder %s33, 3
    %p114 = por %p112, %p113
    %p115 = scmp.ne.s32.totalorder %s107, %s110
    %p116 = scmp.eq.s32.totalorder %s33, 0
    %p117 = por %p115, %p116
    %p118 = scmp.ne.s32.totalorder %s107, %s110
    %p119 = scmp.eq.s32.totalorder %s38, 3
    %p120 = por %p118, %p119
    %p121 = scmp.ne.s32.totalorder %s110, %s111
    %p122 = scmp.eq.s32.totalorder %s38, 0
    %p123 = por %p121, %p122
    %p124 = scmp.ne.s32.totalorder %s110, %s111
    %p125 = scmp.eq.s32.totalorder %s39, 3
    %p126 = por %p124, %p125
    %p128 = scmp.ne.s32.totalorder %s111, %s127
    %p129 = scmp.eq.s32.totalorder %s39, 0
    %p130 = por %p128, %p129
    %s131 = ssub.s32 %s41, %s48
    %p132 = scmp.eq.s32.totalorder %s131, 0
    %s134 = sadd.s32 %s133, 1
    %s135 = scalar_select %p132, %s133, %s134
    %p138 = pneg %p132
    %p139 = scmp.eq.s32.totalorder %s33, 3
    %p140 = por %p138, %p139
    %p141 = scmp.ne.s32.totalorder %s133, %s136
    %p142 = scmp.eq.s32.totalorder %s33, 0
    %p143 = por %p141, %p142
    %p144 = scmp.ne.s32.totalorder %s133, %s136
    %p145 = scmp.eq.s32.totalorder %s38, 3
    %p146 = por %p144, %p145
    %p147 = scmp.ne.s32.totalorder %s136, %s137
    %p148 = scmp.eq.s32.totalorder %s38, 0
    %p149 = por %p147, %p148
    %p150 = scmp.ne.s32.totalorder %s136, %s137
    %p151 = scmp.eq.s32.totalorder %s39, 3
    %p152 = por %p150, %p151
    %p154 = scmp.ne.s32.totalorder %s137, %s153
    %p155 = scmp.eq.s32.totalorder %s39, 0
    %p156 = por %p154, %p155
    %s157 = ssub.s32 %s41, %s48
    %p158 = scmp.eq.s32.totalorder %s157, 0
    %s160 = sadd.s32 %s159, 1
    %s161 = scalar_select %p158, %s159, %s160
    %p164 = pneg %p158
    %p165 = scmp.eq.s32.totalorder %s33, 3
    %p166 = por %p164, %p165
    %p167 = scmp.ne.s32.totalorder %s159, %s162
    %p168 = scmp.eq.s32.totalorder %s33, 0
    %p169 = por %p167, %p168
    %p170 = scmp.ne.s32.totalorder %s159, %s162
    %p171 = scmp.eq.s32.totalorder %s38, 3
    %p172 = por %p170, %p171
    %p173 = scmp.ne.s32.totalorder %s162, %s163
    %p174 = scmp.eq.s32.totalorder %s38, 0
    %p175 = por %p173, %p174
    %p176 = scmp.ne.s32.totalorder %s162, %s163
    %p177 = scmp.eq.s32.totalorder %s39, 3
    %p178 = por %p176, %p177
    %p180 = scmp.ne.s32.totalorder %s163, %s179
    %p181 = scmp.eq.s32.totalorder %s39, 0
    %p182 = por %p180, %p181
    %s183 = ssub.s32 %s41, %s48
    %p184 = scmp.eq.s32.totalorder %s183, 0
    %s186 = sadd.s32 %s185, 1
    %s187 = scalar_select %p184, %s185, %s186
    %p190 = pneg %p184
    %p191 = scmp.eq.s32.totalorder %s33, 3
    %p192 = por %p190, %p191
    %p193 = scmp.ne.s32.totalorder %s185, %s188
    %p194 = scmp.eq.s32.totalorder %s33, 0
    %p195 = por %p193, %p194
    %p196 = scmp.ne.s32.totalorder %s185, %s188
    %p197 = scmp.eq.s32.totalorder %s38, 3
    %p198 = por %p196, %p197
    %p199 = scmp.ne.s32.totalorder %s188, %s189
    %p200 = scmp.eq.s32.totalorder %s38, 0
    %p201 = por %p199, %p200
    %p202 = scmp.ne.s32.totalorder %s188, %s189
    %p203 = scmp.eq.s32.totalorder %s39, 3
    %p204 = por %p202, %p203
    %p206 = scmp.ne.s32.totalorder %s189, %s205
    %p207 = scmp.eq.s32.totalorder %s39, 0
    %p208 = por %p206, %p207
    %s209 = ssub.s32 %s41, %s48
    %p210 = scmp.eq.s32.totalorder %s209, 0
    %s212 = sadd.s32 %s211, 1
    %s213 = scalar_select %p210, %s211, %s212
    %p216 = pneg %p210
    %p217 = scmp.eq.s32.totalorder %s33, 3
    %p218 = por %p216, %p217
    %p219 = scmp.ne.s32.totalorder %s211, %s214
    %p220 = scmp.eq.s32.totalorder %s33, 0
    %p221 = por %p219, %p220
    %p222 = scmp.ne.s32.totalorder %s211, %s214
    %p223 = scmp.eq.s32.totalorder %s38, 3
    %p224 = por %p222, %p223
    %p225 = scmp.ne.s32.totalorder %s214, %s215
    %p226 = scmp.eq.s32.totalorder %s38, 0
    %p227 = por %p225, %p226
    %p228 = scmp.ne.s32.totalorder %s214, %s215
    %p229 = scmp.eq.s32.totalorder %s39, 3
    %p230 = por %p228, %p229
    %p232 = scmp.ne.s32.totalorder %s215, %s231
    %p233 = scmp.eq.s32.totalorder %s39, 0
    %p234 = por %p232, %p233
    %s235 = ssub.s32 %s41, %s48
    %p236 = scmp.eq.s32.totalorder %s235, 0
    %s238 = sadd.s32 %s237, 1
    %s239 = scalar_select %p236, %s237, %s238
    %p242 = pneg %p236
    %p243 = scmp.eq.s32.totalorder %s33, 3
    %p244 = por %p242, %p243
    %p245 = scmp.ne.s32.totalorder %s237, %s240
    %p246 = scmp.eq.s32.totalorder %s33, 0
    %p247 = por %p245, %p246
    %p248 = scmp.ne.s32.totalorder %s237, %s240
    %p249 = scmp.eq.s32.totalorder %s38, 3
    %p250 = por %p248, %p249
    %p251 = scmp.ne.s32.totalorder %s240, %s241
    %p252 = scmp.eq.s32.totalorder %s38, 0
    %p253 = por %p251, %p252
    %p254 = scmp.ne.s32.totalorder %s240, %s241
    %p255 = scmp.eq.s32.totalorder %s39, 3
    %p256 = por %p254, %p255
    %p258 = scmp.ne.s32.totalorder %s241, %s257
    %p259 = scmp.eq.s32.totalorder %s39, 0
    %p260 = por %p258, %p259
    %s261 = ssub.s32 %s41, %s48
    %p262 = scmp.eq.s32.totalorder %s261, 0
    %s264 = sadd.s32 %s263, 1
    %s265 = scalar_select %p262, %s263, %s264
    %p268 = pneg %p262
    %p269 = scmp.eq.s32.totalorder %s33, 3
    %p270 = por %p268, %p269
    %p271 = scmp.ne.s32.totalorder %s263, %s266
    %p272 = scmp.eq.s32.totalorder %s33, 0
    %p273 = por %p271, %p272
    %p274 = scmp.ne.s32.totalorder %s263, %s266
    %p275 = scmp.eq.s32.totalorder %s38, 3
    %p276 = por %p274, %p275
    %p277 = scmp.ne.s32.totalorder %s266, %s267
    %p278 = scmp.eq.s32.totalorder %s38, 0
    %p279 = por %p277, %p278
    %p280 = scmp.ne.s32.totalorder %s266, %s267
    %p281 = scmp.eq.s32.totalorder %s39, 3
    %p282 = por %p280, %p281
    %p284 = scmp.ne.s32.totalorder %s267, %s283
    %p285 = scmp.eq.s32.totalorder %s39, 0
    %p286 = por %p284, %p285
    %s287 = ssub.s32 %s41, %s48
    %p288 = scmp.eq.s32.totalorder %s287, 0
    %s290 = sadd.s32 %s289, 1
    %s291 = scalar_select %p288, %s289, %s290
    %p294 = pneg %p288
    %p295 = scmp.eq.s32.totalorder %s33, 3
    %p296 = por %p294, %p295
    %p297 = scmp.ne.s32.totalorder %s289, %s292
    %p298 = scmp.eq.s32.totalorder %s33, 0
    %p299 = por %p297, %p298
    %p300 = scmp.ne.s32.totalorder %s289, %s292
    %p301 = scmp.eq.s32.totalorder %s38, 3
    %p302 = por %p300, %p301
    %p303 = scmp.ne.s32.totalorder %s292, %s293
    %p304 = scmp.eq.s32.totalorder %s38, 0
    %p305 = por %p303, %p304
    %p306 = scmp.ne.s32.totalorder %s292, %s293
    %p307 = scmp.eq.s32.totalorder %s39, 3
    %p308 = por %p306, %p307
    %p310 = scmp.ne.s32.totalorder %s293, %s309
    %p311 = scmp.eq.s32.totalorder %s39, 0
    %p312 = por %p310, %p311
    %s313 = ssub.s32 %s41, %s48
    %p314 = scmp.eq.s32.totalorder %s313, 0
    %s316 = sadd.s32 %s315, 1
    %s317 = scalar_select %p314, %s315, %s316
    %p320 = pneg %p314
    %p321 = scmp.eq.s32.totalorder %s33, 3
    %p322 = por %p320, %p321
    %p323 = scmp.ne.s32.totalorder %s315, %s318
    %p324 = scmp.eq.s32.totalorder %s33, 0
    %p325 = por %p323, %p324
    %p326 = scmp.ne.s32.totalorder %s315, %s318
    %p327 = scmp.eq.s32.totalorder %s38, 3
    %p328 = por %p326, %p327
    %p329 = scmp.ne.s32.totalorder %s318, %s319
    %p330 = scmp.eq.s32.totalorder %s38, 0
    %p331 = por %p329, %p330
    %p332 = scmp.ne.s32.totalorder %s318, %s319
    %p333 = scmp.eq.s32.totalorder %s39, 3
    %p334 = por %p332, %p333
    %p336 = scmp.ne.s32.totalorder %s319, %s335
    %p337 = scmp.eq.s32.totalorder %s39, 0
    %p338 = por %p336, %p337
    %s339 = ssub.s32 %s41, %s48
    %p340 = scmp.eq.s32.totalorder %s339, 0
    %s342 = sadd.s32 %s341, 1
    %s343 = scalar_select %p340, %s341, %s342
    %p346 = pneg %p340
    %p347 = scmp.eq.s32.totalorder %s33, 3
    %p348 = por %p346, %p347
    %p349 = scmp.ne.s32.totalorder %s341, %s344
    %p350 = scmp.eq.s32.totalorder %s33, 0
    %p351 = por %p349, %p350
    %p352 = scmp.ne.s32.totalorder %s341, %s344
    %p353 = scmp.eq.s32.totalorder %s38, 3
    %p354 = por %p352, %p353
    %p355 = scmp.ne.s32.totalorder %s344, %s345
    %p356 = scmp.eq.s32.totalorder %s38, 0
    %p357 = por %p355, %p356
    %p358 = scmp.ne.s32.totalorder %s344, %s345
    %p359 = scmp.eq.s32.totalorder %s39, 3
    %p360 = por %p358, %p359
    %p362 = scmp.ne.s32.totalorder %s345, %s361
    %p363 = scmp.eq.s32.totalorder %s39, 0
    %p364 = por %p362, %p363
    %s365 = ssub.s32 %s41, %s48
    %p366 = scmp.eq.s32.totalorder %s365, 0
    %s368 = sadd.s32 %s367, 1
    %s369 = scalar_select %p366, %s367, %s368
    %p372 = pneg %p366
    %p373 = scmp.eq.s32.totalorder %s33, 3
    %p374 = por %p372, %p373
    %p375 = scmp.ne.s32.totalorder %s367, %s370
    %p376 = scmp.eq.s32.totalorder %s33, 0
    %p377 = por %p375, %p376
    %p378 = scmp.ne.s32.totalorder %s367, %s370
    %p379 = scmp.eq.s32.totalorder %s38, 3
    %p380 = por %p378, %p379
    %p381 = scmp.ne.s32.totalorder %s370, %s371
    %p382 = scmp.eq.s32.totalorder %s38, 0
    %p383 = por %p381, %p382
    %p384 = scmp.ne.s32.totalorder %s370, %s371
    %p385 = scmp.eq.s32.totalorder %s39, 3
    %p386 = por %p384, %p385
    %p388 = scmp.ne.s32.totalorder %s371, %s387
    %p389 = scmp.eq.s32.totalorder %s39, 0
    %p390 = por %p388, %p389
    %s391 = ssub.s32 %s41, %s48
    %p392 = scmp.eq.s32.totalorder %s391, 0
    %s394 = sadd.s32 %s393, 1
    %s395 = scalar_select %p392, %s393, %s394
    %p398 = pneg %p392
    %p399 = scmp.eq.s32.totalorder %s33, 3
    %p400 = por %p398, %p399
    %p401 = scmp.ne.s32.totalorder %s393, %s396
    %p402 = scmp.eq.s32.totalorder %s33, 0
    %p403 = por %p401, %p402
    %p404 = scmp.ne.s32.totalorder %s393, %s396
    %p405 = scmp.eq.s32.totalorder %s38, 3
    %p406 = por %p404, %p405
    %p407 = scmp.ne.s32.totalorder %s396, %s397
    %p408 = scmp.eq.s32.totalorder %s38, 0
    %p409 = por %p407, %p408
    %p410 = scmp.ne.s32.totalorder %s396, %s397
    %p411 = scmp.eq.s32.totalorder %s39, 3
    %p412 = por %p410, %p411
    %p414 = scmp.ne.s32.totalorder %s397, %s413
    %p415 = scmp.eq.s32.totalorder %s39, 0
    %p416 = por %p414, %p415
    %s417 = ssub.s32 %s41, %s48
    %p418 = scmp.eq.s32.totalorder %s417, 0
    %s420 = sadd.s32 %s419, 1
    %s421 = scalar_select %p418, %s419, %s420
    %p424 = pneg %p418
    %p425 = scmp.eq.s32.totalorder %s33, 3
    %p426 = por %p424, %p425
    %p427 = scmp.ne.s32.totalorder %s419, %s422
    %p428 = scmp.eq.s32.totalorder %s33, 0
    %p429 = por %p427, %p428
    %p430 = scmp.ne.s32.totalorder %s419, %s422
    %p431 = scmp.eq.s32.totalorder %s38, 3
    %p432 = por %p430, %p431
    %p433 = scmp.ne.s32.totalorder %s422, %s423
    %p434 = scmp.eq.s32.totalorder %s38, 0
    %p435 = por %p433, %p434
    %p436 = scmp.ne.s32.totalorder %s422, %s423
    %p437 = scmp.eq.s32.totalorder %s39, 3
    %p438 = por %p436, %p437
    %p440 = scmp.ne.s32.totalorder %s423, %s439
    %p441 = scmp.eq.s32.totalorder %s39, 0
    %p442 = por %p440, %p441
    %s443 = ssub.s32 %s41, %s48
    %p444 = scmp.eq.s32.totalorder %s443, 0
    %s446 = sadd.s32 %s445, 1
    %s447 = scalar_select %p444, %s445, %s446
    %p450 = pneg %p444
    %p451 = scmp.eq.s32.totalorder %s33, 3
    %p452 = por %p450, %p451
    %p453 = scmp.ne.s32.totalorder %s445, %s448
    %p454 = scmp.eq.s32.totalorder %s33, 0
    %p455 = por %p453, %p454
    %p456 = scmp.ne.s32.totalorder %s445, %s448
    %p457 = scmp.eq.s32.totalorder %s38, 3
    %p458 = por %p456, %p457
    %p459 = scmp.ne.s32.totalorder %s448, %s449
    %p460 = scmp.eq.s32.totalorder %s38, 0
    %p461 = por %p459, %p460
    %p462 = scmp.ne.s32.totalorder %s448, %s449
    %p463 = scmp.eq.s32.totalorder %s39, 3
    %p464 = por %p462, %p463
    %p466 = scmp.ne.s32.totalorder %s449, %s465
    %p467 = scmp.eq.s32.totalorder %s39, 0
    %p468 = por %p466, %p467
    %s469 = ssub.s32 %s41, %s48
    %p470 = scmp.eq.s32.totalorder %s469, 0
    %s472 = sadd.s32 %s471, 1
    %s473 = scalar_select %p470, %s471, %s472
    %p476 = pneg %p470
    %p477 = scmp.eq.s32.totalorder %s33, 3
    %p478 = por %p476, %p477
    %p479 = scmp.ne.s32.totalorder %s471, %s474
    %p480 = scmp.eq.s32.totalorder %s33, 0
    %p481 = por %p479, %p480
    %p482 = scmp.ne.s32.totalorder %s471, %s474
    %p483 = scmp.eq.s32.totalorder %s38, 3
    %p484 = por %p482, %p483
    %p485 = scmp.ne.s32.totalorder %s474, %s475
    %p486 = scmp.eq.s32.totalorder %s38, 0
    %p487 = por %p485, %p486
    %p488 = scmp.ne.s32.totalorder %s474, %s475
    %p489 = scmp.eq.s32.totalorder %s39, 3
    %p490 = por %p488, %p489
    %p492 = scmp.ne.s32.totalorder %s475, %s491
    %p493 = scmp.eq.s32.totalorder %s39, 0
    %p494 = por %p492, %p493
    %s495 = ssub.s32 %s41, %s48
    %p496 = scmp.eq.s32.totalorder %s495, 0
    %s498 = sadd.s32 %s497, 1
    %s499 = scalar_select %p496, %s497, %s498
    %p502 = pneg %p496
    %p503 = scmp.eq.s32.totalorder %s33, 3
    %p504 = por %p502, %p503
    %p505 = scmp.ne.s32.totalorder %s497, %s500
    %p506 = scmp.eq.s32.totalorder %s33, 0
    %p507 = por %p505, %p506
    %p508 = scmp.ne.s32.totalorder %s497, %s500
    %p509 = scmp.eq.s32.totalorder %s38, 3
    %p510 = por %p508, %p509
    %p511 = scmp.ne.s32.totalorder %s500, %s501
    %p512 = scmp.eq.s32.totalorder %s38, 0
    %p513 = por %p511, %p512
    %p514 = scmp.ne.s32.totalorder %s500, %s501
    %p515 = scmp.eq.s32.totalorder %s39, 3
    %p516 = por %p514, %p515
    %p518 = scmp.ne.s32.totalorder %s501, %s517
    %p519 = scmp.eq.s32.totalorder %s39, 0
    %p520 = por %p518, %p519
    %s521 = ssub.s32 %s41, %s48
    %p522 = scmp.eq.s32.totalorder %s521, 0
    %s524 = sadd.s32 %s523, 1
    %s525 = scalar_select %p522, %s523, %s524
    %p528 = pneg %p522
    %p529 = scmp.eq.s32.totalorder %s33, 3
    %p530 = por %p528, %p529
    %p531 = scmp.ne.s32.totalorder %s523, %s526
    %p532 = scmp.eq.s32.totalorder %s33, 0
    %p533 = por %p531, %p532
    %p534 = scmp.ne.s32.totalorder %s523, %s526
    %p535 = scmp.eq.s32.totalorder %s38, 3
    %p536 = por %p534, %p535
    %p537 = scmp.ne.s32.totalorder %s526, %s527
    %p538 = scmp.eq.s32.totalorder %s38, 0
    %p539 = por %p537, %p538
    %p540 = scmp.ne.s32.totalorder %s526, %s527
    %p541 = scmp.eq.s32.totalorder %s39, 3
    %p542 = por %p540, %p541
    %p544 = scmp.ne.s32.totalorder %s527, %s543
    %p545 = scmp.eq.s32.totalorder %s39, 0
    %p546 = por %p544, %p545
    %s547 = ssub.s32 %s41, %s48
    %p548 = scmp.eq.s32.totalorder %s547, 0
    %s550 = sadd.s32 %s549, 1
    %s551 = scalar_select %p548, %s549, %s550
    %p554 = pneg %p548
    %p555 = scmp.eq.s32.totalorder %s33, 3
    %p556 = por %p554, %p555
    %p557 = scmp.ne.s32.totalorder %s549, %s552
    %p558 = scmp.eq.s32.totalorder %s33, 0
    %p559 = por %p557, %p558
    %p560 = scmp.ne.s32.totalorder %s549, %s552
    %p561 = scmp.eq.s32.totalorder %s38, 3
    %p562 = por %p560, %p561
    %p563 = scmp.ne.s32.totalorder %s552, %s553
    %p564 = scmp.eq.s32.totalorder %s38, 0
    %p565 = por %p563, %p564
    %p566 = scmp.ne.s32.totalorder %s552, %s553
    %p567 = scmp.eq.s32.totalorder %s39, 3
    %p568 = por %p566, %p567
    %p570 = scmp.ne.s32.totalorder %s553, %s569
    %p571 = scmp.eq.s32.totalorder %s39, 0
    %p572 = por %p570, %p571
    %s573 = ssub.s32 %s41, %s48
    %p574 = scmp.eq.s32.totalorder %s573, 0
    %s576 = sadd.s32 %s575, 1
    %s577 = scalar_select %p574, %s575, %s576
    %p580 = pneg %p574
    %p581 = scmp.eq.s32.totalorder %s33, 3
    %p582 = por %p580, %p581
    %p583 = scmp.ne.s32.totalorder %s575, %s578
    %p584 = scmp.eq.s32.totalorder %s33, 0
    %p585 = por %p583, %p584
    %p586 = scmp.ne.s32.totalorder %s575, %s578
    %p587 = scmp.eq.s32.totalorder %s38, 3
    %p588 = por %p586, %p587
    %p589 = scmp.ne.s32.totalorder %s578, %s579
    %p590 = scmp.eq.s32.totalorder %s38, 0
    %p591 = por %p589, %p590
    %p592 = scmp.ne.s32.totalorder %s578, %s579
    %p593 = scmp.eq.s32.totalorder %s39, 3
    %p594 = por %p592, %p593
    %p596 = scmp.ne.s32.totalorder %s579, %s595
    %p597 = scmp.eq.s32.totalorder %s39, 0
    %p598 = por %p596, %p597
    %s599 = ssub.s32 %s41, %s48
    %p600 = scmp.eq.s32.totalorder %s599, 0
    %s602 = sadd.s32 %s601, 1
    %s603 = scalar_select %p600, %s601, %s602
    %p606 = pneg %p600
    %p607 = scmp.eq.s32.totalorder %s33, 3
    %p608 = por %p606, %p607
    %p609 = scmp.ne.s32.totalorder %s601, %s604
    %p610 = scmp.eq.s32.totalorder %s33, 0
    %p611 = por %p609, %p610
    %p612 = scmp.ne.s32.totalorder %s601, %s604
    %p613 = scmp.eq.s32.totalorder %s38, 3
    %p614 = por %p612, %p613
    %p615 = scmp.ne.s32.totalorder %s604, %s605
    %p616 = scmp.eq.s32.totalorder %s38, 0
    %p617 = por %p615, %p616
    %p618 = scmp.ne.s32.totalorder %s604, %s605
    %p619 = scmp.eq.s32.totalorder %s39, 3
    %p620 = por %p618, %p619
    %p622 = scmp.ne.s32.totalorder %s605, %s621
    %p623 = scmp.eq.s32.totalorder %s39, 0
    %p624 = por %p622, %p623
    %s625 = ssub.s32 %s41, %s48
    %p626 = scmp.eq.s32.totalorder %s625, 0
    %s628 = sadd.s32 %s627, 1
    %s629 = scalar_select %p626, %s627, %s628
    %p632 = pneg %p626
    %p633 = scmp.eq.s32.totalorder %s33, 3
    %p634 = por %p632, %p633
    %p635 = scmp.ne.s32.totalorder %s627, %s630
    %p636 = scmp.eq.s32.totalorder %s33, 0
    %p637 = por %p635, %p636
    %p638 = scmp.ne.s32.totalorder %s627, %s630
    %p639 = scmp.eq.s32.totalorder %s38, 3
    %p640 = por %p638, %p639
    %p641 = scmp.ne.s32.totalorder %s630, %s631
    %p642 = scmp.eq.s32.totalorder %s38, 0
    %p643 = por %p641, %p642
    %p644 = scmp.ne.s32.totalorder %s630, %s631
    %p645 = scmp.eq.s32.totalorder %s39, 3
    %p646 = por %p644, %p645
    %p648 = scmp.ne.s32.totalorder %s631, %s647
    %p649 = scmp.eq.s32.totalorder %s39, 0
    %p650 = por %p648, %p649
    %s652 = sadd.s32 %s651, 1
    %p655 = scmp.eq.s32.totalorder %s33, 3
    %p656 = scmp.ne.s32.totalorder %s651, %s653
    %p657 = scmp.eq.s32.totalorder %s33, 0
    %p658 = por %p656, %p657
    %p659 = scmp.ne.s32.totalorder %s651, %s653
    %p660 = scmp.eq.s32.totalorder %s38, 3
    %p661 = por %p659, %p660
    %p662 = scmp.ne.s32.totalorder %s653, %s654
    %p663 = scmp.eq.s32.totalorder %s38, 0
    %p664 = por %p662, %p663
    %p665 = scmp.ne.s32.totalorder %s653, %s654
    %p666 = scmp.eq.s32.totalorder %s39, 3
    %p667 = por %p665, %p666
    %p669 = scmp.ne.s32.totalorder %s654, %s668
    %p670 = scmp.eq.s32.totalorder %s39, 0
    %p671 = por %p669, %p670
    %s673 = sadd.s32 %s672, 1
    %p676 = scmp.eq.s32.totalorder %s33, 3
    %p677 = scmp.ne.s32.totalorder %s672, %s674
    %p678 = scmp.eq.s32.totalorder %s33, 0
    %p679 = por %p677, %p678
    %p680 = scmp.ne.s32.totalorder %s672, %s674
    %p681 = scmp.eq.s32.totalorder %s38, 3
    %p682 = por %p680, %p681
    %p683 = scmp.ne.s32.totalorder %s674, %s675
    %p684 = scmp.eq.s32.totalorder %s38, 0
    %p685 = por %p683, %p684
    %p686 = scmp.ne.s32.totalorder %s674, %s675
    %p687 = scmp.eq.s32.totalorder %s39, 3
    %p688 = por %p686, %p687
    %p690 = scmp.ne.s32.totalorder %s675, %s689
    %p691 = scmp.eq.s32.totalorder %s39, 0
    %p692 = por %p690, %p691
    %s694 = sadd.s32 %s693, 1
    %p697 = scmp.eq.s32.totalorder %s33, 3
    %p698 = scmp.ne.s32.totalorder %s693, %s695
    %p699 = scmp.eq.s32.totalorder %s33, 0
    %p700 = por %p698, %p699
    %p701 = scmp.ne.s32.totalorder %s693, %s695
    %p702 = scmp.eq.s32.totalorder %s38, 3
    %p703 = por %p701, %p702
    %p704 = scmp.ne.s32.totalorder %s695, %s696
    %p705 = scmp.eq.s32.totalorder %s38, 0
    %p706 = por %p704, %p705
    %p707 = scmp.ne.s32.totalorder %s695, %s696
    %p708 = scmp.eq.s32.totalorder %s39, 3
    %p709 = por %p707, %p708
    %p711 = scmp.ne.s32.totalorder %s696, %s710
    %p712 = scmp.eq.s32.totalorder %s39, 0
    %p713 = por %p711, %p712
    %s715 = sadd.s32 %s714, 1
    %p718 = scmp.eq.s32.totalorder %s33, 3
    %p719 = scmp.ne.s32.totalorder %s714, %s716
    %p720 = scmp.eq.s32.totalorder %s33, 0
    %p721 = por %p719, %p720
    %p722 = scmp.ne.s32.totalorder %s714, %s716
    %p723 = scmp.eq.s32.totalorder %s38, 3
    %p724 = por %p722, %p723
    %p725 = scmp.ne.s32.totalorder %s716, %s717
    %p726 = scmp.eq.s32.totalorder %s38, 0
    %p727 = por %p725, %p726
    %p728 = scmp.ne.s32.totalorder %s716, %s717
    %p729 = scmp.eq.s32.totalorder %s39, 3
    %p730 = por %p728, %p729
    %p732 = scmp.ne.s32.totalorder %s717, %s731
    %p733 = scmp.eq.s32.totalorder %s39, 0
    %p734 = por %p732, %p733
    %s735 = ssub.s32 %s40, %s52
    %p736 = scmp.eq.s32.totalorder %s735, 0
    %s738 = sadd.s32 %s737, 1
    %s739 = scalar_select %p736, %s737, %s738
    %p742 = pneg %p736
    %p743 = scmp.eq.s32.totalorder %s33, 3
    %p744 = por %p742, %p743
    %p745 = scmp.ne.s32.totalorder %s737, %s740
    %p746 = scmp.eq.s32.totalorder %s33, 0
    %p747 = por %p745, %p746
    %p748 = scmp.ne.s32.totalorder %s737, %s740
    %p749 = scmp.eq.s32.totalorder %s38, 3
    %p750 = por %p748, %p749
    %p751 = scmp.ne.s32.totalorder %s740, %s741
    %p752 = scmp.eq.s32.totalorder %s38, 0
    %p753 = por %p751, %p752
    %p754 = scmp.ne.s32.totalorder %s740, %s741
    %p755 = scmp.eq.s32.totalorder %s39, 3
    %p756 = por %p754, %p755
    %p758 = scmp.ne.s32.totalorder %s741, %s757
    %p759 = scmp.eq.s32.totalorder %s39, 0
    %p760 = por %p758, %p759
    %p761 = scmp.le.s32.totalorder 1, %s33
    %p762 = scmp.lt.s32.totalorder %s33, 5
    %p763 = pnand %p761, %p762
    %p764 = pneg %p763
    // Predicated region
    $region9: #{_lambda_.1} parent=5 // pred_check
      _
    $region10: #{_lambda_.1} parent=5 // pred_check_branch
      %766 = sbr.rel (%p763) target = $region12
    $region11: #{_lambda_.1} parent=5 // pred_region
      %s767 = ssub.s32 %s33, 1
      // Predicated region
      $region13: #{_lambda_.1} parent=11 // pred_check
        %p768 = pneg %p664
      $region14: #{_lambda_.1} parent=11 // pred_check_branch
        %770 = sbr.rel (%p768) target = $region16
      $region15: #{_lambda_.1} parent=11 // pred_region
        _
      $region16: #{_lambda_.1} parent=11 // pred_fallthru
        _
      // Predicated region
      $region17: #{_lambda_.1} parent=11 // pred_check
        %p771 = pneg %p685
      $region18: #{_lambda_.1} parent=11 // pred_check_branch
        %773 = sbr.rel (%p771) target = $region20
      $region19: #{_lambda_.1} parent=11 // pred_region
        _
      $region20: #{_lambda_.1} parent=11 // pred_fallthru
        _
      // Predicated region
      $region21: #{_lambda_.1} parent=11 // pred_check
        %p774 = pneg %p706
      $region22: #{_lambda_.1} parent=11 // pred_check_branch
        %776 = sbr.rel (%p774) target = $region24
      $region23: #{_lambda_.1} parent=11 // pred_region
        _
      $region24: #{_lambda_.1} parent=11 // pred_fallthru
        _
      // Predicated region
      $region25: #{_lambda_.1} parent=11 // pred_check
        %p777 = pneg %p727
      $region26: #{_lambda_.1} parent=11 // pred_check_branch
        %779 = sbr.rel (%p777) target = $region28
      $region27: #{_lambda_.1} parent=11 // pred_region
        _
      $region28: #{_lambda_.1} parent=11 // pred_fallthru
        _
    $region12: #{_lambda_.1} parent=5 // pred_fallthru
      _
    %p780 = scmp.lt.s32.totalorder %s33, 4
    // Predicated region
    $region29: #{_lambda_.1} parent=5 // pred_check
      %p781 = pneg %p780
    $region30: #{_lambda_.1} parent=5 // pred_check_branch
      %783 = sbr.rel (%p781) target = $region32
    $region31: #{_lambda_.1} parent=5 // pred_region
      // Predicated region
      $region33: #{_lambda_.1} parent=31 // pred_check
        %p784 = pneg %p65
      $region34: #{_lambda_.1} parent=31 // pred_check_branch
        %786 = sbr.rel (%p784) target = $region36
      $region35: #{_lambda_.1} parent=31 // pred_region
        %p787 = scmp.lt.s32.totalorder %s40, 1
        %s788 = scalar_select %p787, %s40, 1
        %s789 = smul.addr %s788, 2
        %s790 = smul.addr %s789, 8
        %s791 = scalar_lea.vmem %s0, %s790
      $region36: #{_lambda_.1} parent=31 // pred_fallthru
        _
      // Predicated region
      $region37: #{_lambda_.1} parent=31 // pred_check
        %p792 = pneg %p91
      $region38: #{_lambda_.1} parent=31 // pred_check_branch
        %794 = sbr.rel (%p792) target = $region40
      $region39: #{_lambda_.1} parent=31 // pred_region
        %p795 = scmp.lt.s32.totalorder %s40, 1
        %s796 = scalar_select %p795, %s40, 1
        %s797 = smul.addr %s796, 4
        %s798 = scalar_lea.vmem %s1, %s797
      $region40: #{_lambda_.1} parent=31 // pred_fallthru
        _
      // Predicated region
      $region41: #{_lambda_.1} parent=31 // pred_check
        %p799 = pneg %p117
      $region42: #{_lambda_.1} parent=31 // pred_check_branch
        %801 = sbr.rel (%p799) target = $region44
      $region43: #{_lambda_.1} parent=31 // pred_region
        %p802 = scmp.lt.s32.totalorder %s40, 1
        %s803 = scalar_select %p802, %s40, 1
        %s804 = scalar_lea.vmem %s2, %s803
      $region44: #{_lambda_.1} parent=31 // pred_fallthru
        _
      // Predicated region
      $region45: #{_lambda_.1} parent=31 // pred_check
        %p805 = pneg %p143
      $region46: #{_lambda_.1} parent=31 // pred_check_branch
        %807 = sbr.rel (%p805) target = $region48
      $region47: #{_lambda_.1} parent=31 // pred_region
        %p808 = scmp.lt.s32.totalorder %s41, 1
        %s809 = scalar_select %p808, %s41, 1
        %s810 = scalar_lea.vmem %s3, %s809
      $region48: #{_lambda_.1} parent=31 // pred_fallthru
        _
      // Predicated region
      $region49: #{_lambda_.1} parent=31 // pred_check
        %p811 = pneg %p169
      $region50: #{_lambda_.1} parent=31 // pred_check_branch
        %813 = sbr.rel (%p811) target = $region52
      $region51: #{_lambda_.1} parent=31 // pred_region
        %p814 = scmp.lt.s32.totalorder %s41, 1
        %s815 = scalar_select %p814, %s41, 1
        %s816 = scalar_lea.vmem %s4, %s815
      $region52: #{_lambda_.1} parent=31 // pred_fallthru
        _
      // Predicated region
      $region53: #{_lambda_.1} parent=31 // pred_check
        %p817 = pneg %p195
      $region54: #{_lambda_.1} parent=31 // pred_check_branch
        %819 = sbr.rel (%p817) target = $region56
      $region55: #{_lambda_.1} parent=31 // pred_region
        %p820 = scmp.lt.s32.totalorder %s41, 1
        %s821 = scalar_select %p820, %s41, 1
        %s822 = smul.addr %s821, 4
        %s823 = smul.addr %s822, 4
        %s824 = scalar_lea.vmem %s5, %s823
      $region56: #{_lambda_.1} parent=31 // pred_fallthru
        _
      // Predicated region
      $region57: #{_lambda_.1} parent=31 // pred_check
        %p825 = pneg %p221
      $region58: #{_lambda_.1} parent=31 // pred_check_branch
        %827 = sbr.rel (%p825) target = $region60
      $region59: #{_lambda_.1} parent=31 // pred_region
        %p828 = scmp.lt.s32.totalorder %s41, 1
        %s829 = scalar_select %p828, %s41, 1
        %s830 = scalar_lea.vmem %s6, %s829
      $region60: #{_lambda_.1} parent=31 // pred_fallthru
        _
      // Predicated region
      $region61: #{_lambda_.1} parent=31 // pred_check
        %p831 = pneg %p247
      $region62: #{_lambda_.1} parent=31 // pred_check_branch
        %833 = sbr.rel (%p831) target = $region64
      $region63: #{_lambda_.1} parent=31 // pred_region
        %p834 = scmp.lt.s32.totalorder %s41, 1
        %s835 = scalar_select %p834, %s41, 1
        %s836 = smul.addr %s835, 4
        %s837 = smul.addr %s836, 4
        %s838 = scalar_lea.vmem %s7, %s837
      $region64: #{_lambda_.1} parent=31 // pred_fallthru
        _
      // Predicated region
      $region65: #{_lambda_.1} parent=31 // pred_check
        %p839 = pneg %p273
      $region66: #{_lambda_.1} parent=31 // pred_check_branch
        %841 = sbr.rel (%p839) target = $region68
      $region67: #{_lambda_.1} parent=31 // pred_region
        %p842 = scmp.lt.s32.totalorder %s41, 1
        %s843 = scalar_select %p842, %s41, 1
        %s844 = scalar_lea.vmem %s8, %s843
      $region68: #{_lambda_.1} parent=31 // pred_fallthru
        _
      // Predicated region
      $region69: #{_lambda_.1} parent=31 // pred_check
        %p845 = pneg %p299
      $region70: #{_lambda_.1} parent=31 // pred_check_branch
        %847 = sbr.rel (%p845) target = $region72
      $region71: #{_lambda_.1} parent=31 // pred_region
        %p848 = scmp.lt.s32.totalorder %s41, 1
        %s849 = scalar_select %p848, %s41, 1
        %s850 = scalar_lea.vmem %s9, %s849
      $region72: #{_lambda_.1} parent=31 // pred_fallthru
        _
      // Predicated region
      $region73: #{_lambda_.1} parent=31 // pred_check
        %p851 = pneg %p325
      $region74: #{_lambda_.1} parent=31 // pred_check_branch
        %853 = sbr.rel (%p851) target = $region76
      $region75: #{_lambda_.1} parent=31 // pred_region
        %p854 = scmp.lt.s32.totalorder %s41, 1
        %s855 = scalar_select %p854, %s41, 1
        %s856 = scalar_lea.vmem %s10, %s855
      $region76: #{_lambda_.1} parent=31 // pred_fallthru
        _
      // Predicated region
      $region77: #{_lambda_.1} parent=31 // pred_check
        %p857 = pneg %p351
      $region78: #{_lambda_.1} parent=31 // pred_check_branch
        %859 = sbr.rel (%p857) target = $region80
      $region79: #{_lambda_.1} parent=31 // pred_region
        %p860 = scmp.lt.s32.totalorder %s41, 1
        %s861 = scalar_select %p860, %s41, 1
        %s862 = smul.addr %s861, 4
        %s863 = smul.addr %s862, 4
        %s864 = scalar_lea.vmem %s11, %s863
      $region80: #{_lambda_.1} parent=31 // pred_fallthru
        _
      // Predicated region
      $region81: #{_lambda_.1} parent=31 // pred_check
        %p865 = pneg %p377
      $region82: #{_lambda_.1} parent=31 // pred_check_branch
        %867 = sbr.rel (%p865) target = $region84
      $region83: #{_lambda_.1} parent=31 // pred_region
        %p868 = scmp.lt.s32.totalorder %s41, 1
        %s869 = scalar_select %p868, %s41, 1
        %s870 = scalar_lea.vmem %s12, %s869
      $region84: #{_lambda_.1} parent=31 // pred_fallthru
        _
      // Predicated region
      $region85: #{_lambda_.1} parent=31 // pred_check
        %p871 = pneg %p403
      $region86: #{_lambda_.1} parent=31 // pred_check_branch
        %873 = sbr.rel (%p871) target = $region88
      $region87: #{_lambda_.1} parent=31 // pred_region
        %p874 = scmp.lt.s32.totalorder %s41, 1
        %s875 = scalar_select %p874, %s41, 1
        %s876 = smul.addr %s875, 4
        %s877 = smul.addr %s876, 4
        %s878 = scalar_lea.vmem %s13, %s877
      $region88: #{_lambda_.1} parent=31 // pred_fallthru
        _
      // Predicated region
      $region89: #{_lambda_.1} parent=31 // pred_check
        %p879 = pneg %p429
      $region90: #{_lambda_.1} parent=31 // pred_check_branch
        %881 = sbr.rel (%p879) target = $region92
      $region91: #{_lambda_.1} parent=31 // pred_region
        %p882 = scmp.lt.s32.totalorder %s41, 1
        %s883 = scalar_select %p882, %s41, 1
        %s884 = scalar_lea.vmem %s14, %s883
      $region92: #{_lambda_.1} parent=31 // pred_fallthru
        _
      // Predicated region
      $region93: #{_lambda_.1} parent=31 // pred_check
        %p885 = pneg %p455
      $region94: #{_lambda_.1} parent=31 // pred_check_branch
        %887 = sbr.rel (%p885) target = $region96
      $region95: #{_lambda_.1} parent=31 // pred_region
        %p888 = scmp.lt.s32.totalorder %s41, 1
        %s889 = scalar_select %p888, %s41, 1
        %s890 = smul.addr %s889, 4
        %s891 = smul.addr %s890, 4
        %s892 = scalar_lea.vmem %s15, %s891
      $region96: #{_lambda_.1} parent=31 // pred_fallthru
        _
      // Predicated region
      $region97: #{_lambda_.1} parent=31 // pred_check
        %p893 = pneg %p481
      $region98: #{_lambda_.1} parent=31 // pred_check_branch
        %895 = sbr.rel (%p893) target = $region100
      $region99: #{_lambda_.1} parent=31 // pred_region
        %p896 = scmp.lt.s32.totalorder %s41, 1
        %s897 = scalar_select %p896, %s41, 1
        %s898 = scalar_lea.vmem %s16, %s897
      $region100: #{_lambda_.1} parent=31 // pred_fallthru
        _
      // Predicated region
      $region101: #{_lambda_.1} parent=31 // pred_check
        %p899 = pneg %p507
      $region102: #{_lambda_.1} parent=31 // pred_check_branch
        %901 = sbr.rel (%p899) target = $region104
      $region103: #{_lambda_.1} parent=31 // pred_region
        %p902 = scmp.lt.s32.totalorder %s41, 1
        %s903 = scalar_select %p902, %s41, 1
        %s904 = scalar_lea.vmem %s17, %s903
      $region104: #{_lambda_.1} parent=31 // pred_fallthru
        _
      // Predicated region
      $region105: #{_lambda_.1} parent=31 // pred_check
        %p905 = pneg %p533
      $region106: #{_lambda_.1} parent=31 // pred_check_branch
        %907 = sbr.rel (%p905) target = $region108
      $region107: #{_lambda_.1} parent=31 // pred_region
        %p908 = scmp.lt.s32.totalorder %s41, 1
        %s909 = scalar_select %p908, %s41, 1
        %s910 = scalar_lea.vmem %s18, %s909
      $region108: #{_lambda_.1} parent=31 // pred_fallthru
        _
      // Predicated region
      $region109: #{_lambda_.1} parent=31 // pred_check
        %p911 = pneg %p559
      $region110: #{_lambda_.1} parent=31 // pred_check_branch
        %913 = sbr.rel (%p911) target = $region112
      $region111: #{_lambda_.1} parent=31 // pred_region
        %p914 = scmp.lt.s32.totalorder %s41, 1
        %s915 = scalar_select %p914, %s41, 1
        %s916 = smul.addr %s915, 4
        %s917 = smul.addr %s916, 4
        %s918 = scalar_lea.vmem %s19, %s917
      $region112: #{_lambda_.1} parent=31 // pred_fallthru
        _
      // Predicated region
      $region113: #{_lambda_.1} parent=31 // pred_check
        %p919 = pneg %p585
      $region114: #{_lambda_.1} parent=31 // pred_check_branch
        %921 = sbr.rel (%p919) target = $region116
      $region115: #{_lambda_.1} parent=31 // pred_region
        %p922 = scmp.lt.s32.totalorder %s41, 1
        %s923 = scalar_select %p922, %s41, 1
        %s924 = scalar_lea.vmem %s20, %s923
      $region116: #{_lambda_.1} parent=31 // pred_fallthru
        _
      // Predicated region
      $region117: #{_lambda_.1} parent=31 // pred_check
        %p925 = pneg %p611
      $region118: #{_lambda_.1} parent=31 // pred_check_branch
        %927 = sbr.rel (%p925) target = $region120
      $region119: #{_lambda_.1} parent=31 // pred_region
        %p928 = scmp.lt.s32.totalorder %s41, 1
        %s929 = scalar_select %p928, %s41, 1
        %s930 = smul.addr %s929, 8
        %s931 = smul.addr %s930, 4
        %s932 = scalar_lea.vmem %s21, %s931
      $region120: #{_lambda_.1} parent=31 // pred_fallthru
        _
      // Predicated region
      $region121: #{_lambda_.1} parent=31 // pred_check
        %p933 = pneg %p637
      $region122: #{_lambda_.1} parent=31 // pred_check_branch
        %935 = sbr.rel (%p933) target = $region124
      $region123: #{_lambda_.1} parent=31 // pred_region
        %p936 = scmp.lt.s32.totalorder %s41, 1
        %s937 = scalar_select %p936, %s41, 1
        %s938 = scalar_lea.vmem %s22, %s937
      $region124: #{_lambda_.1} parent=31 // pred_fallthru
        _
    $region32: #{_lambda_.1} parent=5 // pred_fallthru
      _
    %p939 = scmp.le.s32.totalorder 1, %s33
    %p940 = scmp.lt.s32.totalorder %s33, 5
    %p941 = pnand %p939, %p940
    %p942 = pneg %p941
    // Predicated region
    $region125: #{_lambda_.1} parent=5 // pred_check
      _
    $region126: #{_lambda_.1} parent=5 // pred_check_branch
      %944 = sbr.rel (%p941) target = $region128
    $region127: #{_lambda_.1} parent=5 // pred_region
      %s945 = ssub.s32 %s33, 1
      %p946 = scmp.lt.s32.totalorder %s42, 1
      %s947 = scalar_select %p946, %s42, 1
      %s948 = smul.addr %s947, 2
      %s949 = smul.addr %s948, 8
      %s950 = scalar_lea.vmem %s0, %s949
      %p951 = pneg %p71
      %p952 = pneg %p68
      %p953 = scmp.lt.s32.totalorder %s42, 1
      %s954 = scalar_select %p953, %s42, 1
      %s955 = smul.addr %s954, 4
      %s956 = scalar_lea.vmem %s1, %s955
      %p957 = pneg %p97
      %p958 = pneg %p94
      %p959 = scmp.lt.s32.totalorder %s42, 1
      %s960 = scalar_select %p959, %s42, 1
      %s961 = scalar_lea.vmem %s2, %s960
      %p962 = pneg %p123
      %p963 = pneg %p120
      %p964 = scmp.lt.s32.totalorder %s43, 1
      %s965 = scalar_select %p964, %s43, 1
      %s966 = scalar_lea.vmem %s3, %s965
      %p967 = pneg %p149
      %p968 = pneg %p146
      %p969 = scmp.lt.s32.totalorder %s43, 1
      %s970 = scalar_select %p969, %s43, 1
      %s971 = scalar_lea.vmem %s4, %s970
      %p972 = pneg %p175
      %p973 = pneg %p172
      %p974 = scmp.lt.s32.totalorder %s43, 1
      %s975 = scalar_select %p974, %s43, 1
      %s976 = smul.addr %s975, 4
      %s977 = smul.addr %s976, 4
      %s978 = scalar_lea.vmem %s5, %s977
      %p979 = pneg %p201
      %p980 = pneg %p198
      %p981 = scmp.lt.s32.totalorder %s43, 1
      %s982 = scalar_select %p981, %s43, 1
      %s983 = scalar_lea.vmem %s6, %s982
      %p984 = pneg %p227
      %p985 = pneg %p224
      %p986 = scmp.lt.s32.totalorder %s43, 1
      %s987 = scalar_select %p986, %s43, 1
      %s988 = smul.addr %s987, 4
      %s989 = smul.addr %s988, 4
      %s990 = scalar_lea.vmem %s7, %s989
      %p991 = pneg %p253
      %p992 = pneg %p250
      %p993 = scmp.lt.s32.totalorder %s43, 1
      %s994 = scalar_select %p993, %s43, 1
      %s995 = scalar_lea.vmem %s8, %s994
      %p996 = pneg %p279
      %p997 = pneg %p276
      %p998 = scmp.lt.s32.totalorder %s43, 1
      %s999 = scalar_select %p998, %s43, 1
      %s1000 = scalar_lea.vmem %s9, %s999
      %p1001 = pneg %p305
      %p1002 = pneg %p302
      %p1003 = scmp.lt.s32.totalorder %s43, 1
      %s1004 = scalar_select %p1003, %s43, 1
      %s1005 = scalar_lea.vmem %s10, %s1004
      %p1006 = pneg %p331
      %p1007 = pneg %p328
      %p1008 = scmp.lt.s32.totalorder %s43, 1
      %s1009 = scalar_select %p1008, %s43, 1
      %s1010 = smul.addr %s1009, 4
      %s1011 = smul.addr %s1010, 4
      %s1012 = scalar_lea.vmem %s11, %s1011
      %p1013 = pneg %p357
      %p1014 = pneg %p354
      %p1015 = scmp.lt.s32.totalorder %s43, 1
      %s1016 = scalar_select %p1015, %s43, 1
      %s1017 = scalar_lea.vmem %s12, %s1016
      %p1018 = pneg %p383
      %p1019 = pneg %p380
      %p1020 = scmp.lt.s32.totalorder %s43, 1
      %s1021 = scalar_select %p1020, %s43, 1
      %s1022 = smul.addr %s1021, 4
      %s1023 = smul.addr %s1022, 4
      %s1024 = scalar_lea.vmem %s13, %s1023
      %p1025 = pneg %p409
      %p1026 = pneg %p406
      %p1027 = scmp.lt.s32.totalorder %s43, 1
      %s1028 = scalar_select %p1027, %s43, 1
      %s1029 = scalar_lea.vmem %s14, %s1028
      %p1030 = pneg %p435
      %p1031 = pneg %p432
      %p1032 = scmp.lt.s32.totalorder %s43, 1
      %s1033 = scalar_select %p1032, %s43, 1
      %s1034 = smul.addr %s1033, 4
      %s1035 = smul.addr %s1034, 4
      %s1036 = scalar_lea.vmem %s15, %s1035
      %p1037 = pneg %p461
      %p1038 = pneg %p458
      %p1039 = scmp.lt.s32.totalorder %s43, 1
      %s1040 = scalar_select %p1039, %s43, 1
      %s1041 = scalar_lea.vmem %s16, %s1040
      %p1042 = pneg %p487
      %p1043 = pneg %p484
      %p1044 = scmp.lt.s32.totalorder %s43, 1
      %s1045 = scalar_select %p1044, %s43, 1
      %s1046 = scalar_lea.vmem %s17, %s1045
      %p1047 = pneg %p513
      %p1048 = pneg %p510
      %p1049 = scmp.lt.s32.totalorder %s43, 1
      %s1050 = scalar_select %p1049, %s43, 1
      %s1051 = scalar_lea.vmem %s18, %s1050
      %p1052 = pneg %p539
      %p1053 = pneg %p536
      %p1054 = scmp.lt.s32.totalorder %s43, 1
      %s1055 = scalar_select %p1054, %s43, 1
      %s1056 = smul.addr %s1055, 4
      %s1057 = smul.addr %s1056, 4
      %s1058 = scalar_lea.vmem %s19, %s1057
      %p1059 = pneg %p565
      %p1060 = pneg %p562
      %p1061 = scmp.lt.s32.totalorder %s43, 1
      %s1062 = scalar_select %p1061, %s43, 1
      %s1063 = scalar_lea.vmem %s20, %s1062
      %p1064 = pneg %p591
      %p1065 = pneg %p588
      %p1066 = scmp.lt.s32.totalorder %s43, 1
      %s1067 = scalar_select %p1066, %s43, 1
      %s1068 = smul.addr %s1067, 8
      %s1069 = smul.addr %s1068, 4
      %s1070 = scalar_lea.vmem %s21, %s1069
      %p1071 = pneg %p617
      %p1072 = pneg %p614
      %p1073 = scmp.lt.s32.totalorder %s43, 1
      %s1074 = scalar_select %p1073, %s43, 1
      %s1075 = scalar_lea.vmem %s22, %s1074
      %p1076 = pneg %p643
      %p1077 = pneg %p640
      %p1078 = pneg %p664
      %p1079 = pneg %p661
      %p1080 = pneg %p685
      %p1081 = pneg %p682
      %p1082 = pneg %p706
      %p1083 = pneg %p703
      %p1084 = pneg %p727
      %p1085 = pneg %p724
      %p1086 = pneg %p753
      %p1087 = pneg %p750
      %p1088 = scmp.lt.s32.totalorder %s42, 1
      %s1089 = scalar_select %p1088, %s42, 1
      %s1090 = smul.addr %s1089, 2
      %s1091 = smul.addr %s1090, 8
      %s1092 = scalar_lea.vmem %s27, %s1091
      %p1093 = scmp.lt.s32.totalorder %s42, 1
      %s1094 = scalar_select %p1093, %s42, 1
      %s1095 = smul.addr %s1094, 2
      %s1096 = smul.addr %s1095, 8
      %s1097 = scalar_lea.vmem %s0, %s1096
      %p1098 = scmp.lt.s32.totalorder %s42, 1
      %s1099 = scalar_select %p1098, %s42, 1
      %s1100 = smul.addr %s1099, 4
      %s1101 = scalar_lea.vmem %s1, %s1100
      %p1102 = scmp.lt.s32.totalorder %s42, 1
      %s1103 = scalar_select %p1102, %s42, 1
      %s1104 = scalar_lea.vmem %s2, %s1103
      %p1105 = scmp.lt.s32.totalorder %s43, 1
      %s1106 = scalar_select %p1105, %s43, 1
      %s1107 = scalar_lea.vmem %s3, %s1106
      %p1108 = scmp.lt.s32.totalorder %s43, 1
      %s1109 = scalar_select %p1108, %s43, 1
      %s1110 = scalar_lea.vmem %s4, %s1109
      %p1111 = scmp.lt.s32.totalorder %s43, 1
      %s1112 = scalar_select %p1111, %s43, 1
      %s1113 = smul.addr %s1112, 4
      %s1114 = smul.addr %s1113, 4
      %s1115 = scalar_lea.vmem %s5, %s1114
      %p1116 = scmp.lt.s32.totalorder %s43, 1
      %s1117 = scalar_select %p1116, %s43, 1
      %s1118 = scalar_lea.vmem %s6, %s1117
      %p1119 = scmp.lt.s32.totalorder %s43, 1
      %s1120 = scalar_select %p1119, %s43, 1
      %s1121 = smul.addr %s1120, 4
      %s1122 = smul.addr %s1121, 4
      %s1123 = scalar_lea.vmem %s7, %s1122
      %p1124 = scmp.lt.s32.totalorder %s43, 1
      %s1125 = scalar_select %p1124, %s43, 1
      %s1126 = scalar_lea.vmem %s8, %s1125
      %p1127 = scmp.lt.s32.totalorder %s43, 1
      %s1128 = scalar_select %p1127, %s43, 1
      %s1129 = scalar_lea.vmem %s9, %s1128
      %p1130 = scmp.lt.s32.totalorder %s43, 1
      %s1131 = scalar_select %p1130, %s43, 1
      %s1132 = scalar_lea.vmem %s10, %s1131
      %p1133 = scmp.lt.s32.totalorder %s43, 1
      %s1134 = scalar_select %p1133, %s43, 1
      %s1135 = smul.addr %s1134, 4
      %s1136 = smul.addr %s1135, 4
      %s1137 = scalar_lea.vmem %s11, %s1136
      %p1138 = scmp.lt.s32.totalorder %s43, 1
      %s1139 = scalar_select %p1138, %s43, 1
      %s1140 = scalar_lea.vmem %s12, %s1139
      %p1141 = scmp.lt.s32.totalorder %s43, 1
      %s1142 = scalar_select %p1141, %s43, 1
      %s1143 = smul.addr %s1142, 4
      %s1144 = smul.addr %s1143, 4
      %s1145 = scalar_lea.vmem %s13, %s1144
      %p1146 = scmp.lt.s32.totalorder %s43, 1
      %s1147 = scalar_select %p1146, %s43, 1
      %s1148 = scalar_lea.vmem %s14, %s1147
      %p1149 = scmp.lt.s32.totalorder %s43, 1
      %s1150 = scalar_select %p1149, %s43, 1
      %s1151 = smul.addr %s1150, 4
      %s1152 = smul.addr %s1151, 4
      %s1153 = scalar_lea.vmem %s15, %s1152
      %p1154 = scmp.lt.s32.totalorder %s43, 1
      %s1155 = scalar_select %p1154, %s43, 1
      %s1156 = scalar_lea.vmem %s16, %s1155
      %p1157 = scmp.lt.s32.totalorder %s43, 1
      %s1158 = scalar_select %p1157, %s43, 1
      %s1159 = scalar_lea.vmem %s17, %s1158
      %p1160 = scmp.lt.s32.totalorder %s43, 1
      %s1161 = scalar_select %p1160, %s43, 1
      %s1162 = scalar_lea.vmem %s18, %s1161
      %p1163 = scmp.lt.s32.totalorder %s43, 1
      %s1164 = scalar_select %p1163, %s43, 1
      %s1165 = smul.addr %s1164, 4
      %s1166 = smul.addr %s1165, 4
      %s1167 = scalar_lea.vmem %s19, %s1166
      %p1168 = scmp.lt.s32.totalorder %s43, 1
      %s1169 = scalar_select %p1168, %s43, 1
      %s1170 = scalar_lea.vmem %s20, %s1169
      %p1171 = scmp.lt.s32.totalorder %s43, 1
      %s1172 = scalar_select %p1171, %s43, 1
      %s1173 = smul.addr %s1172, 8
      %s1174 = smul.addr %s1173, 4
      %s1175 = scalar_lea.vmem %s21, %s1174
      %p1176 = scmp.lt.s32.totalorder %s43, 1
      %s1177 = scalar_select %p1176, %s43, 1
      %s1178 = scalar_lea.vmem %s22, %s1177
      %p1179 = scmp.lt.s32.totalorder %s42, 1
      %s1180 = scalar_select %p1179, %s42, 1
      %s1181 = smul.addr %s1180, 2
      %s1182 = smul.addr %s1181, 8
      %s1183 = scalar_lea.vmem %s27, %s1182
      %p1185 = scmp.eq.s32.totalorder %s43, 0
      // Predicated region
      $region129: #{_lambda_.1} parent=127 // pred_check
        %p1186 = pneg %p1185
      $region130: #{_lambda_.1} parent=127 // pred_check_branch
        %1188 = sbr.rel (%p1186) target = $region132
      $region131: #{_lambda_.1} parent=127 // pred_region
        %v1189 = vld [vmem:[%s1097] sm:$0xff]
        %v1190 = vld [vmem:[%s1097 + $0x8] sm:$0x1]
        %vm1191 = vcmask 261120
        %1192 = vst.msk [vmem:[#allocation2] sm:$0xff] %vm1191, %v1189
        %vm1193 = vcmask 253952
        %1194 = vst.msk [vmem:[#allocation2 + $0x8] sm:$0x1] %vm1193, %v1190
      $region132: #{_lambda_.1} parent=127 // pred_fallthru
        _
      %v1195 = vld [vmem:[#allocation2] sm:$0xff]
      %v1196 = vld [vmem:[#allocation2 + $0x8] sm:$0x1]
      %v1197 = vld [vmem:[%s1101] sm:$0xf]
      %v1198 = vld [vmem:[%s1104] sm:$0x1]
      %v1199 = vlaneseq
      %v1200 = vshrl.u32 %v1199, 7
      %v1201 = vadd.s32 %v1200, 8
      %v1202 = vlaneseq
      %v1203 = vand.u32 %v1202, 127
      %vm1204 = vcmp.gt.s32.totalorder %v1203, %v1200
      %vm1205 = vcmp.gt.s32.totalorder %v1203, %v1201
      %v1206 = vsel %vm1204, -1e+30, 0.0
      %v1207 = vsel %vm1205, -1e+30, 0.0
      %v1209 = vlaneseq
      %v1210 = vshrl.u32 %v1209, 7
      %v1211 = vsub.s32 0, %v1210
      %v1212 = vrot.slane %v1198, %v1211
      %v1214 = vadd.f32 %v1206, %v1212
      %v1215 = vadd.f32 %v1207, %v1212
      %v1216 = vld [vmem:[%s1107] sm:$0x1]
      %v1217 = vld [vmem:[%s1110] sm:$0x1]
      %vm1218 = vcmask 261120
      %v1219 = vsel %vm1218, %v1195, 0.0
      %1220 = vadd.xlane.f32.xlu0 %v1219
      %v1221 = vpop.xlane.xlu0 %1220
      %vm1222 = vcmask 253952
      %v1223 = vsel %vm1222, %v1196, 0.0
      %1224 = vadd.xlane.f32.xlu0 %v1223
      %v1225 = vpop.xlane.xlu0 %1224
      %v1226 = vrcp.pop 32.0
      %v1227 = vmul.f32 %v1221, %v1226
      %v1228 = vmul.f32 %v1225, %v1226
      %v1229 = vsub.f32 %v1195, %v1227
      %v1230 = vsub.f32 %v1196, %v1228
      %v1231 = vmul.f32 %v1229, %v1229
      %v1232 = vmul.f32 %v1230, %v1230
      %v1233 = vsel %vm1218, %v1231, 0.0
      %1234 = vadd.xlane.f32.xlu0 %v1233
      %v1235 = vpop.xlane.xlu0 %1234
      %v1236 = vsel %vm1222, %v1232, 0.0
      %1237 = vadd.xlane.f32.xlu0 %v1236
      %v1238 = vpop.xlane.xlu0 %1237
      %v1239 = vmul.f32 %v1235, %v1226
      %v1240 = vmul.f32 %v1238, %v1226
      %v1241 = vadd.f32 %v1239, 1e-05
      %v1242 = vadd.f32 %v1240, 1e-05
      %v1243 = vrsqrt.pop %v1241
      %v1244 = vrsqrt.pop %v1242
      %v1245 = vmul.f32 %v1229, %v1243
      %v1246 = vmul.f32 %v1230, %v1244
      %v1248 = vlaneseq
      %v1249 = vshrl.u32 %v1248, 7
      %v1250 = vsub.s32 0, %v1249
      %v1251 = vrot.slane %v1216, %v1250
      %v1253 = vmul.f32 %v1245, %v1251
      %v1254 = vmul.f32 %v1246, %v1251
      %v1256 = vlaneseq
      %v1257 = vshrl.u32 %v1256, 7
      %v1258 = vsub.s32 0, %v1257
      %v1259 = vrot.slane %v1217, %v1258
      %v1261 = vadd.f32 %v1253, %v1259
      %v1262 = vadd.f32 %v1254, %v1259
      %v1263 = vld [vmem:[%s1115] sm:$0xf]
      %v1264 = vld [vmem:[%s1115 + $0x4] sm:$0xf]
      %v1265 = vld [vmem:[%s1115 + $0x8] sm:$0xf]
      %v1266 = vld [vmem:[%s1115 + $0xc] sm:$0xf]
      %v1267 = vpack.c.bf16 %v1262, %v1261
      %v1268 = vld [vmem:[%s1118] sm:$0x1]
      %v1270 = vlaneseq
      %v1271 = vshrl.u32 %v1270, 7
      %v1272 = vsub.s32 0, %v1271
      %v1273 = vrot.slane %v1268, %v1272
      %v1279 = vunpack.c.l.b16 %v1263
      %v1280 = vunpack.c.l.b16 %v1264
      %v1281 = vunpack.c.l.b16 %v1265
      %v1282 = vunpack.c.l.b16 %v1266
      %v1283 = vpack.c.b16 %v1280, %v1279
      %v1284 = vpack.c.b16 %v1282, %v1281
      %v1288 = vsel %vm1218, %v1267, 0
      %1290 = vmatprep.subr.bf16.mxu0 0
      %1291 = vmatpush1.bf16.msra.mxu0 %v1283
      %1292 = vmatprep.subr.bf16.mxu0 0
      %1293 = vmatpush1.bf16.msra.mxu0 %v1284
      %1294 = vmatprep.subr.bf16.mxu0 0
      %1295 = vmatpush1.bf16.msra.mxu0 0
      %1296 = vmatprep.subr.bf16.mxu0 0
      %1297 = vmatpush1.bf16.msra.mxu0 0
      %1298 = vmatprep.subr.bf16.mxu0 0
      %1299 = vmatpush1.bf16.msra.mxu0 0
      %1300 = vmatprep.subr.bf16.mxu0 0
      %1301 = vmatpush1.bf16.msra.mxu0 0
      %1302 = vmatprep.subr.bf16.mxu0 0
      %1303 = vmatpush1.bf16.msra.mxu0 0
      %1304 = vmatprep.subr.bf16.mxu0 0
      %1305 = vmatpush1.bf16.msra.mxu0 0
      %1306 = vmatprep.subr.bf16.mxu0 0
      %1307 = vmatpush1.bf16.msra.mxu0 0
      %1308 = vmatprep.subr.bf16.mxu0 0
      %1309 = vmatpush1.bf16.msra.mxu0 0
      %1310 = vmatprep.subr.bf16.mxu0 0
      %1311 = vmatpush1.bf16.msra.mxu0 0
      %1312 = vmatprep.subr.bf16.mxu0 0
      %1313 = vmatpush1.bf16.msra.mxu0 0
      %1314 = vmatprep.subr.bf16.mxu0 0
      %1315 = vmatpush1.bf16.msra.mxu0 0
      %1316 = vmatprep.subr.bf16.mxu0 0
      %1317 = vmatpush1.bf16.msra.mxu0 0
      %1318 = vmatprep.subr.bf16.mxu0 0
      %1319 = vmatpush1.bf16.msra.mxu0 0
      %1320 = vmatprep.subr.bf16.mxu0 0
      %1321 = vmatpush1.bf16.msra.mxu0 0
      %1322 = vmatprep.mubr.bf16.mxu0 0
      %1323 = vmatmul.mubr.bf16.gmra.mrb[0].mxu0 %v1288
      %v1324 = vpop.f32.mrb[0].mxu0
      %v1325 = vadd.f32 %v1273, %v1324
      %v1326 = vpop.f32.mrb[0].mxu0
      %v1327 = vpop.f32.mrb[0].mxu0
      %v1328 = vadd.f32 %v1273, %v1327
      %v1329 = vpop.f32.mrb[0].mxu0
      %1330 = vdwg.mxu0
      %v1331 = vld [vmem:[%s1123] sm:$0xf]
      %v1332 = vld [vmem:[%s1123 + $0x4] sm:$0xf]
      %v1333 = vld [vmem:[%s1123 + $0x8] sm:$0xf]
      %v1334 = vld [vmem:[%s1123 + $0xc] sm:$0xf]
      %v1335 = vld [vmem:[%s1126] sm:$0x1]
      %v1337 = vlaneseq
      %v1338 = vshrl.u32 %v1337, 7
      %v1339 = vsub.s32 0, %v1338
      %v1340 = vrot.slane %v1335, %v1339
      %v1342 = vadd.f32 %v1340, 0.0
      %1345 = vrot.lane.b32.xlu0 %v1325, 96
      %v1346 = vpop.permute.xlu0 %1345
      %1347 = vrot.lane.b32.xlu0 %v1328, 96
      %v1348 = vpop.permute.xlu0 %1347
      %1351 = vxpose.xlu0.b32.start [1/16] %v1346, 128
      %1352 = vxpose.xlu0.b32.cont [2/16] %v1348, 128
      %1353 = vxpose.xlu0.b32.cont [3/16] 0.0, 128
      %1354 = vxpose.xlu0.b32.cont [4/16] 0.0, 128
      %1355 = vxpose.xlu0.b32.cont [5/16] 0.0, 128
      %1356 = vxpose.xlu0.b32.cont [6/16] 0.0, 128
      %1357 = vxpose.xlu0.b32.cont [7/16] 0.0, 128
      %1358 = vxpose.xlu0.b32.cont [8/16] 0.0, 128
      %1359 = vxpose.xlu0.b32.cont [9/16] 0.0, 128
      %1360 = vxpose.xlu0.b32.cont [10/16] 0.0, 128
      %1361 = vxpose.xlu0.b32.cont [11/16] 0.0, 128
      %1362 = vxpose.xlu0.b32.cont [12/16] 0.0, 128
      %1363 = vxpose.xlu0.b32.cont [13/16] 0.0, 128
      %1364 = vxpose.xlu0.b32.cont [14/16] 0.0, 128
      %1365 = vxpose.xlu0.b32.cont [15/16] 0.0, 128
      %1366 = vxpose.xlu0.b32.end [16/16] 0.0, 128
      %v1367 = vpop.trf.xlu0
      %v1368 = vpop.trf.xlu0
      %v1369 = vpop.trf.xlu0
      %v1370 = vpop.trf.xlu0
      %v1371 = vpop.trf.xlu0
      %v1372 = vpop.trf.xlu0
      %v1373 = vpop.trf.xlu0
      %v1374 = vpop.trf.xlu0
      %v1375 = vpop.trf.xlu0
      %v1376 = vpop.trf.xlu0
      %v1377 = vpop.trf.xlu0
      %v1378 = vpop.trf.xlu0
      %v1379 = vpop.trf.xlu0
      %v1380 = vpop.trf.xlu0
      %v1381 = vpop.trf.xlu0
      %v1382 = vpop.trf.xlu0
      %v1383 = vpack.c.bf16 %v1328, %v1325
      %v1384 = vpack.c.bf16 %v1367, %v1367
      %vm1385 = vcmask 64512
      %v1387 = vsel %vm1385, %v1383, 0
      %vm1389 = vcmask 1043456
      %v1391 = vsel %vm1389, %v1384, 0
      %1393 = vmatprep.subr.bf16.mxu0 0
      %1394 = vmatpush1.bf16.msra.mxu0 %v1391
      %1395 = vmatprep.subr.bf16.mxu0 0
      %1396 = vmatpush1.bf16.msra.mxu0 0
      %1397 = vmatprep.subr.bf16.mxu0 0
      %1398 = vmatpush1.bf16.msra.mxu0 0
      %1399 = vmatprep.subr.bf16.mxu0 0
      %1400 = vmatpush1.bf16.msra.mxu0 0
      %1401 = vmatprep.subr.bf16.mxu0 0
      %1402 = vmatpush1.bf16.msra.mxu0 0
      %1403 = vmatprep.subr.bf16.mxu0 0
      %1404 = vmatpush1.bf16.msra.mxu0 0
      %1405 = vmatprep.subr.bf16.mxu0 0
      %1406 = vmatpush1.bf16.msra.mxu0 0
      %1407 = vmatprep.subr.bf16.mxu0 0
      %1408 = vmatpush1.bf16.msra.mxu0 0
      %1409 = vmatprep.subr.bf16.mxu0 0
      %1410 = vmatpush1.bf16.msra.mxu0 0
      %1411 = vmatprep.subr.bf16.mxu0 0
      %1412 = vmatpush1.bf16.msra.mxu0 0
      %1413 = vmatprep.subr.bf16.mxu0 0
      %1414 = vmatpush1.bf16.msra.mxu0 0
      %1415 = vmatprep.subr.bf16.mxu0 0
      %1416 = vmatpush1.bf16.msra.mxu0 0
      %1417 = vmatprep.subr.bf16.mxu0 0
      %1418 = vmatpush1.bf16.msra.mxu0 0
      %1419 = vmatprep.subr.bf16.mxu0 0
      %1420 = vmatpush1.bf16.msra.mxu0 0
      %1421 = vmatprep.subr.bf16.mxu0 0
      %1422 = vmatpush1.bf16.msra.mxu0 0
      %1423 = vmatprep.subr.bf16.mxu0 0
      %1424 = vmatpush1.bf16.msra.mxu0 0
      %1425 = vmatprep.mubr.bf16.mxu0 0
      %1426 = vmatmul.mubr.bf16.gmra.mrb[0].mxu0 %v1387
      %v1427 = vpop.f32.mrb[0].mxu0
      %v1428 = vadd.f32 %v1214, %v1427
      %v1429 = vpop.f32.mrb[0].mxu0
      %v1430 = vpop.f32.mrb[0].mxu0
      %v1431 = vadd.f32 %v1215, %v1430
      %v1432 = vpop.f32.mrb[0].mxu0
      %1433 = vdwg.mxu0
      %vm1434 = vcmask 72704
      %v1435 = vsel %vm1434, %v1428, -inf
      %1436 = vmax.xlane.f32.xlu0 %v1435
      %v1437 = vpop.xlane.xlu0 %1436
      %vm1438 = vcmask 65536
      %v1439 = vsel %vm1438, %v1431, -inf
      %1440 = vmax.xlane.f32.xlu0 %v1439
      %v1441 = vpop.xlane.xlu0 %1440
      %v1442 = vsub.f32 %v1428, %v1437
      %v1443 = vsub.f32 %v1431, %v1441
      %v1444 = vmul.f32 %v1442, 1.442695
      %v1445 = vpow.pop %v1444
      %v1446 = vmul.f32 %v1443, 1.442695
      %v1447 = vpow.pop %v1446
      %v1448 = vsel %vm1434, %v1445, 0.0
      %1449 = vadd.xlane.f32.xlu0 %v1448
      %v1450 = vpop.xlane.xlu0 %1449
      %v1451 = vsel %vm1438, %v1447, 0.0
      %1452 = vadd.xlane.f32.xlu0 %v1451
      %v1453 = vpop.xlane.xlu0 %1452
      %v1454 = vrcp.pop %v1450
      %v1455 = vrcp.pop %v1453
      %v1456 = vmul.f32 %v1445, %v1454
      %v1457 = vmul.f32 %v1447, %v1455
      %v1458 = vpack.c.bf16 %v1457, %v1456
      %1460 = vrot.lane.b32.xlu0 %v1383, 64
      %v1461 = vpop.permute.xlu0 %1460
      %v1463 = vsel %vm1434, %v1458, 0
      %vm1465 = vcmask 1044480
      %v1466 = vsel %vm1389, 4294967295, 65535
      %v1467 = vsel %vm1465, %v1466, 0
      %v1469 = vand.u32 %v1461, %v1467
      %1471 = vmatprep.subr.bf16.mxu0 0
      %1472 = vmatpush1.bf16.msra.mxu0 %v1469
      %1473 = vmatprep.subr.bf16.mxu0 0
      %1474 = vmatpush1.bf16.msra.mxu0 0
      %1475 = vmatprep.subr.bf16.mxu0 0
      %1476 = vmatpush1.bf16.msra.mxu0 0
      %1477 = vmatprep.subr.bf16.mxu0 0
      %1478 = vmatpush1.bf16.msra.mxu0 0
      %1479 = vmatprep.subr.bf16.mxu0 0
      %1480 = vmatpush1.bf16.msra.mxu0 0
      %1481 = vmatprep.subr.bf16.mxu0 0
      %1482 = vmatpush1.bf16.msra.mxu0 0
      %1483 = vmatprep.subr.bf16.mxu0 0
      %1484 = vmatpush1.bf16.msra.mxu0 0
      %1485 = vmatprep.subr.bf16.mxu0 0
      %1486 = vmatpush1.bf16.msra.mxu0 0
      %1487 = vmatprep.subr.bf16.mxu0 0
      %1488 = vmatpush1.bf16.msra.mxu0 0
      %1489 = vmatprep.subr.bf16.mxu0 0
      %1490 = vmatpush1.bf16.msra.mxu0 0
      %1491 = vmatprep.subr.bf16.mxu0 0
      %1492 = vmatpush1.bf16.msra.mxu0 0
      %1493 = vmatprep.subr.bf16.mxu0 0
      %1494 = vmatpush1.bf16.msra.mxu0 0
      %1495 = vmatprep.subr.bf16.mxu0 0
      %1496 = vmatpush1.bf16.msra.mxu0 0
      %1497 = vmatprep.subr.bf16.mxu0 0
      %1498 = vmatpush1.bf16.msra.mxu0 0
      %1499 = vmatprep.subr.bf16.mxu0 0
      %1500 = vmatpush1.bf16.msra.mxu0 0
      %1501 = vmatprep.subr.bf16.mxu0 0
      %1502 = vmatpush1.bf16.msra.mxu0 0
      %1503 = vmatprep.mubr.bf16.mxu0 0
      %1504 = vmatmul.mubr.bf16.gmra.mrb[0].mxu0 %v1463
      %v1505 = vpop.f32.mrb[0].mxu0
      %v1506 = vadd.f32 0.0, %v1505
      %v1507 = vpop.f32.mrb[0].mxu0
      %v1508 = vpop.f32.mrb[0].mxu0
      %v1509 = vadd.f32 0.0, %v1508
      %v1510 = vpop.f32.mrb[0].mxu0
      %1511 = vdwg.mxu0
      %v1512 = vpack.c.bf16 %v1509, %v1506
      %v1514 = vsel %vm1385, %v1512, 0
      %v1517 = vsel %vm1389, %v1331, 0
      %1519 = vmatprep.subr.bf16.mxu0 0
      %1520 = vmatpush1.bf16.msra.mxu0 %v1517
      %1521 = vmatprep.subr.bf16.mxu0 0
      %1522 = vmatpush1.bf16.msra.mxu0 0
      %1523 = vmatprep.subr.bf16.mxu0 0
      %1524 = vmatpush1.bf16.msra.mxu0 0
      %1525 = vmatprep.subr.bf16.mxu0 0
      %1526 = vmatpush1.bf16.msra.mxu0 0
      %1527 = vmatprep.subr.bf16.mxu0 0
      %1528 = vmatpush1.bf16.msra.mxu0 0
      %1529 = vmatprep.subr.bf16.mxu0 0
      %1530 = vmatpush1.bf16.msra.mxu0 0
      %1531 = vmatprep.subr.bf16.mxu0 0
      %1532 = vmatpush1.bf16.msra.mxu0 0
      %1533 = vmatprep.subr.bf16.mxu0 0
      %1534 = vmatpush1.bf16.msra.mxu0 0
      %1535 = vmatprep.subr.bf16.mxu0 0
      %1536 = vmatpush1.bf16.msra.mxu0 0
      %1537 = vmatprep.subr.bf16.mxu0 0
      %1538 = vmatpush1.bf16.msra.mxu0 0
      %1539 = vmatprep.subr.bf16.mxu0 0
      %1540 = vmatpush1.bf16.msra.mxu0 0
      %1541 = vmatprep.subr.bf16.mxu0 0
      %1542 = vmatpush1.bf16.msra.mxu0 0
      %1543 = vmatprep.subr.bf16.mxu0 0
      %1544 = vmatpush1.bf16.msra.mxu0 0
      %1545 = vmatprep.subr.bf16.mxu0 0
      %1546 = vmatpush1.bf16.msra.mxu0 0
      %1547 = vmatprep.subr.bf16.mxu0 0
      %1548 = vmatpush1.bf16.msra.mxu0 0
      %1549 = vmatprep.subr.bf16.mxu0 0
      %1550 = vmatpush1.bf16.msra.mxu0 0
      %1551 = vmatprep.mubr.bf16.mxu0 0
      %1552 = vmatmul.mubr.bf16.gmra.mrb[0].mxu0 %v1514
      %v1553 = vpop.f32.mrb[0].mxu0
      %v1554 = vadd.f32 0.0, %v1553
      %v1555 = vpop.f32.mrb[0].mxu0
      %v1556 = vpop.f32.mrb[0].mxu0
      %v1557 = vadd.f32 0.0, %v1556
      %v1558 = vpop.f32.mrb[0].mxu0
      %1559 = vdwg.mxu0
      %v1560 = vadd.f32 %v1342, %v1554
      %v1561 = vadd.f32 %v1342, %v1557
      %1562 = vrot.lane.b32.xlu0 %v1325, 88
      %v1563 = vpop.permute.xlu0 %1562
      %1564 = vrot.lane.b32.xlu0 %v1328, 88
      %v1565 = vpop.permute.xlu0 %1564
      %1568 = vxpose.xlu0.b32.start [1/16] %v1563, 128
      %1569 = vxpose.xlu0.b32.cont [2/16] %v1565, 128
      %1570 = vxpose.xlu0.b32.cont [3/16] 0.0, 128
      %1571 = vxpose.xlu0.b32.cont [4/16] 0.0, 128
      %1572 = vxpose.xlu0.b32.cont [5/16] 0.0, 128
      %1573 = vxpose.xlu0.b32.cont [6/16] 0.0, 128
      %1574 = vxpose.xlu0.b32.cont [7/16] 0.0, 128
      %1575 = vxpose.xlu0.b32.cont [8/16] 0.0, 128
      %1576 = vxpose.xlu0.b32.cont [9/16] 0.0, 128
      %1577 = vxpose.xlu0.b32.cont [10/16] 0.0, 128
      %1578 = vxpose.xlu0.b32.cont [11/16] 0.0, 128
      %1579 = vxpose.xlu0.b32.cont [12/16] 0.0, 128
      %1580 = vxpose.xlu0.b32.cont [13/16] 0.0, 128
      %1581 = vxpose.xlu0.b32.cont [14/16] 0.0, 128
      %1582 = vxpose.xlu0.b32.cont [15/16] 0.0, 128
      %1583 = vxpose.xlu0.b32.end [16/16] 0.0, 128
      %v1584 = vpop.trf.xlu0
      %v1585 = vpop.trf.xlu0
      %v1586 = vpop.trf.xlu0
      %v1587 = vpop.trf.xlu0
      %v1588 = vpop.trf.xlu0
      %v1589 = vpop.trf.xlu0
      %v1590 = vpop.trf.xlu0
      %v1591 = vpop.trf.xlu0
      %v1592 = vpop.trf.xlu0
      %v1593 = vpop.trf.xlu0
      %v1594 = vpop.trf.xlu0
      %v1595 = vpop.trf.xlu0
      %v1596 = vpop.trf.xlu0
      %v1597 = vpop.trf.xlu0
      %v1598 = vpop.trf.xlu0
      %v1599 = vpop.trf.xlu0
      %v1600 = vpack.c.bf16 %v1584, %v1584
      %1601 = vrot.lane.b32.xlu0 %v1383, 120
      %v1602 = vpop.permute.xlu0 %1601
      %v1604 = vsel %vm1385, %v1602, 0
      %v1607 = vsel %vm1389, %v1600, 0
      %1609 = vmatprep.subr.bf16.mxu0 0
      %1610 = vmatpush1.bf16.msra.mxu0 %v1607
      %1611 = vmatprep.subr.bf16.mxu0 0
      %1612 = vmatpush1.bf16.msra.mxu0 0
      %1613 = vmatprep.subr.bf16.mxu0 0
      %1614 = vmatpush1.bf16.msra.mxu0 0
      %1615 = vmatprep.subr.bf16.mxu0 0
      %1616 = vmatpush1.bf16.msra.mxu0 0
      %1617 = vmatprep.subr.bf16.mxu0 0
      %1618 = vmatpush1.bf16.msra.mxu0 0
      %1619 = vmatprep.subr.bf16.mxu0 0
      %1620 = vmatpush1.bf16.msra.mxu0 0
      %1621 = vmatprep.subr.bf16.mxu0 0
      %1622 = vmatpush1.bf16.msra.mxu0 0
      %1623 = vmatprep.subr.bf16.mxu0 0
      %1624 = vmatpush1.bf16.msra.mxu0 0
      %1625 = vmatprep.subr.bf16.mxu0 0
      %1626 = vmatpush1.bf16.msra.mxu0 0
      %1627 = vmatprep.subr.bf16.mxu0 0
      %1628 = vmatpush1.bf16.msra.mxu0 0
      %1629 = vmatprep.subr.bf16.mxu0 0
      %1630 = vmatpush1.bf16.msra.mxu0 0
      %1631 = vmatprep.subr.bf16.mxu0 0
      %1632 = vmatpush1.bf16.msra.mxu0 0
      %1633 = vmatprep.subr.bf16.mxu0 0
      %1634 = vmatpush1.bf16.msra.mxu0 0
      %1635 = vmatprep.subr.bf16.mxu0 0
      %1636 = vmatpush1.bf16.msra.mxu0 0
      %1637 = vmatprep.subr.bf16.mxu0 0
      %1638 = vmatpush1.bf16.msra.mxu0 0
      %1639 = vmatprep.subr.bf16.mxu0 0
      %1640 = vmatpush1.bf16.msra.mxu0 0
      %1641 = vmatprep.mubr.bf16.mxu0 0
      %1642 = vmatmul.mubr.bf16.gmra.mrb[0].mxu0 %v1604
      %v1643 = vpop.f32.mrb[0].mxu0
      %v1644 = vadd.f32 %v1214, %v1643
      %v1645 = vpop.f32.mrb[0].mxu0
      %v1646 = vpop.f32.mrb[0].mxu0
      %v1647 = vadd.f32 %v1215, %v1646
      %v1648 = vpop.f32.mrb[0].mxu0
      %1649 = vdwg.mxu0
      %v1650 = vsel %vm1434, %v1644, -inf
      %1651 = vmax.xlane.f32.xlu0 %v1650
      %v1652 = vpop.xlane.xlu0 %1651
      %v1653 = vsel %vm1438, %v1647, -inf
      %1654 = vmax.xlane.f32.xlu0 %v1653
      %v1655 = vpop.xlane.xlu0 %1654
      %v1656 = vsub.f32 %v1644, %v1652
      %v1657 = vsub.f32 %v1647, %v1655
      %v1658 = vmul.f32 %v1656, 1.442695
      %v1659 = vpow.pop %v1658
      %v1660 = vmul.f32 %v1657, 1.442695
      %v1661 = vpow.pop %v1660
      %v1662 = vsel %vm1434, %v1659, 0.0
      %1663 = vadd.xlane.f32.xlu0 %v1662
      %v1664 = vpop.xlane.xlu0 %1663
      %v1665 = vsel %vm1438, %v1661, 0.0
      %1666 = vadd.xlane.f32.xlu0 %v1665
      %v1667 = vpop.xlane.xlu0 %1666
      %v1668 = vrcp.pop %v1664
      %v1669 = vrcp.pop %v1667
      %v1670 = vmul.f32 %v1659, %v1668
      %v1671 = vmul.f32 %v1661, %v1669
      %v1672 = vpack.c.bf16 %v1671, %v1670
      %1673 = vrot.lane.b32.xlu0 %v1383, 56
      %v1674 = vpop.permute.xlu0 %1673
      %v1676 = vsel %vm1434, %v1672, 0
      %v1679 = vand.u32 %v1674, %v1467
      %1681 = vmatprep.subr.bf16.mxu0 0
      %1682 = vmatpush1.bf16.msra.mxu0 %v1679
      %1683 = vmatprep.subr.bf16.mxu0 0
      %1684 = vmatpush1.bf16.msra.mxu0 0
      %1685 = vmatprep.subr.bf16.mxu0 0
      %1686 = vmatpush1.bf16.msra.mxu0 0
      %1687 = vmatprep.subr.bf16.mxu0 0
      %1688 = vmatpush1.bf16.msra.mxu0 0
      %1689 = vmatprep.subr.bf16.mxu0 0
      %1690 = vmatpush1.bf16.msra.mxu0 0
      %1691 = vmatprep.subr.bf16.mxu0 0
      %1692 = vmatpush1.bf16.msra.mxu0 0
      %1693 = vmatprep.subr.bf16.mxu0 0
      %1694 = vmatpush1.bf16.msra.mxu0 0
      %1695 = vmatprep.subr.bf16.mxu0 0
      %1696 = vmatpush1.bf16.msra.mxu0 0
      %1697 = vmatprep.subr.bf16.mxu0 0
      %1698 = vmatpush1.bf16.msra.mxu0 0
      %1699 = vmatprep.subr.bf16.mxu0 0
      %1700 = vmatpush1.bf16.msra.mxu0 0
      %1701 = vmatprep.subr.bf16.mxu0 0
      %1702 = vmatpush1.bf16.msra.mxu0 0
      %1703 = vmatprep.subr.bf16.mxu0 0
      %1704 = vmatpush1.bf16.msra.mxu0 0
      %1705 = vmatprep.subr.bf16.mxu0 0
      %1706 = vmatpush1.bf16.msra.mxu0 0
      %1707 = vmatprep.subr.bf16.mxu0 0
      %1708 = vmatpush1.bf16.msra.mxu0 0
      %1709 = vmatprep.subr.bf16.mxu0 0
      %1710 = vmatpush1.bf16.msra.mxu0 0
      %1711 = vmatprep.subr.bf16.mxu0 0
      %1712 = vmatpush1.bf16.msra.mxu0 0
      %1713 = vmatprep.mubr.bf16.mxu0 0
      %1714 = vmatmul.mubr.bf16.gmra.mrb[0].mxu0 %v1676
      %v1715 = vpop.f32.mrb[0].mxu0
      %v1716 = vadd.f32 0.0, %v1715
      %v1717 = vpop.f32.mrb[0].mxu0
      %v1718 = vpop.f32.mrb[0].mxu0
      %v1719 = vadd.f32 0.0, %v1718
      %v1720 = vpop.f32.mrb[0].mxu0
      %1721 = vdwg.mxu0
      %v1722 = vpack.c.bf16 %v1719, %v1716
      %v1724 = vsel %vm1385, %v1722, 0
      %v1727 = vsel %vm1389, %v1332, 0
      %1729 = vmatprep.subr.bf16.mxu0 0
      %1730 = vmatpush1.bf16.msra.mxu0 %v1727
      %1731 = vmatprep.subr.bf16.mxu0 0
      %1732 = vmatpush1.bf16.msra.mxu0 0
      %1733 = vmatprep.subr.bf16.mxu0 0
      %1734 = vmatpush1.bf16.msra.mxu0 0
      %1735 = vmatprep.subr.bf16.mxu0 0
      %1736 = vmatpush1.bf16.msra.mxu0 0
      %1737 = vmatprep.subr.bf16.mxu0 0
      %1738 = vmatpush1.bf16.msra.mxu0 0
      %1739 = vmatprep.subr.bf16.mxu0 0
      %1740 = vmatpush1.bf16.msra.mxu0 0
      %1741 = vmatprep.subr.bf16.mxu0 0
      %1742 = vmatpush1.bf16.msra.mxu0 0
      %1743 = vmatprep.subr.bf16.mxu0 0
      %1744 = vmatpush1.bf16.msra.mxu0 0
      %1745 = vmatprep.subr.bf16.mxu0 0
      %1746 = vmatpush1.bf16.msra.mxu0 0
      %1747 = vmatprep.subr.bf16.mxu0 0
      %1748 = vmatpush1.bf16.msra.mxu0 0
      %1749 = vmatprep.subr.bf16.mxu0 0
      %1750 = vmatpush1.bf16.msra.mxu0 0
      %1751 = vmatprep.subr.bf16.mxu0 0
      %1752 = vmatpush1.bf16.msra.mxu0 0
      %1753 = vmatprep.subr.bf16.mxu0 0
      %1754 = vmatpush1.bf16.msra.mxu0 0
      %1755 = vmatprep.subr.bf16.mxu0 0
      %1756 = vmatpush1.bf16.msra.mxu0 0
      %1757 = vmatprep.subr.bf16.mxu0 0
      %1758 = vmatpush1.bf16.msra.mxu0 0
      %1759 = vmatprep.subr.bf16.mxu0 0
      %1760 = vmatpush1.bf16.msra.mxu0 0
      %1761 = vmatprep.mubr.bf16.mxu0 0
      %1762 = vmatmul.mubr.bf16.gmra.mrb[0].mxu0 %v1724
      %v1763 = vpop.f32.mrb[0].mxu0
      %v1764 = vadd.f32 0.0, %v1763
      %v1765 = vpop.f32.mrb[0].mxu0
      %v1766 = vpop.f32.mrb[0].mxu0
      %v1767 = vadd.f32 0.0, %v1766
      %v1768 = vpop.f32.mrb[0].mxu0
      %1769 = vdwg.mxu0
      %v1770 = vadd.f32 %v1560, %v1764
      %v1771 = vadd.f32 %v1561, %v1767
      %1772 = vrot.lane.b32.xlu0 %v1325, 80
      %v1773 = vpop.permute.xlu0 %1772
      %1774 = vrot.lane.b32.xlu0 %v1328, 80
      %v1775 = vpop.permute.xlu0 %1774
      %1778 = vxpose.xlu0.b32.start [1/16] %v1773, 128
      %1779 = vxpose.xlu0.b32.cont [2/16] %v1775, 128
      %1780 = vxpose.xlu0.b32.cont [3/16] 0.0, 128
      %1781 = vxpose.xlu0.b32.cont [4/16] 0.0, 128
      %1782 = vxpose.xlu0.b32.cont [5/16] 0.0, 128
      %1783 = vxpose.xlu0.b32.cont [6/16] 0.0, 128
      %1784 = vxpose.xlu0.b32.cont [7/16] 0.0, 128
      %1785 = vxpose.xlu0.b32.cont [8/16] 0.0, 128
      %1786 = vxpose.xlu0.b32.cont [9/16] 0.0, 128
      %1787 = vxpose.xlu0.b32.cont [10/16] 0.0, 128
      %1788 = vxpose.xlu0.b32.cont [11/16] 0.0, 128
      %1789 = vxpose.xlu0.b32.cont [12/16] 0.0, 128
      %1790 = vxpose.xlu0.b32.cont [13/16] 0.0, 128
      %1791 = vxpose.xlu0.b32.cont [14/16] 0.0, 128
      %1792 = vxpose.xlu0.b32.cont [15/16] 0.0, 128
      %1793 = vxpose.xlu0.b32.end [16/16] 0.0, 128
      %v1794 = vpop.trf.xlu0
      %v1795 = vpop.trf.xlu0
      %v1796 = vpop.trf.xlu0
      %v1797 = vpop.trf.xlu0
      %v1798 = vpop.trf.xlu0
      %v1799 = vpop.trf.xlu0
      %v1800 = vpop.trf.xlu0
      %v1801 = vpop.trf.xlu0
      %v1802 = vpop.trf.xlu0
      %v1803 = vpop.trf.xlu0
      %v1804 = vpop.trf.xlu0
      %v1805 = vpop.trf.xlu0
      %v1806 = vpop.trf.xlu0
      %v1807 = vpop.trf.xlu0
      %v1808 = vpop.trf.xlu0
      %v1809 = vpop.trf.xlu0
      %v1810 = vpack.c.bf16 %v1794, %v1794
      %1811 = vrot.lane.b32.xlu0 %v1383, 112
      %v1812 = vpop.permute.xlu0 %1811
      %v1814 = vsel %vm1385, %v1812, 0
      %v1817 = vsel %vm1389, %v1810, 0
      %1819 = vmatprep.subr.bf16.mxu0 0
      %1820 = vmatpush1.bf16.msra.mxu0 %v1817
      %1821 = vmatprep.subr.bf16.mxu0 0
      %1822 = vmatpush1.bf16.msra.mxu0 0
      %1823 = vmatprep.subr.bf16.mxu0 0
      %1824 = vmatpush1.bf16.msra.mxu0 0
      %1825 = vmatprep.subr.bf16.mxu0 0
      %1826 = vmatpush1.bf16.msra.mxu0 0
      %1827 = vmatprep.subr.bf16.mxu0 0
      %1828 = vmatpush1.bf16.msra.mxu0 0
      %1829 = vmatprep.subr.bf16.mxu0 0
      %1830 = vmatpush1.bf16.msra.mxu0 0
      %1831 = vmatprep.subr.bf16.mxu0 0
      %1832 = vmatpush1.bf16.msra.mxu0 0
      %1833 = vmatprep.subr.bf16.mxu0 0
      %1834 = vmatpush1.bf16.msra.mxu0 0
      %1835 = vmatprep.subr.bf16.mxu0 0
      %1836 = vmatpush1.bf16.msra.mxu0 0
      %1837 = vmatprep.subr.bf16.mxu0 0
      %1838 = vmatpush1.bf16.msra.mxu0 0
      %1839 = vmatprep.subr.bf16.mxu0 0
      %1840 = vmatpush1.bf16.msra.mxu0 0
      %1841 = vmatprep.subr.bf16.mxu0 0
      %1842 = vmatpush1.bf16.msra.mxu0 0
      %1843 = vmatprep.subr.bf16.mxu0 0
      %1844 = vmatpush1.bf16.msra.mxu0 0
      %1845 = vmatprep.subr.bf16.mxu0 0
      %1846 = vmatpush1.bf16.msra.mxu0 0
      %1847 = vmatprep.subr.bf16.mxu0 0
      %1848 = vmatpush1.bf16.msra.mxu0 0
      %1849 = vmatprep.subr.bf16.mxu0 0
      %1850 = vmatpush1.bf16.msra.mxu0 0
      %1851 = vmatprep.mubr.bf16.mxu0 0
      %1852 = vmatmul.mubr.bf16.gmra.mrb[0].mxu0 %v1814
      %v1853 = vpop.f32.mrb[0].mxu0
      %v1854 = vadd.f32 %v1214, %v1853
      %v1855 = vpop.f32.mrb[0].mxu0
      %v1856 = vpop.f32.mrb[0].mxu0
      %v1857 = vadd.f32 %v1215, %v1856
      %v1858 = vpop.f32.mrb[0].mxu0
      %1859 = vdwg.mxu0
      %v1860 = vsel %vm1434, %v1854, -inf
      %1861 = vmax.xlane.f32.xlu0 %v1860
      %v1862 = vpop.xlane.xlu0 %1861
      %v1863 = vsel %vm1438, %v1857, -inf
      %1864 = vmax.xlane.f32.xlu0 %v1863
      %v1865 = vpop.xlane.xlu0 %1864
      %v1866 = vsub.f32 %v1854, %v1862
      %v1867 = vsub.f32 %v1857, %v1865
      %v1868 = vmul.f32 %v1866, 1.442695
      %v1869 = vpow.pop %v1868
      %v1870 = vmul.f32 %v1867, 1.442695
      %v1871 = vpow.pop %v1870
      %v1872 = vsel %vm1434, %v1869, 0.0
      %1873 = vadd.xlane.f32.xlu0 %v1872
      %v1874 = vpop.xlane.xlu0 %1873
      %v1875 = vsel %vm1438, %v1871, 0.0
      %1876 = vadd.xlane.f32.xlu0 %v1875
      %v1877 = vpop.xlane.xlu0 %1876
      %v1878 = vrcp.pop %v1874
      %v1879 = vrcp.pop %v1877
      %v1880 = vmul.f32 %v1869, %v1878
      %v1881 = vmul.f32 %v1871, %v1879
      %v1882 = vpack.c.bf16 %v1881, %v1880
      %1883 = vrot.lane.b32.xlu0 %v1383, 48
      %v1884 = vpop.permute.xlu0 %1883
      %v1886 = vsel %vm1434, %v1882, 0
      %v1889 = vand.u32 %v1884, %v1467
      %1891 = vmatprep.subr.bf16.mxu0 0
      %1892 = vmatpush1.bf16.msra.mxu0 %v1889
      %1893 = vmatprep.subr.bf16.mxu0 0
      %1894 = vmatpush1.bf16.msra.mxu0 0
      %1895 = vmatprep.subr.bf16.mxu0 0
      %1896 = vmatpush1.bf16.msra.mxu0 0
      %1897 = vmatprep.subr.bf16.mxu0 0
      %1898 = vmatpush1.bf16.msra.mxu0 0
      %1899 = vmatprep.subr.bf16.mxu0 0
      %1900 = vmatpush1.bf16.msra.mxu0 0
      %1901 = vmatprep.subr.bf16.mxu0 0
      %1902 = vmatpush1.bf16.msra.mxu0 0
      %1903 = vmatprep.subr.bf16.mxu0 0
      %1904 = vmatpush1.bf16.msra.mxu0 0
      %1905 = vmatprep.subr.bf16.mxu0 0
      %1906 = vmatpush1.bf16.msra.mxu0 0
      %1907 = vmatprep.subr.bf16.mxu0 0
      %1908 = vmatpush1.bf16.msra.mxu0 0
      %1909 = vmatprep.subr.bf16.mxu0 0
      %1910 = vmatpush1.bf16.msra.mxu0 0
      %1911 = vmatprep.subr.bf16.mxu0 0
      %1912 = vmatpush1.bf16.msra.mxu0 0
      %1913 = vmatprep.subr.bf16.mxu0 0
      %1914 = vmatpush1.bf16.msra.mxu0 0
      %1915 = vmatprep.subr.bf16.mxu0 0
      %1916 = vmatpush1.bf16.msra.mxu0 0
      %1917 = vmatprep.subr.bf16.mxu0 0
      %1918 = vmatpush1.bf16.msra.mxu0 0
      %1919 = vmatprep.subr.bf16.mxu0 0
      %1920 = vmatpush1.bf16.msra.mxu0 0
      %1921 = vmatprep.subr.bf16.mxu0 0
      %1922 = vmatpush1.bf16.msra.mxu0 0
      %1923 = vmatprep.mubr.bf16.mxu0 0
      %1924 = vmatmul.mubr.bf16.gmra.mrb[0].mxu0 %v1886
      %v1925 = vpop.f32.mrb[0].mxu0
      %v1926 = vadd.f32 0.0, %v1925
      %v1927 = vpop.f32.mrb[0].mxu0
      %v1928 = vpop.f32.mrb[0].mxu0
      %v1929 = vadd.f32 0.0, %v1928
      %v1930 = vpop.f32.mrb[0].mxu0
      %1931 = vdwg.mxu0
      %v1932 = vpack.c.bf16 %v1929, %v1926
      %v1934 = vsel %vm1385, %v1932, 0
      %v1937 = vsel %vm1389, %v1333, 0
      %1939 = vmatprep.subr.bf16.mxu0 0
      %1940 = vmatpush1.bf16.msra.mxu0 %v1937
      %1941 = vmatprep.subr.bf16.mxu0 0
      %1942 = vmatpush1.bf16.msra.mxu0 0
      %1943 = vmatprep.subr.bf16.mxu0 0
      %1944 = vmatpush1.bf16.msra.mxu0 0
      %1945 = vmatprep.subr.bf16.mxu0 0
      %1946 = vmatpush1.bf16.msra.mxu0 0
      %1947 = vmatprep.subr.bf16.mxu0 0
      %1948 = vmatpush1.bf16.msra.mxu0 0
      %1949 = vmatprep.subr.bf16.mxu0 0
      %1950 = vmatpush1.bf16.msra.mxu0 0
      %1951 = vmatprep.subr.bf16.mxu0 0
      %1952 = vmatpush1.bf16.msra.mxu0 0
      %1953 = vmatprep.subr.bf16.mxu0 0
      %1954 = vmatpush1.bf16.msra.mxu0 0
      %1955 = vmatprep.subr.bf16.mxu0 0
      %1956 = vmatpush1.bf16.msra.mxu0 0
      %1957 = vmatprep.subr.bf16.mxu0 0
      %1958 = vmatpush1.bf16.msra.mxu0 0
      %1959 = vmatprep.subr.bf16.mxu0 0
      %1960 = vmatpush1.bf16.msra.mxu0 0
      %1961 = vmatprep.subr.bf16.mxu0 0
      %1962 = vmatpush1.bf16.msra.mxu0 0
      %1963 = vmatprep.subr.bf16.mxu0 0
      %1964 = vmatpush1.bf16.msra.mxu0 0
      %1965 = vmatprep.subr.bf16.mxu0 0
      %1966 = vmatpush1.bf16.msra.mxu0 0
      %1967 = vmatprep.subr.bf16.mxu0 0
      %1968 = vmatpush1.bf16.msra.mxu0 0
      %1969 = vmatprep.subr.bf16.mxu0 0
      %1970 = vmatpush1.bf16.msra.mxu0 0
      %1971 = vmatprep.mubr.bf16.mxu0 0
      %1972 = vmatmul.mubr.bf16.gmra.mrb[0].mxu0 %v1934
      %v1973 = vpop.f32.mrb[0].mxu0
      %v1974 = vadd.f32 0.0, %v1973
      %v1975 = vpop.f32.mrb[0].mxu0
      %v1976 = vpop.f32.mrb[0].mxu0
      %v1977 = vadd.f32 0.0, %v1976
      %v1978 = vpop.f32.mrb[0].mxu0
      %1979 = vdwg.mxu0
      %v1980 = vadd.f32 %v1770, %v1974
      %v1981 = vadd.f32 %v1771, %v1977
      %1982 = vrot.lane.b32.xlu0 %v1325, 72
      %v1983 = vpop.permute.xlu0 %1982
      %1984 = vrot.lane.b32.xlu0 %v1328, 72
      %v1985 = vpop.permute.xlu0 %1984
      %1988 = vxpose.xlu0.b32.start [1/16] %v1983, 128
      %1989 = vxpose.xlu0.b32.cont [2/16] %v1985, 128
      %1990 = vxpose.xlu0.b32.cont [3/16] 0.0, 128
      %1991 = vxpose.xlu0.b32.cont [4/16] 0.0, 128
      %1992 = vxpose.xlu0.b32.cont [5/16] 0.0, 128
      %1993 = vxpose.xlu0.b32.cont [6/16] 0.0, 128
      %1994 = vxpose.xlu0.b32.cont [7/16] 0.0, 128
      %1995 = vxpose.xlu0.b32.cont [8/16] 0.0, 128
      %1996 = vxpose.xlu0.b32.cont [9/16] 0.0, 128
      %1997 = vxpose.xlu0.b32.cont [10/16] 0.0, 128
      %1998 = vxpose.xlu0.b32.cont [11/16] 0.0, 128
      %1999 = vxpose.xlu0.b32.cont [12/16] 0.0, 128
      %2000 = vxpose.xlu0.b32.cont [13/16] 0.0, 128
      %2001 = vxpose.xlu0.b32.cont [14/16] 0.0, 128
      %2002 = vxpose.xlu0.b32.cont [15/16] 0.0, 128
      %2003 = vxpose.xlu0.b32.end [16/16] 0.0, 128
      %v2004 = vpop.trf.xlu0
      %v2005 = vpop.trf.xlu0
      %v2006 = vpop.trf.xlu0
      %v2007 = vpop.trf.xlu0
      %v2008 = vpop.trf.xlu0
      %v2009 = vpop.trf.xlu0
      %v2010 = vpop.trf.xlu0
      %v2011 = vpop.trf.xlu0
      %v2012 = vpop.trf.xlu0
      %v2013 = vpop.trf.xlu0
      %v2014 = vpop.trf.xlu0
      %v2015 = vpop.trf.xlu0
      %v2016 = vpop.trf.xlu0
      %v2017 = vpop.trf.xlu0
      %v2018 = vpop.trf.xlu0
      %v2019 = vpop.trf.xlu0
      %v2020 = vpack.c.bf16 %v2004, %v2004
      %2021 = vrot.lane.b32.xlu0 %v1383, 104
      %v2022 = vpop.permute.xlu0 %2021
      %v2024 = vsel %vm1385, %v2022, 0
      %v2027 = vsel %vm1389, %v2020, 0
      %2029 = vmatprep.subr.bf16.mxu0 0
      %2030 = vmatpush1.bf16.msra.mxu0 %v2027
      %2031 = vmatprep.subr.bf16.mxu0 0
      %2032 = vmatpush1.bf16.msra.mxu0 0
      %2033 = vmatprep.subr.bf16.mxu0 0
      %2034 = vmatpush1.bf16.msra.mxu0 0
      %2035 = vmatprep.subr.bf16.mxu0 0
      %2036 = vmatpush1.bf16.msra.mxu0 0
      %2037 = vmatprep.subr.bf16.mxu0 0
      %2038 = vmatpush1.bf16.msra.mxu0 0
      %2039 = vmatprep.subr.bf16.mxu0 0
      %2040 = vmatpush1.bf16.msra.mxu0 0
      %2041 = vmatprep.subr.bf16.mxu0 0
      %2042 = vmatpush1.bf16.msra.mxu0 0
      %2043 = vmatprep.subr.bf16.mxu0 0
      %2044 = vmatpush1.bf16.msra.mxu0 0
      %2045 = vmatprep.subr.bf16.mxu0 0
      %2046 = vmatpush1.bf16.msra.mxu0 0
      %2047 = vmatprep.subr.bf16.mxu0 0
      %2048 = vmatpush1.bf16.msra.mxu0 0
      %2049 = vmatprep.subr.bf16.mxu0 0
      %2050 = vmatpush1.bf16.msra.mxu0 0
      %2051 = vmatprep.subr.bf16.mxu0 0
      %2052 = vmatpush1.bf16.msra.mxu0 0
      %2053 = vmatprep.subr.bf16.mxu0 0
      %2054 = vmatpush1.bf16.msra.mxu0 0
      %2055 = vmatprep.subr.bf16.mxu0 0
      %2056 = vmatpush1.bf16.msra.mxu0 0
      %2057 = vmatprep.subr.bf16.mxu0 0
      %2058 = vmatpush1.bf16.msra.mxu0 0
      %2059 = vmatprep.subr.bf16.mxu0 0
      %2060 = vmatpush1.bf16.msra.mxu0 0
      %2061 = vmatprep.mubr.bf16.mxu0 0
      %2062 = vmatmul.mubr.bf16.gmra.mrb[0].mxu0 %v2024
      %v2063 = vpop.f32.mrb[0].mxu0
      %v2064 = vadd.f32 %v1214, %v2063
      %v2065 = vpop.f32.mrb[0].mxu0
      %v2066 = vpop.f32.mrb[0].mxu0
      %v2067 = vadd.f32 %v1215, %v2066
      %v2068 = vpop.f32.mrb[0].mxu0
      %2069 = vdwg.mxu0
      %v2070 = vsel %vm1434, %v2064, -inf
      %2071 = vmax.xlane.f32.xlu0 %v2070
      %v2072 = vpop.xlane.xlu0 %2071
      %v2073 = vsel %vm1438, %v2067, -inf
      %2074 = vmax.xlane.f32.xlu0 %v2073
      %v2075 = vpop.xlane.xlu0 %2074
      %v2076 = vsub.f32 %v2064, %v2072
      %v2077 = vsub.f32 %v2067, %v2075
      %v2078 = vmul.f32 %v2076, 1.442695
      %v2079 = vpow.pop %v2078
      %v2080 = vmul.f32 %v2077, 1.442695
      %v2081 = vpow.pop %v2080
      %v2082 = vsel %vm1434, %v2079, 0.0
      %2083 = vadd.xlane.f32.xlu0 %v2082
      %v2084 = vpop.xlane.xlu0 %2083
      %v2085 = vsel %vm1438, %v2081, 0.0
      %2086 = vadd.xlane.f32.xlu0 %v2085
      %v2087 = vpop.xlane.xlu0 %2086
      %v2088 = vrcp.pop %v2084
      %v2089 = vrcp.pop %v2087
      %v2090 = vmul.f32 %v2079, %v2088
      %v2091 = vmul.f32 %v2081, %v2089
      %v2092 = vpack.c.bf16 %v2091, %v2090
      %2093 = vrot.lane.b32.xlu0 %v1383, 40
      %v2094 = vpop.permute.xlu0 %2093
      %v2096 = vsel %vm1434, %v2092, 0
      %v2099 = vand.u32 %v2094, %v1467
      %2101 = vmatprep.subr.bf16.mxu0 0
      %2102 = vmatpush1.bf16.msra.mxu0 %v2099
      %2103 = vmatprep.subr.bf16.mxu0 0
      %2104 = vmatpush1.bf16.msra.mxu0 0
      %2105 = vmatprep.subr.bf16.mxu0 0
      %2106 = vmatpush1.bf16.msra.mxu0 0
      %2107 = vmatprep.subr.bf16.mxu0 0
      %2108 = vmatpush1.bf16.msra.mxu0 0
      %2109 = vmatprep.subr.bf16.mxu0 0
      %2110 = vmatpush1.bf16.msra.mxu0 0
      %2111 = vmatprep.subr.bf16.mxu0 0
      %2112 = vmatpush1.bf16.msra.mxu0 0
      %2113 = vmatprep.subr.bf16.mxu0 0
      %2114 = vmatpush1.bf16.msra.mxu0 0
      %2115 = vmatprep.subr.bf16.mxu0 0
      %2116 = vmatpush1.bf16.msra.mxu0 0
      %2117 = vmatprep.subr.bf16.mxu0 0
      %2118 = vmatpush1.bf16.msra.mxu0 0
      %2119 = vmatprep.subr.bf16.mxu0 0
      %2120 = vmatpush1.bf16.msra.mxu0 0
      %2121 = vmatprep.subr.bf16.mxu0 0
      %2122 = vmatpush1.bf16.msra.mxu0 0
      %2123 = vmatprep.subr.bf16.mxu0 0
      %2124 = vmatpush1.bf16.msra.mxu0 0
      %2125 = vmatprep.subr.bf16.mxu0 0
      %2126 = vmatpush1.bf16.msra.mxu0 0
      %2127 = vmatprep.subr.bf16.mxu0 0
      %2128 = vmatpush1.bf16.msra.mxu0 0
      %2129 = vmatprep.subr.bf16.mxu0 0
      %2130 = vmatpush1.bf16.msra.mxu0 0
      %2131 = vmatprep.subr.bf16.mxu0 0
      %2132 = vmatpush1.bf16.msra.mxu0 0
      %2133 = vmatprep.mubr.bf16.mxu0 0
      %2134 = vmatmul.mubr.bf16.gmra.mrb[0].mxu0 %v2096
      %v2135 = vpop.f32.mrb[0].mxu0
      %v2136 = vadd.f32 0.0, %v2135
      %v2137 = vpop.f32.mrb[0].mxu0
      %v2138 = vpop.f32.mrb[0].mxu0
      %v2139 = vadd.f32 0.0, %v2138
      %v2140 = vpop.f32.mrb[0].mxu0
      %2141 = vdwg.mxu0
      %v2142 = vpack.c.bf16 %v2139, %v2136
      %v2144 = vsel %vm1385, %v2142, 0
      %v2147 = vsel %vm1389, %v1334, 0
      %2149 = vmatprep.subr.bf16.mxu0 0
      %2150 = vmatpush1.bf16.msra.mxu0 %v2147
      %2151 = vmatprep.subr.bf16.mxu0 0
      %2152 = vmatpush1.bf16.msra.mxu0 0
      %2153 = vmatprep.subr.bf16.mxu0 0
      %2154 = vmatpush1.bf16.msra.mxu0 0
      %2155 = vmatprep.subr.bf16.mxu0 0
      %2156 = vmatpush1.bf16.msra.mxu0 0
      %2157 = vmatprep.subr.bf16.mxu0 0
      %2158 = vmatpush1.bf16.msra.mxu0 0
      %2159 = vmatprep.subr.bf16.mxu0 0
      %2160 = vmatpush1.bf16.msra.mxu0 0
      %2161 = vmatprep.subr.bf16.mxu0 0
      %2162 = vmatpush1.bf16.msra.mxu0 0
      %2163 = vmatprep.subr.bf16.mxu0 0
      %2164 = vmatpush1.bf16.msra.mxu0 0
      %2165 = vmatprep.subr.bf16.mxu0 0
      %2166 = vmatpush1.bf16.msra.mxu0 0
      %2167 = vmatprep.subr.bf16.mxu0 0
      %2168 = vmatpush1.bf16.msra.mxu0 0
      %2169 = vmatprep.subr.bf16.mxu0 0
      %2170 = vmatpush1.bf16.msra.mxu0 0
      %2171 = vmatprep.subr.bf16.mxu0 0
      %2172 = vmatpush1.bf16.msra.mxu0 0
      %2173 = vmatprep.subr.bf16.mxu0 0
      %2174 = vmatpush1.bf16.msra.mxu0 0
      %2175 = vmatprep.subr.bf16.mxu0 0
      %2176 = vmatpush1.bf16.msra.mxu0 0
      %2177 = vmatprep.subr.bf16.mxu0 0
      %2178 = vmatpush1.bf16.msra.mxu0 0
      %2179 = vmatprep.subr.bf16.mxu0 0
      %2180 = vmatpush1.bf16.msra.mxu0 0
      %2181 = vmatprep.mubr.bf16.mxu0 0
      %2182 = vmatmul.mubr.bf16.gmra.mrb[0].mxu0 %v2144
      %v2183 = vpop.f32.mrb[0].mxu0
      %v2184 = vadd.f32 0.0, %v2183
      %v2185 = vpop.f32.mrb[0].mxu0
      %v2186 = vpop.f32.mrb[0].mxu0
      %v2187 = vadd.f32 0.0, %v2186
      %v2188 = vpop.f32.mrb[0].mxu0
      %2189 = vdwg.mxu0
      %v2190 = vadd.f32 %v1980, %v2184
      %v2191 = vadd.f32 %v1981, %v2187
      %v2192 = vadd.f32 %v1195, %v2190
      %v2193 = vadd.f32 %v1196, %v2191
      %v2194 = vld [vmem:[%s1129] sm:$0x1]
      %v2195 = vld [vmem:[%s1132] sm:$0x1]
      %v2196 = vsel %vm1218, %v2192, 0.0
      %2197 = vadd.xlane.f32.xlu0 %v2196
      %v2198 = vpop.xlane.xlu0 %2197
      %v2199 = vsel %vm1222, %v2193, 0.0
      %2200 = vadd.xlane.f32.xlu0 %v2199
      %v2201 = vpop.xlane.xlu0 %2200
      %v2202 = vmul.f32 %v2198, %v1226
      %v2203 = vmul.f32 %v2201, %v1226
      %v2204 = vsub.f32 %v2192, %v2202
      %v2205 = vsub.f32 %v2193, %v2203
      %v2206 = vmul.f32 %v2204, %v2204
      %v2207 = vmul.f32 %v2205, %v2205
      %v2208 = vsel %vm1218, %v2206, 0.0
      %2209 = vadd.xlane.f32.xlu0 %v2208
      %v2210 = vpop.xlane.xlu0 %2209
      %v2211 = vsel %vm1222, %v2207, 0.0
      %2212 = vadd.xlane.f32.xlu0 %v2211
      %v2213 = vpop.xlane.xlu0 %2212
      %v2214 = vmul.f32 %v2210, %v1226
      %v2215 = vmul.f32 %v2213, %v1226
      %v2216 = vadd.f32 %v2214, 1e-05
      %v2217 = vadd.f32 %v2215, 1e-05
      %v2218 = vrsqrt.pop %v2216
      %v2219 = vrsqrt.pop %v2217
      %v2220 = vmul.f32 %v2204, %v2218
      %v2221 = vmul.f32 %v2205, %v2219
      %v2223 = vlaneseq
      %v2224 = vshrl.u32 %v2223, 7
      %v2225 = vsub.s32 0, %v2224
      %v2226 = vrot.slane %v2194, %v2225
      %v2228 = vmul.f32 %v2220, %v2226
      %v2229 = vmul.f32 %v2221, %v2226
      %v2231 = vlaneseq
      %v2232 = vshrl.u32 %v2231, 7
      %v2233 = vsub.s32 0, %v2232
      %v2234 = vrot.slane %v2195, %v2233
      %v2236 = vadd.f32 %v2228, %v2234
      %v2237 = vadd.f32 %v2229, %v2234
      %v2238 = vld [vmem:[%s1137] sm:$0xf]
      %v2239 = vld [vmem:[%s1137 + $0x4] sm:$0xf]
      %v2240 = vld [vmem:[%s1137 + $0x8] sm:$0xf]
      %v2241 = vld [vmem:[%s1137 + $0xc] sm:$0xf]
      %v2242 = vpack.c.bf16 %v2237, %v2236
      %v2243 = vld [vmem:[%s1140] sm:$0x1]
      %v2245 = vlaneseq
      %v2246 = vshrl.u32 %v2245, 7
      %v2247 = vsub.s32 0, %v2246
      %v2248 = vrot.slane %v2243, %v2247
      %v2254 = vunpack.c.l.b16 %v2238
      %v2255 = vunpack.c.l.b16 %v2239
      %v2256 = vunpack.c.l.b16 %v2240
      %v2257 = vunpack.c.l.b16 %v2241
      %v2258 = vpack.c.b16 %v2255, %v2254
      %v2259 = vpack.c.b16 %v2257, %v2256
      %v2263 = vsel %vm1218, %v2242, 0
      %2265 = vmatprep.subr.bf16.mxu0 0
      %2266 = vmatpush1.bf16.msra.mxu0 %v2258
      %2267 = vmatprep.subr.bf16.mxu0 0
      %2268 = vmatpush1.bf16.msra.mxu0 %v2259
      %2269 = vmatprep.subr.bf16.mxu0 0
      %2270 = vmatpush1.bf16.msra.mxu0 0
      %2271 = vmatprep.subr.bf16.mxu0 0
      %2272 = vmatpush1.bf16.msra.mxu0 0
      %2273 = vmatprep.subr.bf16.mxu0 0
      %2274 = vmatpush1.bf16.msra.mxu0 0
      %2275 = vmatprep.subr.bf16.mxu0 0
      %2276 = vmatpush1.bf16.msra.mxu0 0
      %2277 = vmatprep.subr.bf16.mxu0 0
      %2278 = vmatpush1.bf16.msra.mxu0 0
      %2279 = vmatprep.subr.bf16.mxu0 0
      %2280 = vmatpush1.bf16.msra.mxu0 0
      %2281 = vmatprep.subr.bf16.mxu0 0
      %2282 = vmatpush1.bf16.msra.mxu0 0
      %2283 = vmatprep.subr.bf16.mxu0 0
      %2284 = vmatpush1.bf16.msra.mxu0 0
      %2285 = vmatprep.subr.bf16.mxu0 0
      %2286 = vmatpush1.bf16.msra.mxu0 0
      %2287 = vmatprep.subr.bf16.mxu0 0
      %2288 = vmatpush1.bf16.msra.mxu0 0
      %2289 = vmatprep.subr.bf16.mxu0 0
      %2290 = vmatpush1.bf16.msra.mxu0 0
      %2291 = vmatprep.subr.bf16.mxu0 0
      %2292 = vmatpush1.bf16.msra.mxu0 0
      %2293 = vmatprep.subr.bf16.mxu0 0
      %2294 = vmatpush1.bf16.msra.mxu0 0
      %2295 = vmatprep.subr.bf16.mxu0 0
      %2296 = vmatpush1.bf16.msra.mxu0 0
      %2297 = vmatprep.mubr.bf16.mxu0 0
      %2298 = vmatmul.mubr.bf16.gmra.mrb[0].mxu0 %v2263
      %v2299 = vpop.f32.mrb[0].mxu0
      %v2300 = vadd.f32 %v2248, %v2299
      %v2301 = vpop.f32.mrb[0].mxu0
      %v2302 = vpop.f32.mrb[0].mxu0
      %v2303 = vadd.f32 %v2248, %v2302
      %v2304 = vpop.f32.mrb[0].mxu0
      %2305 = vdwg.mxu0
      %v2306 = vld [vmem:[%s1145] sm:$0xf]
      %v2307 = vld [vmem:[%s1145 + $0x4] sm:$0xf]
      %v2308 = vld [vmem:[%s1145 + $0x8] sm:$0xf]
      %v2309 = vld [vmem:[%s1145 + $0xc] sm:$0xf]
      %v2310 = vpack.c.bf16 %v1197, %v1197
      %v2311 = vld [vmem:[%s1148] sm:$0x1]
      %v2313 = vlaneseq
      %v2314 = vshrl.u32 %v2313, 7
      %v2315 = vsub.s32 0, %v2314
      %v2316 = vrot.slane %v2311, %v2315
      %v2322 = vunpack.c.l.b16 %v2306
      %v2323 = vunpack.c.l.b16 %v2307
      %v2324 = vunpack.c.l.b16 %v2308
      %v2325 = vunpack.c.l.b16 %v2309
      %v2326 = vpack.c.b16 %v2323, %v2322
      %v2327 = vpack.c.b16 %v2325, %v2324
      %v2331 = vsel %vm1218, %v2310, 0
      %2333 = vmatprep.subr.bf16.mxu0 0
      %2334 = vmatpush1.bf16.msra.mxu0 %v2326
      %2335 = vmatprep.subr.bf16.mxu0 0
      %2336 = vmatpush1.bf16.msra.mxu0 %v2327
      %2337 = vmatprep.subr.bf16.mxu0 0
      %2338 = vmatpush1.bf16.msra.mxu0 0
      %2339 = vmatprep.subr.bf16.mxu0 0
      %2340 = vmatpush1.bf16.msra.mxu0 0
      %2341 = vmatprep.subr.bf16.mxu0 0
      %2342 = vmatpush1.bf16.msra.mxu0 0
      %2343 = vmatprep.subr.bf16.mxu0 0
      %2344 = vmatpush1.bf16.msra.mxu0 0
      %2345 = vmatprep.subr.bf16.mxu0 0
      %2346 = vmatpush1.bf16.msra.mxu0 0
      %2347 = vmatprep.subr.bf16.mxu0 0
      %2348 = vmatpush1.bf16.msra.mxu0 0
      %2349 = vmatprep.subr.bf16.mxu0 0
      %2350 = vmatpush1.bf16.msra.mxu0 0
      %2351 = vmatprep.subr.bf16.mxu0 0
      %2352 = vmatpush1.bf16.msra.mxu0 0
      %2353 = vmatprep.subr.bf16.mxu0 0
      %2354 = vmatpush1.bf16.msra.mxu0 0
      %2355 = vmatprep.subr.bf16.mxu0 0
      %2356 = vmatpush1.bf16.msra.mxu0 0
      %2357 = vmatprep.subr.bf16.mxu0 0
      %2358 = vmatpush1.bf16.msra.mxu0 0
      %2359 = vmatprep.subr.bf16.mxu0 0
      %2360 = vmatpush1.bf16.msra.mxu0 0
      %2361 = vmatprep.subr.bf16.mxu0 0
      %2362 = vmatpush1.bf16.msra.mxu0 0
      %2363 = vmatprep.subr.bf16.mxu0 0
      %2364 = vmatpush1.bf16.msra.mxu0 0
      %2365 = vmatprep.mubr.bf16.mxu0 0
      %2366 = vmatmul.mubr.bf16.gmra.mrb[0].mxu0 %v2331
      %v2367 = vpop.f32.mrb[0].mxu0
      %v2368 = vadd.f32 %v2316, %v2367
      %v2369 = vpop.f32.mrb[0].mxu0
      %v2370 = vpop.f32.mrb[0].mxu0
      %v2371 = vpop.f32.mrb[0].mxu0
      %2372 = vdwg.mxu0
      %v2373 = vld [vmem:[%s1153] sm:$0xf]
      %v2374 = vld [vmem:[%s1153 + $0x4] sm:$0xf]
      %v2375 = vld [vmem:[%s1153 + $0x8] sm:$0xf]
      %v2376 = vld [vmem:[%s1153 + $0xc] sm:$0xf]
      %v2377 = vld [vmem:[%s1156] sm:$0x1]
      %v2379 = vlaneseq
      %v2380 = vshrl.u32 %v2379, 7
      %v2381 = vsub.s32 0, %v2380
      %v2382 = vrot.slane %v2377, %v2381
      %v2384 = vadd.f32 %v2382, 0.0
      %2385 = vxpose.xlu0.b32.start [1/16] %v2368, 128
      %2386 = vxpose.xlu0.b32.cont [2/16] 0.0, 128
      %2387 = vxpose.xlu0.b32.cont [3/16] 0.0, 128
      %2388 = vxpose.xlu0.b32.cont [4/16] 0.0, 128
      %2389 = vxpose.xlu0.b32.cont [5/16] 0.0, 128
      %2390 = vxpose.xlu0.b32.cont [6/16] 0.0, 128
      %2391 = vxpose.xlu0.b32.cont [7/16] 0.0, 128
      %2392 = vxpose.xlu0.b32.cont [8/16] 0.0, 128
      %2393 = vxpose.xlu0.b32.cont [9/16] 0.0, 128
      %2394 = vxpose.xlu0.b32.cont [10/16] 0.0, 128
      %2395 = vxpose.xlu0.b32.cont [11/16] 0.0, 128
      %2396 = vxpose.xlu0.b32.cont [12/16] 0.0, 128
      %2397 = vxpose.xlu0.b32.cont [13/16] 0.0, 128
      %2398 = vxpose.xlu0.b32.cont [14/16] 0.0, 128
      %2399 = vxpose.xlu0.b32.cont [15/16] 0.0, 128
      %2400 = vxpose.xlu0.b32.end [16/16] 0.0, 128
      %v2401 = vpop.trf.xlu0
      %v2402 = vpop.trf.xlu0
      %v2403 = vpop.trf.xlu0
      %v2404 = vpop.trf.xlu0
      %v2405 = vpop.trf.xlu0
      %v2406 = vpop.trf.xlu0
      %v2407 = vpop.trf.xlu0
      %v2408 = vpop.trf.xlu0
      %v2409 = vpop.trf.xlu0
      %v2410 = vpop.trf.xlu0
      %v2411 = vpop.trf.xlu0
      %v2412 = vpop.trf.xlu0
      %v2413 = vpop.trf.xlu0
      %v2414 = vpop.trf.xlu0
      %v2415 = vpop.trf.xlu0
      %v2416 = vpop.trf.xlu0
      %v2417 = vpack.c.bf16 %v2303, %v2300
      %v2418 = vpack.c.bf16 %v2401, %v2401
      %v2420 = vsel %vm1385, %v2417, 0
      %v2423 = vsel %vm1389, %v2418, 0
      %2425 = vmatprep.subr.bf16.mxu0 0
      %2426 = vmatpush1.bf16.msra.mxu0 %v2423
      %2427 = vmatprep.subr.bf16.mxu0 0
      %2428 = vmatpush1.bf16.msra.mxu0 0
      %2429 = vmatprep.subr.bf16.mxu0 0
      %2430 = vmatpush1.bf16.msra.mxu0 0
      %2431 = vmatprep.subr.bf16.mxu0 0
      %2432 = vmatpush1.bf16.msra.mxu0 0
      %2433 = vmatprep.subr.bf16.mxu0 0
      %2434 = vmatpush1.bf16.msra.mxu0 0
      %2435 = vmatprep.subr.bf16.mxu0 0
      %2436 = vmatpush1.bf16.msra.mxu0 0
      %2437 = vmatprep.subr.bf16.mxu0 0
      %2438 = vmatpush1.bf16.msra.mxu0 0
      %2439 = vmatprep.subr.bf16.mxu0 0
      %2440 = vmatpush1.bf16.msra.mxu0 0
      %2441 = vmatprep.subr.bf16.mxu0 0
      %2442 = vmatpush1.bf16.msra.mxu0 0
      %2443 = vmatprep.subr.bf16.mxu0 0
      %2444 = vmatpush1.bf16.msra.mxu0 0
      %2445 = vmatprep.subr.bf16.mxu0 0
      %2446 = vmatpush1.bf16.msra.mxu0 0
      %2447 = vmatprep.subr.bf16.mxu0 0
      %2448 = vmatpush1.bf16.msra.mxu0 0
      %2449 = vmatprep.subr.bf16.mxu0 0
      %2450 = vmatpush1.bf16.msra.mxu0 0
      %2451 = vmatprep.subr.bf16.mxu0 0
      %2452 = vmatpush1.bf16.msra.mxu0 0
      %2453 = vmatprep.subr.bf16.mxu0 0
      %2454 = vmatpush1.bf16.msra.mxu0 0
      %2455 = vmatprep.subr.bf16.mxu0 0
      %2456 = vmatpush1.bf16.msra.mxu0 0
      %2457 = vmatprep.mubr.bf16.mxu0 0
      %2458 = vmatmul.mubr.bf16.gmra.mrb[0].mxu0 %v2420
      %v2459 = vpop.f32.mrb[0].mxu0
      %v2460 = vadd.f32 0.0, %v2459
      %v2461 = vpop.f32.mrb[0].mxu0
      %v2462 = vpop.f32.mrb[0].mxu0
      %v2463 = vadd.f32 0.0, %v2462
      %v2464 = vpop.f32.mrb[0].mxu0
      %2465 = vdwg.mxu0
      %vm2466 = vcmask 31744
      %v2467 = vsel %vm2466, %v2460, -inf
      %2468 = vmax.xlane.f32.xlu0 %v2467
      %v2469 = vpop.xlane.xlu0 %2468
      %vm2470 = vcmask 24576
      %v2471 = vsel %vm2470, %v2463, -inf
      %2472 = vmax.xlane.f32.xlu0 %v2471
      %v2473 = vpop.xlane.xlu0 %2472
      %v2474 = vsub.f32 %v2460, %v2469
      %v2475 = vsub.f32 %v2463, %v2473
      %v2476 = vmul.f32 %v2474, 1.442695
      %v2477 = vpow.pop %v2476
      %v2478 = vmul.f32 %v2475, 1.442695
      %v2479 = vpow.pop %v2478
      %v2480 = vsel %vm2466, %v2477, 0.0
      %2481 = vadd.xlane.f32.xlu0 %v2480
      %v2482 = vpop.xlane.xlu0 %2481
      %v2483 = vsel %vm2470, %v2479, 0.0
      %2484 = vadd.xlane.f32.xlu0 %v2483
      %v2485 = vpop.xlane.xlu0 %2484
      %v2486 = vrcp.pop %v2482
      %v2487 = vrcp.pop %v2485
      %v2488 = vmul.f32 %v2477, %v2486
      %v2489 = vmul.f32 %v2479, %v2487
      %v2490 = vpack.c.bf16 %v2489, %v2488
      %v2491 = vpack.c.bf16 %v2368, %v2368
      %2493 = vrot.lane.b32.xlu0 %v2491, 96
      %v2494 = vpop.permute.xlu0 %2493
      %v2496 = vsel %vm2466, %v2490, 0
      %vm2498 = vcmask 1041408
      %v2500 = vsel %vm2498, %v2494, 0
      %2502 = vmatprep.subr.bf16.mxu0 0
      %2503 = vmatpush1.bf16.msra.mxu0 %v2500
      %2504 = vmatprep.subr.bf16.mxu0 0
      %2505 = vmatpush1.bf16.msra.mxu0 0
      %2506 = vmatprep.subr.bf16.mxu0 0
      %2507 = vmatpush1.bf16.msra.mxu0 0
      %2508 = vmatprep.subr.bf16.mxu0 0
      %2509 = vmatpush1.bf16.msra.mxu0 0
      %2510 = vmatprep.subr.bf16.mxu0 0
      %2511 = vmatpush1.bf16.msra.mxu0 0
      %2512 = vmatprep.subr.bf16.mxu0 0
      %2513 = vmatpush1.bf16.msra.mxu0 0
      %2514 = vmatprep.subr.bf16.mxu0 0
      %2515 = vmatpush1.bf16.msra.mxu0 0
      %2516 = vmatprep.subr.bf16.mxu0 0
      %2517 = vmatpush1.bf16.msra.mxu0 0
      %2518 = vmatprep.subr.bf16.mxu0 0
      %2519 = vmatpush1.bf16.msra.mxu0 0
      %2520 = vmatprep.subr.bf16.mxu0 0
      %2521 = vmatpush1.bf16.msra.mxu0 0
      %2522 = vmatprep.subr.bf16.mxu0 0
      %2523 = vmatpush1.bf16.msra.mxu0 0
      %2524 = vmatprep.subr.bf16.mxu0 0
      %2525 = vmatpush1.bf16.msra.mxu0 0
      %2526 = vmatprep.subr.bf16.mxu0 0
      %2527 = vmatpush1.bf16.msra.mxu0 0
      %2528 = vmatprep.subr.bf16.mxu0 0
      %2529 = vmatpush1.bf16.msra.mxu0 0
      %2530 = vmatprep.subr.bf16.mxu0 0
      %2531 = vmatpush1.bf16.msra.mxu0 0
      %2532 = vmatprep.subr.bf16.mxu0 0
      %2533 = vmatpush1.bf16.msra.mxu0 0
      %2534 = vmatprep.mubr.bf16.mxu0 0
      %2535 = vmatmul.mubr.bf16.gmra.mrb[0].mxu0 %v2496
      %v2536 = vpop.f32.mrb[0].mxu0
      %v2537 = vadd.f32 0.0, %v2536
      %v2538 = vpop.f32.mrb[0].mxu0
      %v2539 = vpop.f32.mrb[0].mxu0
      %v2540 = vadd.f32 0.0, %v2539
      %v2541 = vpop.f32.mrb[0].mxu0
      %2542 = vdwg.mxu0
      %v2543 = vpack.c.bf16 %v2540, %v2537
      %v2545 = vsel %vm1385, %v2543, 0
      %v2548 = vsel %vm1389, %v2373, 0
      %2550 = vmatprep.subr.bf16.mxu0 0
      %2551 = vmatpush1.bf16.msra.mxu0 %v2548
      %2552 = vmatprep.subr.bf16.mxu0 0
      %2553 = vmatpush1.bf16.msra.mxu0 0
      %2554 = vmatprep.subr.bf16.mxu0 0
      %2555 = vmatpush1.bf16.msra.mxu0 0
      %2556 = vmatprep.subr.bf16.mxu0 0
      %2557 = vmatpush1.bf16.msra.mxu0 0
      %2558 = vmatprep.subr.bf16.mxu0 0
      %2559 = vmatpush1.bf16.msra.mxu0 0
      %2560 = vmatprep.subr.bf16.mxu0 0
      %2561 = vmatpush1.bf16.msra.mxu0 0
      %2562 = vmatprep.subr.bf16.mxu0 0
      %2563 = vmatpush1.bf16.msra.mxu0 0
      %2564 = vmatprep.subr.bf16.mxu0 0
      %2565 = vmatpush1.bf16.msra.mxu0 0
      %2566 = vmatprep.subr.bf16.mxu0 0
      %2567 = vmatpush1.bf16.msra.mxu0 0
      %2568 = vmatprep.subr.bf16.mxu0 0
      %2569 = vmatpush1.bf16.msra.mxu0 0
      %2570 = vmatprep.subr.bf16.mxu0 0
      %2571 = vmatpush1.bf16.msra.mxu0 0
      %2572 = vmatprep.subr.bf16.mxu0 0
      %2573 = vmatpush1.bf16.msra.mxu0 0
      %2574 = vmatprep.subr.bf16.mxu0 0
      %2575 = vmatpush1.bf16.msra.mxu0 0
      %2576 = vmatprep.subr.bf16.mxu0 0
      %2577 = vmatpush1.bf16.msra.mxu0 0
      %2578 = vmatprep.subr.bf16.mxu0 0
      %2579 = vmatpush1.bf16.msra.mxu0 0
      %2580 = vmatprep.subr.bf16.mxu0 0
      %2581 = vmatpush1.bf16.msra.mxu0 0
      %2582 = vmatprep.mubr.bf16.mxu0 0
      %2583 = vmatmul.mubr.bf16.gmra.mrb[0].mxu0 %v2545
      %v2584 = vpop.f32.mrb[0].mxu0
      %v2585 = vadd.f32 0.0, %v2584
      %v2586 = vpop.f32.mrb[0].mxu0
      %v2587 = vpop.f32.mrb[0].mxu0
      %v2588 = vadd.f32 0.0, %v2587
      %v2589 = vpop.f32.mrb[0].mxu0
      %2590 = vdwg.mxu0
      %v2591 = vadd.f32 %v2384, %v2585
      %v2592 = vadd.f32 %v2384, %v2588
      %2594 = vrot.lane.b32.xlu0 %v2368, 120
      %v2595 = vpop.permute.xlu0 %2594
      %2597 = vxpose.xlu0.b32.start [1/16] %v2595, 128
      %2598 = vxpose.xlu0.b32.cont [2/16] 0.0, 128
      %2599 = vxpose.xlu0.b32.cont [3/16] 0.0, 128
      %2600 = vxpose.xlu0.b32.cont [4/16] 0.0, 128
      %2601 = vxpose.xlu0.b32.cont [5/16] 0.0, 128
      %2602 = vxpose.xlu0.b32.cont [6/16] 0.0, 128
      %2603 = vxpose.xlu0.b32.cont [7/16] 0.0, 128
      %2604 = vxpose.xlu0.b32.cont [8/16] 0.0, 128
      %2605 = vxpose.xlu0.b32.cont [9/16] 0.0, 128
      %2606 = vxpose.xlu0.b32.cont [10/16] 0.0, 128
      %2607 = vxpose.xlu0.b32.cont [11/16] 0.0, 128
      %2608 = vxpose.xlu0.b32.cont [12/16] 0.0, 128
      %2609 = vxpose.xlu0.b32.cont [13/16] 0.0, 128
      %2610 = vxpose.xlu0.b32.cont [14/16] 0.0, 128
      %2611 = vxpose.xlu0.b32.cont [15/16] 0.0, 128
      %2612 = vxpose.xlu0.b32.end [16/16] 0.0, 128
      %v2613 = vpop.trf.xlu0
      %v2614 = vpop.trf.xlu0
      %v2615 = vpop.trf.xlu0
      %v2616 = vpop.trf.xlu0
      %v2617 = vpop.trf.xlu0
      %v2618 = vpop.trf.xlu0
      %v2619 = vpop.trf.xlu0
      %v2620 = vpop.trf.xlu0
      %v2621 = vpop.trf.xlu0
      %v2622 = vpop.trf.xlu0
      %v2623 = vpop.trf.xlu0
      %v2624 = vpop.trf.xlu0
      %v2625 = vpop.trf.xlu0
      %v2626 = vpop.trf.xlu0
      %v2627 = vpop.trf.xlu0
      %v2628 = vpop.trf.xlu0
      %v2629 = vpack.c.bf16 %v2613, %v2613
      %2631 = vrot.lane.b32.xlu0 %v2417, 120
      %v2632 = vpop.permute.xlu0 %2631
      %v2634 = vsel %vm1385, %v2632, 0
      %v2637 = vsel %vm1389, %v2629, 0
      %2639 = vmatprep.subr.bf16.mxu0 0
      %2640 = vmatpush1.bf16.msra.mxu0 %v2637
      %2641 = vmatprep.subr.bf16.mxu0 0
      %2642 = vmatpush1.bf16.msra.mxu0 0
      %2643 = vmatprep.subr.bf16.mxu0 0
      %2644 = vmatpush1.bf16.msra.mxu0 0
      %2645 = vmatprep.subr.bf16.mxu0 0
      %2646 = vmatpush1.bf16.msra.mxu0 0
      %2647 = vmatprep.subr.bf16.mxu0 0
      %2648 = vmatpush1.bf16.msra.mxu0 0
      %2649 = vmatprep.subr.bf16.mxu0 0
      %2650 = vmatpush1.bf16.msra.mxu0 0
      %2651 = vmatprep.subr.bf16.mxu0 0
      %2652 = vmatpush1.bf16.msra.mxu0 0
      %2653 = vmatprep.subr.bf16.mxu0 0
      %2654 = vmatpush1.bf16.msra.mxu0 0
      %2655 = vmatprep.subr.bf16.mxu0 0
      %2656 = vmatpush1.bf16.msra.mxu0 0
      %2657 = vmatprep.subr.bf16.mxu0 0
      %2658 = vmatpush1.bf16.msra.mxu0 0
      %2659 = vmatprep.subr.bf16.mxu0 0
      %2660 = vmatpush1.bf16.msra.mxu0 0
      %2661 = vmatprep.subr.bf16.mxu0 0
      %2662 = vmatpush1.bf16.msra.mxu0 0
      %2663 = vmatprep.subr.bf16.mxu0 0
      %2664 = vmatpush1.bf16.msra.mxu0 0
      %2665 = vmatprep.subr.bf16.mxu0 0
      %2666 = vmatpush1.bf16.msra.mxu0 0
      %2667 = vmatprep.subr.bf16.mxu0 0
      %2668 = vmatpush1.bf16.msra.mxu0 0
      %2669 = vmatprep.subr.bf16.mxu0 0
      %2670 = vmatpush1.bf16.msra.mxu0 0
      %2671 = vmatprep.mubr.bf16.mxu0 0
      %2672 = vmatmul.mubr.bf16.gmra.mrb[0].mxu0 %v2634
      %v2673 = vpop.f32.mrb[0].mxu0
      %v2674 = vadd.f32 0.0, %v2673
      %v2675 = vpop.f32.mrb[0].mxu0
      %v2676 = vpop.f32.mrb[0].mxu0
      %v2677 = vadd.f32 0.0, %v2676
      %v2678 = vpop.f32.mrb[0].mxu0
      %2679 = vdwg.mxu0
      %v2680 = vsel %vm2466, %v2674, -inf
      %2681 = vmax.xlane.f32.xlu0 %v2680
      %v2682 = vpop.xlane.xlu0 %2681
      %v2683 = vsel %vm2470, %v2677, -inf
      %2684 = vmax.xlane.f32.xlu0 %v2683
      %v2685 = vpop.xlane.xlu0 %2684
      %v2686 = vsub.f32 %v2674, %v2682
      %v2687 = vsub.f32 %v2677, %v2685
      %v2688 = vmul.f32 %v2686, 1.442695
      %v2689 = vpow.pop %v2688
      %v2690 = vmul.f32 %v2687, 1.442695
      %v2691 = vpow.pop %v2690
      %v2692 = vsel %vm2466, %v2689, 0.0
      %2693 = vadd.xlane.f32.xlu0 %v2692
      %v2694 = vpop.xlane.xlu0 %2693
      %v2695 = vsel %vm2470, %v2691, 0.0
      %2696 = vadd.xlane.f32.xlu0 %v2695
      %v2697 = vpop.xlane.xlu0 %2696
      %v2698 = vrcp.pop %v2694
      %v2699 = vrcp.pop %v2697
      %v2700 = vmul.f32 %v2689, %v2698
      %v2701 = vmul.f32 %v2691, %v2699
      %v2702 = vpack.c.bf16 %v2701, %v2700
      %2703 = vrot.lane.b32.xlu0 %v2491, 88
      %v2704 = vpop.permute.xlu0 %2703
      %v2706 = vsel %vm2466, %v2702, 0
      %v2709 = vsel %vm2498, %v2704, 0
      %2711 = vmatprep.subr.bf16.mxu0 0
      %2712 = vmatpush1.bf16.msra.mxu0 %v2709
      %2713 = vmatprep.subr.bf16.mxu0 0
      %2714 = vmatpush1.bf16.msra.mxu0 0
      %2715 = vmatprep.subr.bf16.mxu0 0
      %2716 = vmatpush1.bf16.msra.mxu0 0
      %2717 = vmatprep.subr.bf16.mxu0 0
      %2718 = vmatpush1.bf16.msra.mxu0 0
      %2719 = vmatprep.subr.bf16.mxu0 0
      %2720 = vmatpush1.bf16.msra.mxu0 0
      %2721 = vmatprep.subr.bf16.mxu0 0
      %2722 = vmatpush1.bf16.msra.mxu0 0
      %2723 = vmatprep.subr.bf16.mxu0 0
      %2724 = vmatpush1.bf16.msra.mxu0 0
      %2725 = vmatprep.subr.bf16.mxu0 0
      %2726 = vmatpush1.bf16.msra.mxu0 0
      %2727 = vmatprep.subr.bf16.mxu0 0
      %2728 = vmatpush1.bf16.msra.mxu0 0
      %2729 = vmatprep.subr.bf16.mxu0 0
      %2730 = vmatpush1.bf16.msra.mxu0 0
      %2731 = vmatprep.subr.bf16.mxu0 0
      %2732 = vmatpush1.bf16.msra.mxu0 0
      %2733 = vmatprep.subr.bf16.mxu0 0
      %2734 = vmatpush1.bf16.msra.mxu0 0
      %2735 = vmatprep.subr.bf16.mxu0 0
      %2736 = vmatpush1.bf16.msra.mxu0 0
      %2737 = vmatprep.subr.bf16.mxu0 0
      %2738 = vmatpush1.bf16.msra.mxu0 0
      %2739 = vmatprep.subr.bf16.mxu0 0
      %2740 = vmatpush1.bf16.msra.mxu0 0
      %2741 = vmatprep.subr.bf16.mxu0 0
      %2742 = vmatpush1.bf16.msra.mxu0 0
      %2743 = vmatprep.mubr.bf16.mxu0 0
      %2744 = vmatmul.mubr.bf16.gmra.mrb[0].mxu0 %v2706
      %v2745 = vpop.f32.mrb[0].mxu0
      %v2746 = vadd.f32 0.0, %v2745
      %v2747 = vpop.f32.mrb[0].mxu0
      %v2748 = vpop.f32.mrb[0].mxu0
      %v2749 = vadd.f32 0.0, %v2748
      %v2750 = vpop.f32.mrb[0].mxu0
      %2751 = vdwg.mxu0
      %v2752 = vpack.c.bf16 %v2749, %v2746
      %v2754 = vsel %vm1385, %v2752, 0
      %v2757 = vsel %vm1389, %v2374, 0
      %2759 = vmatprep.subr.bf16.mxu0 0
      %2760 = vmatpush1.bf16.msra.mxu0 %v2757
      %2761 = vmatprep.subr.bf16.mxu0 0
      %2762 = vmatpush1.bf16.msra.mxu0 0
      %2763 = vmatprep.subr.bf16.mxu0 0
      %2764 = vmatpush1.bf16.msra.mxu0 0
      %2765 = vmatprep.subr.bf16.mxu0 0
      %2766 = vmatpush1.bf16.msra.mxu0 0
      %2767 = vmatprep.subr.bf16.mxu0 0
      %2768 = vmatpush1.bf16.msra.mxu0 0
      %2769 = vmatprep.subr.bf16.mxu0 0
      %2770 = vmatpush1.bf16.msra.mxu0 0
      %2771 = vmatprep.subr.bf16.mxu0 0
      %2772 = vmatpush1.bf16.msra.mxu0 0
      %2773 = vmatprep.subr.bf16.mxu0 0
      %2774 = vmatpush1.bf16.msra.mxu0 0
      %2775 = vmatprep.subr.bf16.mxu0 0
      %2776 = vmatpush1.bf16.msra.mxu0 0
      %2777 = vmatprep.subr.bf16.mxu0 0
      %2778 = vmatpush1.bf16.msra.mxu0 0
      %2779 = vmatprep.subr.bf16.mxu0 0
      %2780 = vmatpush1.bf16.msra.mxu0 0
      %2781 = vmatprep.subr.bf16.mxu0 0
      %2782 = vmatpush1.bf16.msra.mxu0 0
      %2783 = vmatprep.subr.bf16.mxu0 0
      %2784 = vmatpush1.bf16.msra.mxu0 0
      %2785 = vmatprep.subr.bf16.mxu0 0
      %2786 = vmatpush1.bf16.msra.mxu0 0
      %2787 = vmatprep.subr.bf16.mxu0 0
      %2788 = vmatpush1.bf16.msra.mxu0 0
      %2789 = vmatprep.subr.bf16.mxu0 0
      %2790 = vmatpush1.bf16.msra.mxu0 0
      %2791 = vmatprep.mubr.bf16.mxu0 0
      %2792 = vmatmul.mubr.bf16.gmra.mrb[0].mxu0 %v2754
      %v2793 = vpop.f32.mrb[0].mxu0
      %v2794 = vadd.f32 0.0, %v2793
      %v2795 = vpop.f32.mrb[0].mxu0
      %v2796 = vpop.f32.mrb[0].mxu0
      %v2797 = vadd.f32 0.0, %v2796
      %v2798 = vpop.f32.mrb[0].mxu0
      %2799 = vdwg.mxu0
      %v2800 = vadd.f32 %v2591, %v2794
      %v2801 = vadd.f32 %v2592, %v2797
      %2802 = vrot.lane.b32.xlu0 %v2368, 112
      %v2803 = vpop.permute.xlu0 %2802
      %2805 = vxpose.xlu0.b32.start [1/16] %v2803, 128
      %2806 = vxpose.xlu0.b32.cont [2/16] 0.0, 128
      %2807 = vxpose.xlu0.b32.cont [3/16] 0.0, 128
      %2808 = vxpose.xlu0.b32.cont [4/16] 0.0, 128
      %2809 = vxpose.xlu0.b32.cont [5/16] 0.0, 128
      %2810 = vxpose.xlu0.b32.cont [6/16] 0.0, 128
      %2811 = vxpose.xlu0.b32.cont [7/16] 0.0, 128
      %2812 = vxpose.xlu0.b32.cont [8/16] 0.0, 128
      %2813 = vxpose.xlu0.b32.cont [9/16] 0.0, 128
      %2814 = vxpose.xlu0.b32.cont [10/16] 0.0, 128
      %2815 = vxpose.xlu0.b32.cont [11/16] 0.0, 128
      %2816 = vxpose.xlu0.b32.cont [12/16] 0.0, 128
      %2817 = vxpose.xlu0.b32.cont [13/16] 0.0, 128
      %2818 = vxpose.xlu0.b32.cont [14/16] 0.0, 128
      %2819 = vxpose.xlu0.b32.cont [15/16] 0.0, 128
      %2820 = vxpose.xlu0.b32.end [16/16] 0.0, 128
      %v2821 = vpop.trf.xlu0
      %v2822 = vpop.trf.xlu0
      %v2823 = vpop.trf.xlu0
      %v2824 = vpop.trf.xlu0
      %v2825 = vpop.trf.xlu0
      %v2826 = vpop.trf.xlu0
      %v2827 = vpop.trf.xlu0
      %v2828 = vpop.trf.xlu0
      %v2829 = vpop.trf.xlu0
      %v2830 = vpop.trf.xlu0
      %v2831 = vpop.trf.xlu0
      %v2832 = vpop.trf.xlu0
      %v2833 = vpop.trf.xlu0
      %v2834 = vpop.trf.xlu0
      %v2835 = vpop.trf.xlu0
      %v2836 = vpop.trf.xlu0
      %v2837 = vpack.c.bf16 %v2821, %v2821
      %2838 = vrot.lane.b32.xlu0 %v2417, 112
      %v2839 = vpop.permute.xlu0 %2838
      %v2841 = vsel %vm1385, %v2839, 0
      %v2844 = vsel %vm1389, %v2837, 0
      %2846 = vmatprep.subr.bf16.mxu0 0
      %2847 = vmatpush1.bf16.msra.mxu0 %v2844
      %2848 = vmatprep.subr.bf16.mxu0 0
      %2849 = vmatpush1.bf16.msra.mxu0 0
      %2850 = vmatprep.subr.bf16.mxu0 0
      %2851 = vmatpush1.bf16.msra.mxu0 0
      %2852 = vmatprep.subr.bf16.mxu0 0
      %2853 = vmatpush1.bf16.msra.mxu0 0
      %2854 = vmatprep.subr.bf16.mxu0 0
      %2855 = vmatpush1.bf16.msra.mxu0 0
      %2856 = vmatprep.subr.bf16.mxu0 0
      %2857 = vmatpush1.bf16.msra.mxu0 0
      %2858 = vmatprep.subr.bf16.mxu0 0
      %2859 = vmatpush1.bf16.msra.mxu0 0
      %2860 = vmatprep.subr.bf16.mxu0 0
      %2861 = vmatpush1.bf16.msra.mxu0 0
      %2862 = vmatprep.subr.bf16.mxu0 0
      %2863 = vmatpush1.bf16.msra.mxu0 0
      %2864 = vmatprep.subr.bf16.mxu0 0
      %2865 = vmatpush1.bf16.msra.mxu0 0
      %2866 = vmatprep.subr.bf16.mxu0 0
      %2867 = vmatpush1.bf16.msra.mxu0 0
      %2868 = vmatprep.subr.bf16.mxu0 0
      %2869 = vmatpush1.bf16.msra.mxu0 0
      %2870 = vmatprep.subr.bf16.mxu0 0
      %2871 = vmatpush1.bf16.msra.mxu0 0
      %2872 = vmatprep.subr.bf16.mxu0 0
      %2873 = vmatpush1.bf16.msra.mxu0 0
      %2874 = vmatprep.subr.bf16.mxu0 0
      %2875 = vmatpush1.bf16.msra.mxu0 0
      %2876 = vmatprep.subr.bf16.mxu0 0
      %2877 = vmatpush1.bf16.msra.mxu0 0
      %2878 = vmatprep.mubr.bf16.mxu0 0
      %2879 = vmatmul.mubr.bf16.gmra.mrb[0].mxu0 %v2841
      %v2880 = vpop.f32.mrb[0].mxu0
      %v2881 = vadd.f32 0.0, %v2880
      %v2882 = vpop.f32.mrb[0].mxu0
      %v2883 = vpop.f32.mrb[0].mxu0
      %v2884 = vadd.f32 0.0, %v2883
      %v2885 = vpop.f32.mrb[0].mxu0
      %2886 = vdwg.mxu0
      %v2887 = vsel %vm2466, %v2881, -inf
      %2888 = vmax.xlane.f32.xlu0 %v2887
      %v2889 = vpop.xlane.xlu0 %2888
      %v2890 = vsel %vm2470, %v2884, -inf
      %2891 = vmax.xlane.f32.xlu0 %v2890
      %v2892 = vpop.xlane.xlu0 %2891
      %v2893 = vsub.f32 %v2881, %v2889
      %v2894 = vsub.f32 %v2884, %v2892
      %v2895 = vmul.f32 %v2893, 1.442695
      %v2896 = vpow.pop %v2895
      %v2897 = vmul.f32 %v2894, 1.442695
      %v2898 = vpow.pop %v2897
      %v2899 = vsel %vm2466, %v2896, 0.0
      %2900 = vadd.xlane.f32.xlu0 %v2899
      %v2901 = vpop.xlane.xlu0 %2900
      %v2902 = vsel %vm2470, %v2898, 0.0
      %2903 = vadd.xlane.f32.xlu0 %v2902
      %v2904 = vpop.xlane.xlu0 %2903
      %v2905 = vrcp.pop %v2901
      %v2906 = vrcp.pop %v2904
      %v2907 = vmul.f32 %v2896, %v2905
      %v2908 = vmul.f32 %v2898, %v2906
      %v2909 = vpack.c.bf16 %v2908, %v2907
      %2910 = vrot.lane.b32.xlu0 %v2491, 80
      %v2911 = vpop.permute.xlu0 %2910
      %v2913 = vsel %vm2466, %v2909, 0
      %v2916 = vsel %vm2498, %v2911, 0
      %2918 = vmatprep.subr.bf16.mxu0 0
      %2919 = vmatpush1.bf16.msra.mxu0 %v2916
      %2920 = vmatprep.subr.bf16.mxu0 0
      %2921 = vmatpush1.bf16.msra.mxu0 0
      %2922 = vmatprep.subr.bf16.mxu0 0
      %2923 = vmatpush1.bf16.msra.mxu0 0
      %2924 = vmatprep.subr.bf16.mxu0 0
      %2925 = vmatpush1.bf16.msra.mxu0 0
      %2926 = vmatprep.subr.bf16.mxu0 0
      %2927 = vmatpush1.bf16.msra.mxu0 0
      %2928 = vmatprep.subr.bf16.mxu0 0
      %2929 = vmatpush1.bf16.msra.mxu0 0
      %2930 = vmatprep.subr.bf16.mxu0 0
      %2931 = vmatpush1.bf16.msra.mxu0 0
      %2932 = vmatprep.subr.bf16.mxu0 0
      %2933 = vmatpush1.bf16.msra.mxu0 0
      %2934 = vmatprep.subr.bf16.mxu0 0
      %2935 = vmatpush1.bf16.msra.mxu0 0
      %2936 = vmatprep.subr.bf16.mxu0 0
      %2937 = vmatpush1.bf16.msra.mxu0 0
      %2938 = vmatprep.subr.bf16.mxu0 0
      %2939 = vmatpush1.bf16.msra.mxu0 0
      %2940 = vmatprep.subr.bf16.mxu0 0
      %2941 = vmatpush1.bf16.msra.mxu0 0
      %2942 = vmatprep.subr.bf16.mxu0 0
      %2943 = vmatpush1.bf16.msra.mxu0 0
      %2944 = vmatprep.subr.bf16.mxu0 0
      %2945 = vmatpush1.bf16.msra.mxu0 0
      %2946 = vmatprep.subr.bf16.mxu0 0
      %2947 = vmatpush1.bf16.msra.mxu0 0
      %2948 = vmatprep.subr.bf16.mxu0 0
      %2949 = vmatpush1.bf16.msra.mxu0 0
      %2950 = vmatprep.mubr.bf16.mxu0 0
      %2951 = vmatmul.mubr.bf16.gmra.mrb[0].mxu0 %v2913
      %v2952 = vpop.f32.mrb[0].mxu0
      %v2953 = vadd.f32 0.0, %v2952
      %v2954 = vpop.f32.mrb[0].mxu0
      %v2955 = vpop.f32.mrb[0].mxu0
      %v2956 = vadd.f32 0.0, %v2955
      %v2957 = vpop.f32.mrb[0].mxu0
      %2958 = vdwg.mxu0
      %v2959 = vpack.c.bf16 %v2956, %v2953
      %v2961 = vsel %vm1385, %v2959, 0
      %v2964 = vsel %vm1389, %v2375, 0
      %2966 = vmatprep.subr.bf16.mxu0 0
      %2967 = vmatpush1.bf16.msra.mxu0 %v2964
      %2968 = vmatprep.subr.bf16.mxu0 0
      %2969 = vmatpush1.bf16.msra.mxu0 0
      %2970 = vmatprep.subr.bf16.mxu0 0
      %2971 = vmatpush1.bf16.msra.mxu0 0
      %2972 = vmatprep.subr.bf16.mxu0 0
      %2973 = vmatpush1.bf16.msra.mxu0 0
      %2974 = vmatprep.subr.bf16.mxu0 0
      %2975 = vmatpush1.bf16.msra.mxu0 0
      %2976 = vmatprep.subr.bf16.mxu0 0
      %2977 = vmatpush1.bf16.msra.mxu0 0
      %2978 = vmatprep.subr.bf16.mxu0 0
      %2979 = vmatpush1.bf16.msra.mxu0 0
      %2980 = vmatprep.subr.bf16.mxu0 0
      %2981 = vmatpush1.bf16.msra.mxu0 0
      %2982 = vmatprep.subr.bf16.mxu0 0
      %2983 = vmatpush1.bf16.msra.mxu0 0
      %2984 = vmatprep.subr.bf16.mxu0 0
      %2985 = vmatpush1.bf16.msra.mxu0 0
      %2986 = vmatprep.subr.bf16.mxu0 0
      %2987 = vmatpush1.bf16.msra.mxu0 0
      %2988 = vmatprep.subr.bf16.mxu0 0
      %2989 = vmatpush1.bf16.msra.mxu0 0
      %2990 = vmatprep.subr.bf16.mxu0 0
      %2991 = vmatpush1.bf16.msra.mxu0 0
      %2992 = vmatprep.subr.bf16.mxu0 0
      %2993 = vmatpush1.bf16.msra.mxu0 0
      %2994 = vmatprep.subr.bf16.mxu0 0
      %2995 = vmatpush1.bf16.msra.mxu0 0
      %2996 = vmatprep.subr.bf16.mxu0 0
      %2997 = vmatpush1.bf16.msra.mxu0 0
      %2998 = vmatprep.mubr.bf16.mxu0 0
      %2999 = vmatmul.mubr.bf16.gmra.mrb[0].mxu0 %v2961
      %v3000 = vpop.f32.mrb[0].mxu0
      %v3001 = vadd.f32 0.0, %v3000
      %v3002 = vpop.f32.mrb[0].mxu0
      %v3003 = vpop.f32.mrb[0].mxu0
      %v3004 = vadd.f32 0.0, %v3003
      %v3005 = vpop.f32.mrb[0].mxu0
      %3006 = vdwg.mxu0
      %v3007 = vadd.f32 %v2800, %v3001
      %v3008 = vadd.f32 %v2801, %v3004
      %3009 = vrot.lane.b32.xlu0 %v2368, 104
      %v3010 = vpop.permute.xlu0 %3009
      %3012 = vxpose.xlu0.b32.start [1/16] %v3010, 128
      %3013 = vxpose.xlu0.b32.cont [2/16] 0.0, 128
      %3014 = vxpose.xlu0.b32.cont [3/16] 0.0, 128
      %3015 = vxpose.xlu0.b32.cont [4/16] 0.0, 128
      %3016 = vxpose.xlu0.b32.cont [5/16] 0.0, 128
      %3017 = vxpose.xlu0.b32.cont [6/16] 0.0, 128
      %3018 = vxpose.xlu0.b32.cont [7/16] 0.0, 128
      %3019 = vxpose.xlu0.b32.cont [8/16] 0.0, 128
      %3020 = vxpose.xlu0.b32.cont [9/16] 0.0, 128
      %3021 = vxpose.xlu0.b32.cont [10/16] 0.0, 128
      %3022 = vxpose.xlu0.b32.cont [11/16] 0.0, 128
      %3023 = vxpose.xlu0.b32.cont [12/16] 0.0, 128
      %3024 = vxpose.xlu0.b32.cont [13/16] 0.0, 128
      %3025 = vxpose.xlu0.b32.cont [14/16] 0.0, 128
      %3026 = vxpose.xlu0.b32.cont [15/16] 0.0, 128
      %3027 = vxpose.xlu0.b32.end [16/16] 0.0, 128
      %v3028 = vpop.trf.xlu0
      %v3029 = vpop.trf.xlu0
      %v3030 = vpop.trf.xlu0
      %v3031 = vpop.trf.xlu0
      %v3032 = vpop.trf.xlu0
      %v3033 = vpop.trf.xlu0
      %v3034 = vpop.trf.xlu0
      %v3035 = vpop.trf.xlu0
      %v3036 = vpop.trf.xlu0
      %v3037 = vpop.trf.xlu0
      %v3038 = vpop.trf.xlu0
      %v3039 = vpop.trf.xlu0
      %v3040 = vpop.trf.xlu0
      %v3041 = vpop.trf.xlu0
      %v3042 = vpop.trf.xlu0
      %v3043 = vpop.trf.xlu0
      %v3044 = vpack.c.bf16 %v3028, %v3028
      %3045 = vrot.lane.b32.xlu0 %v2417, 104
      %v3046 = vpop.permute.xlu0 %3045
      %v3048 = vsel %vm1385, %v3046, 0
      %v3051 = vsel %vm1389, %v3044, 0
      %3053 = vmatprep.subr.bf16.mxu0 0
      %3054 = vmatpush1.bf16.msra.mxu0 %v3051
      %3055 = vmatprep.subr.bf16.mxu0 0
      %3056 = vmatpush1.bf16.msra.mxu0 0
      %3057 = vmatprep.subr.bf16.mxu0 0
      %3058 = vmatpush1.bf16.msra.mxu0 0
      %3059 = vmatprep.subr.bf16.mxu0 0
      %3060 = vmatpush1.bf16.msra.mxu0 0
      %3061 = vmatprep.subr.bf16.mxu0 0
      %3062 = vmatpush1.bf16.msra.mxu0 0
      %3063 = vmatprep.subr.bf16.mxu0 0
      %3064 = vmatpush1.bf16.msra.mxu0 0
      %3065 = vmatprep.subr.bf16.mxu0 0
      %3066 = vmatpush1.bf16.msra.mxu0 0
      %3067 = vmatprep.subr.bf16.mxu0 0
      %3068 = vmatpush1.bf16.msra.mxu0 0
      %3069 = vmatprep.subr.bf16.mxu0 0
      %3070 = vmatpush1.bf16.msra.mxu0 0
      %3071 = vmatprep.subr.bf16.mxu0 0
      %3072 = vmatpush1.bf16.msra.mxu0 0
      %3073 = vmatprep.subr.bf16.mxu0 0
      %3074 = vmatpush1.bf16.msra.mxu0 0
      %3075 = vmatprep.subr.bf16.mxu0 0
      %3076 = vmatpush1.bf16.msra.mxu0 0
      %3077 = vmatprep.subr.bf16.mxu0 0
      %3078 = vmatpush1.bf16.msra.mxu0 0
      %3079 = vmatprep.subr.bf16.mxu0 0
      %3080 = vmatpush1.bf16.msra.mxu0 0
      %3081 = vmatprep.subr.bf16.mxu0 0
      %3082 = vmatpush1.bf16.msra.mxu0 0
      %3083 = vmatprep.subr.bf16.mxu0 0
      %3084 = vmatpush1.bf16.msra.mxu0 0
      %3085 = vmatprep.mubr.bf16.mxu0 0
      %3086 = vmatmul.mubr.bf16.gmra.mrb[0].mxu0 %v3048
      %v3087 = vpop.f32.mrb[0].mxu0
      %v3088 = vadd.f32 0.0, %v3087
      %v3089 = vpop.f32.mrb[0].mxu0
      %v3090 = vpop.f32.mrb[0].mxu0
      %v3091 = vadd.f32 0.0, %v3090
      %v3092 = vpop.f32.mrb[0].mxu0
      %3093 = vdwg.mxu0
      %v3094 = vsel %vm2466, %v3088, -inf
      %3095 = vmax.xlane.f32.xlu0 %v3094
      %v3096 = vpop.xlane.xlu0 %3095
      %v3097 = vsel %vm2470, %v3091, -inf
      %3098 = vmax.xlane.f32.xlu0 %v3097
      %v3099 = vpop.xlane.xlu0 %3098
      %v3100 = vsub.f32 %v3088, %v3096
      %v3101 = vsub.f32 %v3091, %v3099
      %v3102 = vmul.f32 %v3100, 1.442695
      %v3103 = vpow.pop %v3102
      %v3104 = vmul.f32 %v3101, 1.442695
      %v3105 = vpow.pop %v3104
      %v3106 = vsel %vm2466, %v3103, 0.0
      %3107 = vadd.xlane.f32.xlu0 %v3106
      %v3108 = vpop.xlane.xlu0 %3107
      %v3109 = vsel %vm2470, %v3105, 0.0
      %3110 = vadd.xlane.f32.xlu0 %v3109
      %v3111 = vpop.xlane.xlu0 %3110
      %v3112 = vrcp.pop %v3108
      %v3113 = vrcp.pop %v3111
      %v3114 = vmul.f32 %v3103, %v3112
      %v3115 = vmul.f32 %v3105, %v3113
      %v3116 = vpack.c.bf16 %v3115, %v3114
      %3117 = vrot.lane.b32.xlu0 %v2491, 72
      %v3118 = vpop.permute.xlu0 %3117
      %v3120 = vsel %vm2466, %v3116, 0
      %v3123 = vsel %vm2498, %v3118, 0
      %3125 = vmatprep.subr.bf16.mxu0 0
      %3126 = vmatpush1.bf16.msra.mxu0 %v3123
      %3127 = vmatprep.subr.bf16.mxu0 0
      %3128 = vmatpush1.bf16.msra.mxu0 0
      %3129 = vmatprep.subr.bf16.mxu0 0
      %3130 = vmatpush1.bf16.msra.mxu0 0
      %3131 = vmatprep.subr.bf16.mxu0 0
      %3132 = vmatpush1.bf16.msra.mxu0 0
      %3133 = vmatprep.subr.bf16.mxu0 0
      %3134 = vmatpush1.bf16.msra.mxu0 0
      %3135 = vmatprep.subr.bf16.mxu0 0
      %3136 = vmatpush1.bf16.msra.mxu0 0
      %3137 = vmatprep.subr.bf16.mxu0 0
      %3138 = vmatpush1.bf16.msra.mxu0 0
      %3139 = vmatprep.subr.bf16.mxu0 0
      %3140 = vmatpush1.bf16.msra.mxu0 0
      %3141 = vmatprep.subr.bf16.mxu0 0
      %3142 = vmatpush1.bf16.msra.mxu0 0
      %3143 = vmatprep.subr.bf16.mxu0 0
      %3144 = vmatpush1.bf16.msra.mxu0 0
      %3145 = vmatprep.subr.bf16.mxu0 0
      %3146 = vmatpush1.bf16.msra.mxu0 0
      %3147 = vmatprep.subr.bf16.mxu0 0
      %3148 = vmatpush1.bf16.msra.mxu0 0
      %3149 = vmatprep.subr.bf16.mxu0 0
      %3150 = vmatpush1.bf16.msra.mxu0 0
      %3151 = vmatprep.subr.bf16.mxu0 0
      %3152 = vmatpush1.bf16.msra.mxu0 0
      %3153 = vmatprep.subr.bf16.mxu0 0
      %3154 = vmatpush1.bf16.msra.mxu0 0
      %3155 = vmatprep.subr.bf16.mxu0 0
      %3156 = vmatpush1.bf16.msra.mxu0 0
      %3157 = vmatprep.mubr.bf16.mxu0 0
      %3158 = vmatmul.mubr.bf16.gmra.mrb[0].mxu0 %v3120
      %v3159 = vpop.f32.mrb[0].mxu0
      %v3160 = vadd.f32 0.0, %v3159
      %v3161 = vpop.f32.mrb[0].mxu0
      %v3162 = vpop.f32.mrb[0].mxu0
      %v3163 = vadd.f32 0.0, %v3162
      %v3164 = vpop.f32.mrb[0].mxu0
      %3165 = vdwg.mxu0
      %v3166 = vpack.c.bf16 %v3163, %v3160
      %v3168 = vsel %vm1385, %v3166, 0
      %v3171 = vsel %vm1389, %v2376, 0
      %3173 = vmatprep.subr.bf16.mxu0 0
      %3174 = vmatpush1.bf16.msra.mxu0 %v3171
      %3175 = vmatprep.subr.bf16.mxu0 0
      %3176 = vmatpush1.bf16.msra.mxu0 0
      %3177 = vmatprep.subr.bf16.mxu0 0
      %3178 = vmatpush1.bf16.msra.mxu0 0
      %3179 = vmatprep.subr.bf16.mxu0 0
      %3180 = vmatpush1.bf16.msra.mxu0 0
      %3181 = vmatprep.subr.bf16.mxu0 0
      %3182 = vmatpush1.bf16.msra.mxu0 0
      %3183 = vmatprep.subr.bf16.mxu0 0
      %3184 = vmatpush1.bf16.msra.mxu0 0
      %3185 = vmatprep.subr.bf16.mxu0 0
      %3186 = vmatpush1.bf16.msra.mxu0 0
      %3187 = vmatprep.subr.bf16.mxu0 0
      %3188 = vmatpush1.bf16.msra.mxu0 0
      %3189 = vmatprep.subr.bf16.mxu0 0
      %3190 = vmatpush1.bf16.msra.mxu0 0
      %3191 = vmatprep.subr.bf16.mxu0 0
      %3192 = vmatpush1.bf16.msra.mxu0 0
      %3193 = vmatprep.subr.bf16.mxu0 0
      %3194 = vmatpush1.bf16.msra.mxu0 0
      %3195 = vmatprep.subr.bf16.mxu0 0
      %3196 = vmatpush1.bf16.msra.mxu0 0
      %3197 = vmatprep.subr.bf16.mxu0 0
      %3198 = vmatpush1.bf16.msra.mxu0 0
      %3199 = vmatprep.subr.bf16.mxu0 0
      %3200 = vmatpush1.bf16.msra.mxu0 0
      %3201 = vmatprep.subr.bf16.mxu0 0
      %3202 = vmatpush1.bf16.msra.mxu0 0
      %3203 = vmatprep.subr.bf16.mxu0 0
      %3204 = vmatpush1.bf16.msra.mxu0 0
      %3205 = vmatprep.mubr.bf16.mxu0 0
      %3206 = vmatmul.mubr.bf16.gmra.mrb[0].mxu0 %v3168
      %v3207 = vpop.f32.mrb[0].mxu0
      %v3208 = vadd.f32 0.0, %v3207
      %v3209 = vpop.f32.mrb[0].mxu0
      %v3210 = vpop.f32.mrb[0].mxu0
      %v3211 = vadd.f32 0.0, %v3210
      %v3212 = vpop.f32.mrb[0].mxu0
      %3213 = vdwg.mxu0
      %v3214 = vadd.f32 %v3007, %v3208
      %v3215 = vadd.f32 %v3008, %v3211
      %v3216 = vadd.f32 %v2192, %v3214
      %v3217 = vadd.f32 %v2193, %v3215
      %v3218 = vld [vmem:[%s1159] sm:$0x1]
      %v3219 = vld [vmem:[%s1162] sm:$0x1]
      %v3220 = vsel %vm1218, %v3216, 0.0
      %3221 = vadd.xlane.f32.xlu0 %v3220
      %v3222 = vpop.xlane.xlu0 %3221
      %v3223 = vsel %vm1222, %v3217, 0.0
      %3224 = vadd.xlane.f32.xlu0 %v3223
      %v3225 = vpop.xlane.xlu0 %3224
      %v3226 = vmul.f32 %v3222, %v1226
      %v3227 = vmul.f32 %v3225, %v1226
      %v3228 = vsub.f32 %v3216, %v3226
      %v3229 = vsub.f32 %v3217, %v3227
      %v3230 = vmul.f32 %v3228, %v3228
      %v3231 = vmul.f32 %v3229, %v3229
      %v3232 = vsel %vm1218, %v3230, 0.0
      %3233 = vadd.xlane.f32.xlu0 %v3232
      %v3234 = vpop.xlane.xlu0 %3233
      %v3235 = vsel %vm1222, %v3231, 0.0
      %3236 = vadd.xlane.f32.xlu0 %v3235
      %v3237 = vpop.xlane.xlu0 %3236
      %v3238 = vmul.f32 %v3234, %v1226
      %v3239 = vmul.f32 %v3237, %v1226
      %v3240 = vadd.f32 %v3238, 1e-05
      %v3241 = vadd.f32 %v3239, 1e-05
      %v3242 = vrsqrt.pop %v3240
      %v3243 = vrsqrt.pop %v3241
      %v3244 = vmul.f32 %v3228, %v3242
      %v3245 = vmul.f32 %v3229, %v3243
      %v3247 = vlaneseq
      %v3248 = vshrl.u32 %v3247, 7
      %v3249 = vsub.s32 0, %v3248
      %v3250 = vrot.slane %v3218, %v3249
      %v3252 = vmul.f32 %v3244, %v3250
      %v3253 = vmul.f32 %v3245, %v3250
      %v3255 = vlaneseq
      %v3256 = vshrl.u32 %v3255, 7
      %v3257 = vsub.s32 0, %v3256
      %v3258 = vrot.slane %v3219, %v3257
      %v3260 = vadd.f32 %v3252, %v3258
      %v3261 = vadd.f32 %v3253, %v3258
      %v3262 = vld [vmem:[%s1167] sm:$0xf]
      %v3263 = vld [vmem:[%s1167 + $0x4] sm:$0xf]
      %v3264 = vld [vmem:[%s1167 + $0x8] sm:$0xf]
      %v3265 = vld [vmem:[%s1167 + $0xc] sm:$0xf]
      %v3266 = vpack.c.bf16 %v3261, %v3260
      %v3267 = vld [vmem:[%s1170] sm:$0x1]
      %v3269 = vlaneseq
      %v3270 = vshrl.u32 %v3269, 7
      %v3271 = vsub.s32 0, %v3270
      %v3272 = vrot.slane %v3267, %v3271
      %v3278 = vunpack.c.l.b16 %v3262
      %v3279 = vunpack.c.l.b16 %v3263
      %v3280 = vunpack.c.l.b16 %v3264
      %v3281 = vunpack.c.l.b16 %v3265
      %v3282 = vpack.c.b16 %v3279, %v3278
      %v3283 = vpack.c.b16 %v3281, %v3280
      %v3287 = vsel %vm1218, %v3266, 0
      %3289 = vmatprep.subr.bf16.mxu0 0
      %3290 = vmatpush1.bf16.msra.mxu0 %v3282
      %3291 = vmatprep.subr.bf16.mxu0 0
      %3292 = vmatpush1.bf16.msra.mxu0 %v3283
      %3293 = vmatprep.subr.bf16.mxu0 0
      %3294 = vmatpush1.bf16.msra.mxu0 0
      %3295 = vmatprep.subr.bf16.mxu0 0
      %3296 = vmatpush1.bf16.msra.mxu0 0
      %3297 = vmatprep.subr.bf16.mxu0 0
      %3298 = vmatpush1.bf16.msra.mxu0 0
      %3299 = vmatprep.subr.bf16.mxu0 0
      %3300 = vmatpush1.bf16.msra.mxu0 0
      %3301 = vmatprep.subr.bf16.mxu0 0
      %3302 = vmatpush1.bf16.msra.mxu0 0
      %3303 = vmatprep.subr.bf16.mxu0 0
      %3304 = vmatpush1.bf16.msra.mxu0 0
      %3305 = vmatprep.subr.bf16.mxu0 0
      %3306 = vmatpush1.bf16.msra.mxu0 0
      %3307 = vmatprep.subr.bf16.mxu0 0
      %3308 = vmatpush1.bf16.msra.mxu0 0
      %3309 = vmatprep.subr.bf16.mxu0 0
      %3310 = vmatpush1.bf16.msra.mxu0 0
      %3311 = vmatprep.subr.bf16.mxu0 0
      %3312 = vmatpush1.bf16.msra.mxu0 0
      %3313 = vmatprep.subr.bf16.mxu0 0
      %3314 = vmatpush1.bf16.msra.mxu0 0
      %3315 = vmatprep.subr.bf16.mxu0 0
      %3316 = vmatpush1.bf16.msra.mxu0 0
      %3317 = vmatprep.subr.bf16.mxu0 0
      %3318 = vmatpush1.bf16.msra.mxu0 0
      %3319 = vmatprep.subr.bf16.mxu0 0
      %3320 = vmatpush1.bf16.msra.mxu0 0
      %3321 = vmatprep.mubr.bf16.mxu0 0
      %3322 = vmatmul.mubr.bf16.gmra.mrb[0].mxu0 %v3287
      %v3323 = vpop.f32.mrb[0].mxu0
      %v3324 = vadd.f32 %v3272, %v3323
      %v3325 = vpop.f32.mrb[0].mxu0
      %v3326 = vpop.f32.mrb[0].mxu0
      %v3327 = vadd.f32 %v3272, %v3326
      %v3328 = vpop.f32.mrb[0].mxu0
      %3329 = vdwg.mxu0
      %v3330 = vmax.f32 %v3324, 0.0
      %v3331 = vmax.f32 %v3327, 0.0
      %v3332 = vld [vmem:[%s1175] sm:$0xf]
      %v3333 = vld [vmem:[%s1175 + $0x4] sm:$0xf]
      %v3334 = vld [vmem:[%s1175 + $0x8] sm:$0xf]
      %v3335 = vld [vmem:[%s1175 + $0xc] sm:$0xf]
      %v3336 = vld [vmem:[%s1175 + $0x10] sm:$0xf]
      %v3337 = vld [vmem:[%s1175 + $0x14] sm:$0xf]
      %v3338 = vld [vmem:[%s1175 + $0x18] sm:$0xf]
      %v3339 = vld [vmem:[%s1175 + $0x1c] sm:$0xf]
      %v3340 = vpack.c.bf16 %v3331, %v3330
      %v3349 = vunpack.c.l.b16 %v3332
      %v3350 = vunpack.c.l.b16 %v3333
      %v3351 = vunpack.c.l.b16 %v3334
      %v3352 = vunpack.c.l.b16 %v3335
      %v3353 = vunpack.c.l.b16 %v3336
      %v3354 = vunpack.c.l.b16 %v3337
      %v3355 = vunpack.c.l.b16 %v3338
      %v3356 = vunpack.c.l.b16 %v3339
      %v3357 = vpack.c.b16 %v3350, %v3349
      %v3358 = vpack.c.b16 %v3352, %v3351
      %v3359 = vpack.c.b16 %v3354, %v3353
      %v3360 = vpack.c.b16 %v3356, %v3355
      %vm3365 = vcmask 523264
      %v3367 = vsel %vm3365, %v3340, 0
      %3369 = vmatprep.subr.bf16.mxu0 0
      %3370 = vmatpush1.bf16.msra.mxu0 %v3357
      %3371 = vmatprep.subr.bf16.mxu0 0
      %3372 = vmatpush1.bf16.msra.mxu0 %v3358
      %3373 = vmatprep.subr.bf16.mxu0 0
      %3374 = vmatpush1.bf16.msra.mxu0 %v3359
      %3375 = vmatprep.subr.bf16.mxu0 0
      %3376 = vmatpush1.bf16.msra.mxu0 %v3360
      %3377 = vmatprep.subr.bf16.mxu0 0
      %3378 = vmatpush1.bf16.msra.mxu0 0
      %3379 = vmatprep.subr.bf16.mxu0 0
      %3380 = vmatpush1.bf16.msra.mxu0 0
      %3381 = vmatprep.subr.bf16.mxu0 0
      %3382 = vmatpush1.bf16.msra.mxu0 0
      %3383 = vmatprep.subr.bf16.mxu0 0
      %3384 = vmatpush1.bf16.msra.mxu0 0
      %3385 = vmatprep.subr.bf16.mxu0 0
      %3386 = vmatpush1.bf16.msra.mxu0 0
      %3387 = vmatprep.subr.bf16.mxu0 0
      %3388 = vmatpush1.bf16.msra.mxu0 0
      %3389 = vmatprep.subr.bf16.mxu0 0
      %3390 = vmatpush1.bf16.msra.mxu0 0
      %3391 = vmatprep.subr.bf16.mxu0 0
      %3392 = vmatpush1.bf16.msra.mxu0 0
      %3393 = vmatprep.subr.bf16.mxu0 0
      %3394 = vmatpush1.bf16.msra.mxu0 0
      %3395 = vmatprep.subr.bf16.mxu0 0
      %3396 = vmatpush1.bf16.msra.mxu0 0
      %3397 = vmatprep.subr.bf16.mxu0 0
      %3398 = vmatpush1.bf16.msra.mxu0 0
      %3399 = vmatprep.subr.bf16.mxu0 0
      %3400 = vmatpush1.bf16.msra.mxu0 0
      %3401 = vmatprep.mubr.bf16.mxu0 0
      %3402 = vmatmul.mubr.bf16.gmra.mrb[0].mxu0 %v3367
      %v3403 = vpop.f32.mrb[0].mxu0
      %v3404 = vadd.f32 0.0, %v3403
      %v3405 = vpop.f32.mrb[0].mxu0
      %v3406 = vpop.f32.mrb[0].mxu0
      %v3407 = vadd.f32 0.0, %v3406
      %v3408 = vpop.f32.mrb[0].mxu0
      %3409 = vdwg.mxu0
      %v3410 = vadd.f32 %v3216, %v3404
      %v3411 = vadd.f32 %v3217, %v3407
      %v3412 = vld [vmem:[%s1178] sm:$0x1]
      %v3414 = vlaneseq
      %v3415 = vshrl.u32 %v3414, 7
      %v3416 = vsub.s32 0, %v3415
      %v3417 = vrot.slane %v3412, %v3416
      %v3419 = vadd.f32 %v3410, %v3417
      %v3420 = vadd.f32 %v3411, %v3417
      %3421 = vst.msk [vmem:[#allocation2] sm:$0xff] %vm1218, %v3419
      %3422 = vst.msk [vmem:[#allocation2 + $0x8] sm:$0x1] %vm1222, %v3420
      %p3423 = scmp.eq.s32.totalorder %s43, 1
      // Predicated region
      $region133: #{_lambda_.1} parent=127 // pred_check
        %p3424 = pneg %p3423
      $region134: #{_lambda_.1} parent=127 // pred_check_branch
        %3426 = sbr.rel (%p3424) target = $region136
      $region135: #{_lambda_.1} parent=127 // pred_region
        %v3427 = vld [vmem:[%s23] sm:$0x1]
        %v3428 = vld [vmem:[%s24] sm:$0x1]
        %v3429 = vsel %vm1218, %v3419, 0.0
        %3430 = vadd.xlane.f32.xlu0 %v3429
        %v3431 = vpop.xlane.xlu0 %3430
        %v3432 = vsel %vm1222, %v3420, 0.0
        %3433 = vadd.xlane.f32.xlu0 %v3432
        %v3434 = vpop.xlane.xlu0 %3433
        %v3435 = vmul.f32 %v3431, %v1226
        %v3436 = vmul.f32 %v3434, %v1226
        %v3437 = vsub.f32 %v3419, %v3435
        %v3438 = vsub.f32 %v3420, %v3436
        %v3439 = vmul.f32 %v3437, %v3437
        %v3440 = vmul.f32 %v3438, %v3438
        %v3441 = vsel %vm1218, %v3439, 0.0
        %3442 = vadd.xlane.f32.xlu0 %v3441
        %v3443 = vpop.xlane.xlu0 %3442
        %v3444 = vsel %vm1222, %v3440, 0.0
        %3445 = vadd.xlane.f32.xlu0 %v3444
        %v3446 = vpop.xlane.xlu0 %3445
        %v3447 = vmul.f32 %v3443, %v1226
        %v3448 = vmul.f32 %v3446, %v1226
        %v3449 = vadd.f32 %v3447, 1e-05
        %v3450 = vadd.f32 %v3448, 1e-05
        %v3451 = vrsqrt.pop %v3449
        %v3452 = vrsqrt.pop %v3450
        %v3453 = vmul.f32 %v3437, %v3451
        %v3454 = vmul.f32 %v3438, %v3452
        %v3456 = vlaneseq
        %v3457 = vshrl.u32 %v3456, 7
        %v3458 = vsub.s32 0, %v3457
        %v3459 = vrot.slane %v3427, %v3458
        %v3461 = vmul.f32 %v3453, %v3459
        %v3462 = vmul.f32 %v3454, %v3459
        %v3464 = vlaneseq
        %v3465 = vshrl.u32 %v3464, 7
        %v3466 = vsub.s32 0, %v3465
        %v3467 = vrot.slane %v3428, %v3466
        %v3469 = vadd.f32 %v3461, %v3467
        %v3470 = vadd.f32 %v3462, %v3467
        %v3471 = vld [vmem:[%s25] sm:$0xf]
        %v3472 = vld [vmem:[%s25 + $0x4] sm:$0xf]
        %v3473 = vld [vmem:[%s25 + $0x8] sm:$0xf]
        %v3474 = vld [vmem:[%s25 + $0xc] sm:$0xf]
        %v3475 = vpack.c.bf16 %v3470, %v3469
        %v3476 = vld [vmem:[%s26] sm:$0x1]
        %v3478 = vlaneseq
        %v3479 = vshrl.u32 %v3478, 7
        %v3480 = vsub.s32 0, %v3479
        %v3481 = vrot.slane %v3476, %v3480
        %v3487 = vunpack.c.l.b16 %v3471
        %v3488 = vunpack.c.l.b16 %v3472
        %v3489 = vunpack.c.l.b16 %v3473
        %v3490 = vunpack.c.l.b16 %v3474
        %v3491 = vpack.c.b16 %v3488, %v3487
        %v3492 = vpack.c.b16 %v3490, %v3489
        %v3496 = vsel %vm1218, %v3475, 0
        %3498 = vmatprep.subr.bf16.mxu0 0
        %3499 = vmatpush1.bf16.msra.mxu0 %v3491
        %3500 = vmatprep.subr.bf16.mxu0 0
        %3501 = vmatpush1.bf16.msra.mxu0 %v3492
        %3502 = vmatprep.subr.bf16.mxu0 0
        %3503 = vmatpush1.bf16.msra.mxu0 0
        %3504 = vmatprep.subr.bf16.mxu0 0
        %3505 = vmatpush1.bf16.msra.mxu0 0
        %3506 = vmatprep.subr.bf16.mxu0 0
        %3507 = vmatpush1.bf16.msra.mxu0 0
        %3508 = vmatprep.subr.bf16.mxu0 0
        %3509 = vmatpush1.bf16.msra.mxu0 0
        %3510 = vmatprep.subr.bf16.mxu0 0
        %3511 = vmatpush1.bf16.msra.mxu0 0
        %3512 = vmatprep.subr.bf16.mxu0 0
        %3513 = vmatpush1.bf16.msra.mxu0 0
        %3514 = vmatprep.subr.bf16.mxu0 0
        %3515 = vmatpush1.bf16.msra.mxu0 0
        %3516 = vmatprep.subr.bf16.mxu0 0
        %3517 = vmatpush1.bf16.msra.mxu0 0
        %3518 = vmatprep.subr.bf16.mxu0 0
        %3519 = vmatpush1.bf16.msra.mxu0 0
        %3520 = vmatprep.subr.bf16.mxu0 0
        %3521 = vmatpush1.bf16.msra.mxu0 0
        %3522 = vmatprep.subr.bf16.mxu0 0
        %3523 = vmatpush1.bf16.msra.mxu0 0
        %3524 = vmatprep.subr.bf16.mxu0 0
        %3525 = vmatpush1.bf16.msra.mxu0 0
        %3526 = vmatprep.subr.bf16.mxu0 0
        %3527 = vmatpush1.bf16.msra.mxu0 0
        %3528 = vmatprep.subr.bf16.mxu0 0
        %3529 = vmatpush1.bf16.msra.mxu0 0
        %3530 = vmatprep.mubr.bf16.mxu0 0
        %3531 = vmatmul.mubr.bf16.gmra.mrb[0].mxu0 %v3496
        %v3532 = vpop.f32.mrb[0].mxu0
        %v3533 = vadd.f32 %v3481, %v3532
        %v3534 = vpop.f32.mrb[0].mxu0
        %v3535 = vpop.f32.mrb[0].mxu0
        %v3536 = vadd.f32 %v3481, %v3535
        %v3537 = vpop.f32.mrb[0].mxu0
        %3538 = vdwg.mxu0
        %3539 = vst [vmem:[%s1183] sm:$0xff] %v3533
        %3540 = vst [vmem:[%s1183 + $0x8] sm:$0x1] %v3536
      $region136: #{_lambda_.1} parent=127 // pred_fallthru
        _
      %p3541 = scmp.lt.s32.totalorder %s42, 1
      %s3542 = scalar_select %p3541, %s42, 1
      %s3543 = smul.addr %s3542, 2
      %s3544 = smul.addr %s3543, 8
      %s3545 = scalar_lea.vmem %s27, %s3544
      // Predicated region
      $region137: #{_lambda_.1} parent=127 // pred_check
        %p3546 = pneg %p750
      $region138: #{_lambda_.1} parent=127 // pred_check_branch
        %3548 = sbr.rel (%p3546) target = $region140
      $region139: #{_lambda_.1} parent=127 // pred_region
        _
      $region140: #{_lambda_.1} parent=127 // pred_fallthru
        _
    $region128: #{_lambda_.1} parent=5 // pred_fallthru
      _
    %p3549 = scmp.le.s32.totalorder 2, %s33
    // Predicated region
    $region141: #{_lambda_.1} parent=5 // pred_check
      %p3550 = pneg %p3549
    $region142: #{_lambda_.1} parent=5 // pred_check_branch
      %3552 = sbr.rel (%p3550) target = $region144
    $region143: #{_lambda_.1} parent=5 // pred_region
      %s3553 = ssub.s32 %s33, 2
      // Predicated region
      $region145: #{_lambda_.1} parent=143 // pred_check
        %p3554 = pneg %p756
      $region146: #{_lambda_.1} parent=143 // pred_check_branch
        %3556 = sbr.rel (%p3554) target = $region148
      $region147: #{_lambda_.1} parent=143 // pred_region
        %p3557 = scmp.lt.s32.totalorder %s44, 1
        %s3558 = scalar_select %p3557, %s44, 1
        %s3559 = smul.addr %s3558, 2
        %s3560 = smul.addr %s3559, 8
        %s3561 = scalar_lea.vmem %s27, %s3560
      $region148: #{_lambda_.1} parent=143 // pred_fallthru
        _
    $region144: #{_lambda_.1} parent=5 // pred_fallthru
      _
  $region6: #{_lambda_.1} parent=0 // loop_footer
    %s37 = sadd.s32 1, %s33
  $region7: #{_lambda_.1} parent=0 // loop_footer_branch
    %32 = sbr.rel target = $region3
  $region8: #{_lambda_.1} parent=0 // loop_exit
    _

</llo_original>
